<compile_context>
chip_gen: v6e
topology: v6e:2x2x1
jax: 0.10.0
libtpu: 0.0.40
codegen_flags: <defaults>
</compile_context>

<pallas_src>
import functools

import jax
import jax.numpy as jnp
from jax import lax
from jax.experimental import pallas as pl
from jax.experimental.pallas import tpu as pltpu

EPS = 1e-5
LANE = 128


# ------------------------------ Pallas kernels ------------------------------

def _conv_taps_stats_kernel(xs_ref, w_ref, y_ref, s_ref, q_ref, *, ncell, ho, wo):
    """conv1 for one image: ncell x ncell shifted taps of the (space-to-depth)
    input, each an (M, K) @ (K, Cp) MXU dot accumulated in f32.  Emits the raw
    conv output (bf16) plus per-image channel sum / sum-of-squares (f32)."""
    kp = xs_ref.shape[-1]
    cp = y_ref.shape[-1]
    m = ho * wo
    acc = jnp.zeros((m, cp), jnp.float32)
    for di in range(ncell):
        for dj in range(ncell):
            # f32 round trip keeps the 3D->2D reshape on sublane-aligned tiles.
            tap = (xs_ref[di:di + ho, dj:dj + wo, :]
                   .astype(jnp.float32)
                   .reshape(m, kp)
                   .astype(jnp.bfloat16))
            acc += jnp.dot(tap, w_ref[di * ncell + dj],
                           preferred_element_type=jnp.float32)
    y_ref[...] = acc.astype(y_ref.dtype)
    s_ref[...] = jnp.sum(acc, axis=0, keepdims=True)
    q_ref[...] = jnp.sum(acc * acc, axis=0, keepdims=True)


def _conv2_stats_ds_kernel(y1_ref, sc1_ref, sh1_ref, w2_ref, xd_ref, wd_ref,
                           y2_ref, s2_ref, q2_ref, sd_ref, qd_ref,
                           hpad_ref, *, ho, wo):
    """conv2 for one image with fused BN1+ReLU prologue (in-kernel halo pad via
    VMEM scratch, 9 shifted dots) plus the fused 1x1 downsample statistics.
    The downsample output itself is NOT written (recomputed in the final pass)."""
    cp = y2_ref.shape[-1]
    m = ho * wo
    # BN1 affine (batch stats) + ReLU on the conv1 pre-activation tile (f32 VPU).
    h = jnp.maximum(
        y1_ref[...].astype(jnp.float32) * sc1_ref[...] + sh1_ref[...], 0.0)
    # zero-padded halo tile in VMEM (f32 keeps reshapes/stores tile-aligned).
    hpad_ref[...] = jnp.zeros_like(hpad_ref)
    hpad_ref[1:ho + 1, 1:wo + 1, :] = h.reshape(ho, wo, cp)
    acc = jnp.zeros((m, cp), jnp.float32)
    for kh in range(3):
        for kw in range(3):
            tap = (hpad_ref[kh:kh + ho, kw:kw + wo, :]
                   .reshape(m, cp)
                   .astype(jnp.bfloat16))
            acc += jnp.dot(tap, w2_ref[kh * 3 + kw],
                           preferred_element_type=jnp.float32)
    y2_ref[...] = acc.astype(y2_ref.dtype)
    s2_ref[...] = jnp.sum(acc, axis=0, keepdims=True)
    q2_ref[...] = jnp.sum(acc * acc, axis=0, keepdims=True)
    # 1x1 downsample conv: statistics only.
    yd = jnp.dot(xd_ref[...], wd_ref[...], preferred_element_type=jnp.float32)
    sd_ref[...] = jnp.sum(yd, axis=0, keepdims=True)
    qd_ref[...] = jnp.sum(yd * yd, axis=0, keepdims=True)


def _conv2_stats_id_kernel(y1_ref, sc1_ref, sh1_ref, w2_ref,
                           y2_ref, s2_ref, q2_ref, hpad_ref, *, ho, wo):
    """conv2 for one image (identity-residual variant, no downsample work)."""
    cp = y2_ref.shape[-1]
    m = ho * wo
    h = jnp.maximum(
        y1_ref[...].astype(jnp.float32) * sc1_ref[...] + sh1_ref[...], 0.0)
    hpad_ref[...] = jnp.zeros_like(hpad_ref)
    hpad_ref[1:ho + 1, 1:wo + 1, :] = h.reshape(ho, wo, cp)
    acc = jnp.zeros((m, cp), jnp.float32)
    for kh in range(3):
        for kw in range(3):
            tap = (hpad_ref[kh:kh + ho, kw:kw + wo, :]
                   .reshape(m, cp)
                   .astype(jnp.bfloat16))
            acc += jnp.dot(tap, w2_ref[kh * 3 + kw],
                           preferred_element_type=jnp.float32)
    y2_ref[...] = acc.astype(y2_ref.dtype)
    s2_ref[...] = jnp.sum(acc, axis=0, keepdims=True)
    q2_ref[...] = jnp.sum(acc * acc, axis=0, keepdims=True)


def _bn_ds_add_relu_kernel(y2_ref, xd_ref, wd_ref, sc2_ref, sh2_ref,
                           scd_ref, shd_ref, o_ref):
    """Final pass (downsample residual): recompute the 1x1 conv, apply both BN
    affines (batch stats), add, ReLU.  All elementwise math in f32."""
    yd = jnp.dot(xd_ref[...], wd_ref[...], preferred_element_type=jnp.float32)
    main = y2_ref[...].astype(jnp.float32) * sc2_ref[...] + sh2_ref[...]
    res = yd * scd_ref[...] + shd_ref[...]
    o_ref[...] = jnp.maximum(main + res, 0.0)


def _bn_id_add_relu_kernel(y2_ref, r_ref, sc2_ref, sh2_ref, o_ref):
    """Final pass (identity residual): BN2 affine + add x + ReLU."""
    main = y2_ref[...].astype(jnp.float32) * sc2_ref[...] + sh2_ref[...]
    o_ref[...] = jnp.maximum(main + r_ref[...], 0.0)


# --------------------------- pallas_call wrappers ---------------------------

def _round_up(x, m):
    return (x + m - 1) // m * m


def _vmem_limit(block_bytes, scratch_bytes=0):
    # Double-buffered pipeline blocks + scratch + headroom, capped below v7x's
    # 64 MiB physical VMEM (v5e/v6e have 128 MiB so this is always safe).
    return int(min(max(2 * block_bytes + scratch_bytes + (8 << 20), 32 << 20),
                   56 << 20))


def _conv_taps_stats(xs, w, ncell, ho, wo):
    n, hs, ws, kp = xs.shape
    cp = w.shape[-1]
    m = ho * wo
    block_bytes = hs * ws * kp * 2 + w.size * 2 + m * cp * 2 + 2 * cp * 4
    kernel = functools.partial(_conv_taps_stats_kernel, ncell=ncell, ho=ho, wo=wo)
    return pl.pallas_call(
        kernel,
        out_shape=(
            jax.ShapeDtypeStruct((n, m, cp), jnp.bfloat16),
            jax.ShapeDtypeStruct((n, 1, cp), jnp.float32),
            jax.ShapeDtypeStruct((n, 1, cp), jnp.float32),
        ),
        grid=(n,),
        in_specs=[
            pl.BlockSpec((None, hs, ws, kp), lambda i: (i, 0, 0, 0)),
            pl.BlockSpec((ncell * ncell, kp, cp), lambda i: (0, 0, 0)),
        ],
        out_specs=(
            pl.BlockSpec((None, m, cp), lambda i: (i, 0, 0)),
            pl.BlockSpec((None, 1, cp), lambda i: (i, 0, 0)),
            pl.BlockSpec((None, 1, cp), lambda i: (i, 0, 0)),
        ),
        compiler_params=pltpu.CompilerParams(
            dimension_semantics=("parallel",),
            vmem_limit_bytes=_vmem_limit(block_bytes),
        ),
    )(xs, w)


def _conv2_ds(y1, sc1, sh1, w2, xd, wd, ho, wo):
    n, m, cp = y1.shape
    kdp = xd.shape[-1]
    scratch_bytes = (ho + 2) * (wo + 2) * cp * 4
    block_bytes = (m * cp * 2 + 2 * cp * 4 + w2.size * 2 + m * kdp * 2
                   + wd.size * 2 + m * cp * 2 + 4 * cp * 4)
    kernel = functools.partial(_conv2_stats_ds_kernel, ho=ho, wo=wo)
    return pl.pallas_call(
        kernel,
        out_shape=(
            jax.ShapeDtypeStruct((n, m, cp), jnp.bfloat16),
            jax.ShapeDtypeStruct((n, 1, cp), jnp.float32),
            jax.ShapeDtypeStruct((n, 1, cp), jnp.float32),
            jax.ShapeDtypeStruct((n, 1, cp), jnp.float32),
            jax.ShapeDtypeStruct((n, 1, cp), jnp.float32),
        ),
        grid=(n,),
        in_specs=[
            pl.BlockSpec((None, m, cp), lambda i: (i, 0, 0)),
            pl.BlockSpec((1, cp), lambda i: (0, 0)),
            pl.BlockSpec((1, cp), lambda i: (0, 0)),
            pl.BlockSpec((9, cp, cp), lambda i: (0, 0, 0)),
            pl.BlockSpec((None, m, kdp), lambda i: (i, 0, 0)),
            pl.BlockSpec((kdp, cp), lambda i: (0, 0)),
        ],
        out_specs=(
            pl.BlockSpec((None, m, cp), lambda i: (i, 0, 0)),
            pl.BlockSpec((None, 1, cp), lambda i: (i, 0, 0)),
            pl.BlockSpec((None, 1, cp), lambda i: (i, 0, 0)),
            pl.BlockSpec((None, 1, cp), lambda i: (i, 0, 0)),
            pl.BlockSpec((None, 1, cp), lambda i: (i, 0, 0)),
        ),
        scratch_shapes=[pltpu.VMEM((ho + 2, wo + 2, cp), jnp.float32)],
        compiler_params=pltpu.CompilerParams(
            dimension_semantics=("parallel",),
            vmem_limit_bytes=_vmem_limit(block_bytes, scratch_bytes),
        ),
    )(y1, sc1, sh1, w2, xd, wd)


def _conv2_id(y1, sc1, sh1, w2, ho, wo):
    n, m, cp = y1.shape
    scratch_bytes = (ho + 2) * (wo + 2) * cp * 4
    block_bytes = m * cp * 2 + 2 * cp * 4 + w2.size * 2 + m * cp * 2 + 2 * cp * 4
    kernel = functools.partial(_conv2_stats_id_kernel, ho=ho, wo=wo)
    return pl.pallas_call(
        kernel,
        out_shape=(
            jax.ShapeDtypeStruct((n, m, cp), jnp.bfloat16),
            jax.ShapeDtypeStruct((n, 1, cp), jnp.float32),
            jax.ShapeDtypeStruct((n, 1, cp), jnp.float32),
        ),
        grid=(n,),
        in_specs=[
            pl.BlockSpec((None, m, cp), lambda i: (i, 0, 0)),
            pl.BlockSpec((1, cp), lambda i: (0, 0)),
            pl.BlockSpec((1, cp), lambda i: (0, 0)),
            pl.BlockSpec((9, cp, cp), lambda i: (0, 0, 0)),
        ],
        out_specs=(
            pl.BlockSpec((None, m, cp), lambda i: (i, 0, 0)),
            pl.BlockSpec((None, 1, cp), lambda i: (i, 0, 0)),
            pl.BlockSpec((None, 1, cp), lambda i: (i, 0, 0)),
        ),
        scratch_shapes=[pltpu.VMEM((ho + 2, wo + 2, cp), jnp.float32)],
        compiler_params=pltpu.CompilerParams(
            dimension_semantics=("parallel",),
            vmem_limit_bytes=_vmem_limit(block_bytes, scratch_bytes),
        ),
    )(y1, sc1, sh1, w2)


def _bn_ds_add_relu(y2, xd, wd, sc2, sh2, scd, shd):
    n, m, cp = y2.shape
    kdp = xd.shape[-1]
    block_bytes = (m * cp * 2 + m * kdp * 2 + wd.size * 2 + 4 * cp * 4
                   + m * cp * 4)
    return pl.pallas_call(
        _bn_ds_add_relu_kernel,
        out_shape=jax.ShapeDtypeStruct((n, m, cp), jnp.float32),
        grid=(n,),
        in_specs=[
            pl.BlockSpec((None, m, cp), lambda i: (i, 0, 0)),
            pl.BlockSpec((None, m, kdp), lambda i: (i, 0, 0)),
            pl.BlockSpec((kdp, cp), lambda i: (0, 0)),
            pl.BlockSpec((1, cp), lambda i: (0, 0)),
            pl.BlockSpec((1, cp), lambda i: (0, 0)),
            pl.BlockSpec((1, cp), lambda i: (0, 0)),
            pl.BlockSpec((1, cp), lambda i: (0, 0)),
        ],
        out_specs=pl.BlockSpec((None, m, cp), lambda i: (i, 0, 0)),
        compiler_params=pltpu.CompilerParams(
            dimension_semantics=("parallel",),
            vmem_limit_bytes=_vmem_limit(block_bytes),
        ),
    )(y2, xd, wd, sc2, sh2, scd, shd)


def _bn_id_add_relu(y2, r, sc2, sh2):
    n, m, cp = y2.shape
    block_bytes = m * cp * 2 + m * cp * 4 + 2 * cp * 4 + m * cp * 4
    return pl.pallas_call(
        _bn_id_add_relu_kernel,
        out_shape=jax.ShapeDtypeStruct((n, m, cp), jnp.float32),
        grid=(n,),
        in_specs=[
            pl.BlockSpec((None, m, cp), lambda i: (i, 0, 0)),
            pl.BlockSpec((None, m, cp), lambda i: (i, 0, 0)),
            pl.BlockSpec((1, cp), lambda i: (0, 0)),
            pl.BlockSpec((1, cp), lambda i: (0, 0)),
        ],
        out_specs=pl.BlockSpec((None, m, cp), lambda i: (i, 0, 0)),
        compiler_params=pltpu.CompilerParams(
            dimension_semantics=("parallel",),
            vmem_limit_bytes=_vmem_limit(block_bytes),
        ),
    )(y2, r, sc2, sh2)


# ------------------------------ host-side glue -------------------------------

def _bn_affine(s_part, q_part, gamma, beta, count, cp):
    """Fold training-mode BN (batch stats) into per-channel scale/shift from
    per-image partial sums.  Var is E[x^2]-E[x]^2 clamped at 0 (NaN guard)."""
    c = gamma.shape[0]
    s = jnp.sum(s_part[:, 0, :c], axis=0)
    q = jnp.sum(q_part[:, 0, :c], axis=0)
    mean = s / count
    var = jnp.maximum(q / count - mean * mean, 0.0)
    scale = gamma * lax.rsqrt(var + EPS)
    shift = beta - mean * scale
    pad = cp - c
    return (jnp.pad(scale, (0, pad)).reshape(1, cp),
            jnp.pad(shift, (0, pad)).reshape(1, cp))


def _conv1_s2d_inputs(x, w1, stride, ho, wo):
    """Stride-aware tap decomposition of the 3x3 conv (padding=1): space-to-
    depth phases stacked on channels (~1x input traffic, no 9x im2col), and the
    matching effective tap weights (ncell*ncell, K, Cout)."""
    n, h, w, cin = x.shape
    cout = w1.shape[0]
    s = stride
    ncell = -(-3 // s)                         # ceil(3/stride)
    hs, ws = ho + ncell - 1, wo + ncell - 1
    xp = jnp.pad(x, ((0, 0), (1, 1), (1, 1), (0, 0)))
    phases = []
    for pr in range(s):
        for pc in range(s):
            ph = xp[:, pr::s, pc::s, :][:, :hs, :ws, :]
            ph = jnp.pad(ph, ((0, 0), (0, hs - ph.shape[1]),
                              (0, ws - ph.shape[2]), (0, 0)))
            phases.append(ph)
    xs = phases[0] if s == 1 else jnp.concatenate(phases, axis=-1)
    k1 = s * s * cin
    k1p = _round_up(k1, LANE)
    xs = jnp.pad(xs, ((0, 0), (0, 0), (0, 0), (0, k1p - k1))).astype(jnp.bfloat16)

    wt = jnp.transpose(w1, (2, 3, 1, 0))       # (3, 3, Cin, Cout)
    weff = jnp.zeros((ncell, ncell, s, s, cin, cout), jnp.float32)
    for kh in range(3):
        for kw in range(3):
            weff = weff.at[kh // s, kw // s, kh % s, kw % s].set(wt[kh, kw])
    cp = _round_up(cout, LANE)
    weff = weff.reshape(ncell * ncell, k1, cout)
    weff = jnp.pad(weff, ((0, 0), (0, k1p - k1), (0, cp - cout))).astype(jnp.bfloat16)
    return xs, weff, ncell


@functools.partial(jax.jit, static_argnames=("stride",))
def residual_block_forward(x_nchw, params, stride):
    x = jnp.transpose(x_nchw, (0, 2, 3, 1)).astype(jnp.float32)   # NCHW -> NHWC
    n, h, w, cin = x.shape
    cout = params["w1"].shape[0]
    cp = _round_up(cout, LANE)
    ho = (h - 1) // stride + 1
    wo = (w - 1) // stride + 1
    m = ho * wo
    count = n * m

    # ---- conv1 (3x3, stride) + BN1 batch stats (per-image partials) ---------
    xs, w1e, ncell = _conv1_s2d_inputs(x, params["w1"], stride, ho, wo)
    y1, s1, q1 = _conv_taps_stats(xs, w1e, ncell, ho, wo)
    sc1, sh1 = _bn_affine(s1, q1, params["g1"], params["b1"], count, cp)

    # ---- conv2 weights as 9 (Cp, Cp) tap matrices ----------------------------
    w2t = jnp.transpose(params["w2"], (2, 3, 1, 0)).reshape(9, cout, cout)
    w2e = jnp.pad(w2t, ((0, 0), (0, cp - cout), (0, cp - cout))).astype(jnp.bfloat16)

    if stride != 1 or cin != cout:
        kdp = _round_up(cin, LANE)
        xd = x[:, ::stride, ::stride, :].reshape(n, m, cin)        # 1x1-conv gather
        xd = jnp.pad(xd, ((0, 0), (0, 0), (0, kdp - cin))).astype(jnp.bfloat16)
        wd = jnp.pad(params["wd"][:, :, 0, 0].T,
                     ((0, kdp - cin), (0, cp - cout))).astype(jnp.bfloat16)
        # conv2 (BN1+ReLU fused prologue) + downsample stats, per-image grid.
        y2, s2, q2, sd, qd = _conv2_ds(y1, sc1, sh1, w2e, xd, wd, ho, wo)
        sc2, sh2 = _bn_affine(s2, q2, params["g2"], params["b2"], count, cp)
        scd, shd = _bn_affine(sd, qd, params["gd"], params["bd"], count, cp)
        out = _bn_ds_add_relu(y2, xd, wd, sc2, sh2, scd, shd)
    else:
        y2, s2, q2 = _conv2_id(y1, sc1, sh1, w2e, ho, wo)
        sc2, sh2 = _bn_affine(s2, q2, params["g2"], params["b2"], count, cp)
        r = jnp.pad(x.reshape(n, m, cin), ((0, 0), (0, 0), (0, cp - cin)))
        out = _bn_id_add_relu(y2, r, sc2, sh2)

    out = out[:, :, :cout].reshape(n, ho, wo, cout)
    # TODO(synk): keep NHWC end-to-end in a full model; this final transpose is
    # only to match the PyTorch module's NCHW contract.
    return jnp.transpose(out, (0, 3, 1, 2))


# ---------------------------- pure-JAX reference -----------------------------

def _reference(x, params, stride, mimic_bf16):
    """Training-mode forward matching the PyTorch module.  With mimic_bf16=True
    the conv operands and the kernel's bf16-stored intermediates (y1, h, y2)
    are rounded to bf16 so the Pallas output can be checked tightly."""
    if mimic_bf16:
        rb = lambda a: a.astype(jnp.bfloat16).astype(jnp.float32)
    else:
        rb = lambda a: a

    def conv(inp, wgt, s, pad):
        return lax.conv_general_dilated(
            rb(inp), rb(wgt), (s, s), [(pad, pad), (pad, pad)],
            dimension_numbers=("NCHW", "OIHW", "NCHW"))

    def bn(y_stats, y_val, g, b):
        mean = jnp.mean(y_stats, axis=(0, 2, 3), keepdims=True)
        var = jnp.maximum(
            jnp.mean(y_stats * y_stats, axis=(0, 2, 3), keepdims=True)
            - mean * mean, 0.0)
        scale = g.reshape(1, -1, 1, 1) * lax.rsqrt(var + EPS)
        return y_val * scale + (b.reshape(1, -1, 1, 1) - mean * scale)

    cout, cin = params["w1"].shape[0], params["w1"].shape[1]
    y1 = conv(x, params["w1"], stride, 1)
    h = jnp.maximum(bn(y1, rb(y1), params["g1"], params["b1"]), 0.0)
    y2 = conv(rb(h), params["w2"], 1, 1)
    main = bn(y2, rb(y2), params["g2"], params["b2"])
    if stride != 1 or cin != cout:
        yd = conv(x, params["wd"], stride, 0)
        res = bn(yd, yd, params["gd"], params["bd"])
    else:
        res = x
    return jnp.maximum(main + res, 0.0)


# ----------------------------------- main ------------------------------------

if __name__ == "__main__":
    key = jax.random.PRNGKey(0)
    ks = jax.random.split(key, 12)

    N, Cin, H, W = 2, 4, 16, 16
    Cout, stride = 8, 2        # stride!=1 and Cin!=Cout -> downsample path active

    x = jax.random.normal(ks[0], (N, Cin, H, W), jnp.float32)
    params = {
        "w1": 0.1 * jax.random.normal(ks[1], (Cout, Cin, 3, 3), jnp.float32),
        "w2": 0.1 * jax.random.normal(ks[2], (Cout, Cout, 3, 3), jnp.float32),
        "wd": 0.1 * jax.random.normal(ks[3], (Cout, Cin, 1, 1), jnp.float32),
        "g1": 1.0 + 0.1 * jax.random.normal(ks[4], (Cout,), jnp.float32),
        "b1": 0.1 * jax.random.normal(ks[5], (Cout,), jnp.float32),
        "g2": 1.0 + 0.1 * jax.random.normal(ks[6], (Cout,), jnp.float32),
        "b2": 0.1 * jax.random.normal(ks[7], (Cout,), jnp.float32),
        "gd": 1.0 + 0.1 * jax.random.normal(ks[8], (Cout,), jnp.float32),
        "bd": 0.1 * jax.random.normal(ks[9], (Cout,), jnp.float32),
    }

    out = residual_block_forward(x, params, stride=stride)
    out = jax.block_until_ready(out)

    ref_mimic = jax.block_until_ready(_reference(x, params, stride, mimic_bf16=True))
    ref_f32 = jax.block_until_ready(_reference(x, params, stride, mimic_bf16=False))

    assert out.shape == ref_f32.shape, (out.shape, ref_f32.shape)
    # Tight-ish match against a reference with the same bf16 operand / storage
    # rounding points as the kernel (f32 accumulation everywhere).
    err_m = float(jnp.max(jnp.abs(out - ref_mimic)))
    assert jnp.allclose(out, ref_mimic, atol=1e-2, rtol=1e-2), err_m
    # Loose match against the pure-f32 PyTorch-equivalent training-mode forward.
    err_f = float(jnp.max(jnp.abs(out - ref_f32)))
    assert jnp.allclose(out, ref_f32, atol=5e-2, rtol=5e-2), err_f

    print("KERNEL_OK")
</pallas_src>

<mosaic_0001>
module attributes {stable_mosaic.version = 11 : i64} {
  func.func @_conv_taps_stats_kernel(%arg0: i32, %arg1: memref<1x9x9x128xbf16, #tpu.memory_space<vmem>>, %arg2: memref<4x128x128xbf16, #tpu.memory_space<vmem>>, %arg3: memref<1x64x128xbf16, #tpu.memory_space<vmem>>, %arg4: memref<1x1x128xf32, #tpu.memory_space<vmem>>, %arg5: memref<1x1x128xf32, #tpu.memory_space<vmem>>) attributes {dimension_semantics = [#tpu.dimension_semantics<parallel>], iteration_bounds = array<i64: 2>, scalar_prefetch = 0 : i64, scratch_operands = 0 : i64, tpu.core_type = #tpu.core_type<tc>, window_params = [{transform_indices = @transform_0, window_bounds = array<i64: 1, 9, 9, 128>}, {pipeline_mode = #tpu.pipeline_mode<synchronous>, transform_indices = @transform_1, window_bounds = array<i64: 4, 128, 128>}, {transform_indices = @transform_2, window_bounds = array<i64: 1, 64, 128>}, {transform_indices = @transform_3, window_bounds = array<i64: 1, 1, 128>}, {transform_indices = @transform_4, window_bounds = array<i64: 1, 1, 128>}]} {
    %cst = arith.constant 0.000000e+00 : f32
    %0 = vector.broadcast %cst : f32 to vector<64x128xf32>
    %c0 = arith.constant 0 : index
    %c0_0 = arith.constant 0 : index
    %c0_1 = arith.constant 0 : index
    %c0_2 = arith.constant 0 : index
    %1 = vector.load %arg1[%c0, %c0_0, %c0_1, %c0_2] : memref<1x9x9x128xbf16, #tpu.memory_space<vmem>>, vector<1x8x8x128xbf16>
    %2 = vector.shape_cast %1 : vector<1x8x8x128xbf16> to vector<8x8x128xbf16>
    %3 = arith.extf %2 : vector<8x8x128xbf16> to vector<8x8x128xf32>
    %4 = vector.shape_cast %3 : vector<8x8x128xf32> to vector<64x128xf32>
    %5 = arith.truncf %4 : vector<64x128xf32> to vector<64x128xbf16>
    %c0_3 = arith.constant 0 : index
    %c0_4 = arith.constant 0 : index
    %c0_5 = arith.constant 0 : index
    %6 = vector.load %arg2[%c0_3, %c0_4, %c0_5] : memref<4x128x128xbf16, #tpu.memory_space<vmem>>, vector<1x128x128xbf16>
    %7 = vector.shape_cast %6 : vector<1x128x128xbf16> to vector<128x128xbf16>
    %cst_6 = arith.constant dense<0.000000e+00> : vector<64x128xf32>
    %8 = tpu.matmul %5, %7, %cst_6 {dimension_numbers = #tpu.dot_dimension_numbers<[1], [0], [0], [1], [0, 0, 1, 1], [], []>} : vector<64x128xbf16>, vector<128x128xbf16>, vector<64x128xf32> -> vector<64x128xf32>
    %9 = arith.addf %0, %8 : vector<64x128xf32>
    %c0_7 = arith.constant 0 : index
    %c0_8 = arith.constant 0 : index
    %c1 = arith.constant 1 : index
    %c0_9 = arith.constant 0 : index
    %10 = vector.load %arg1[%c0_7, %c0_8, %c1, %c0_9] : memref<1x9x9x128xbf16, #tpu.memory_space<vmem>>, vector<1x8x8x128xbf16>
    %11 = vector.shape_cast %10 : vector<1x8x8x128xbf16> to vector<8x8x128xbf16>
    %12 = arith.extf %11 : vector<8x8x128xbf16> to vector<8x8x128xf32>
    %13 = vector.shape_cast %12 : vector<8x8x128xf32> to vector<64x128xf32>
    %14 = arith.truncf %13 : vector<64x128xf32> to vector<64x128xbf16>
    %c1_10 = arith.constant 1 : index
    %c0_11 = arith.constant 0 : index
    %c0_12 = arith.constant 0 : index
    %15 = vector.load %arg2[%c1_10, %c0_11, %c0_12] : memref<4x128x128xbf16, #tpu.memory_space<vmem>>, vector<1x128x128xbf16>
    %16 = vector.shape_cast %15 : vector<1x128x128xbf16> to vector<128x128xbf16>
    %cst_13 = arith.constant dense<0.000000e+00> : vector<64x128xf32>
    %17 = tpu.matmul %14, %16, %cst_13 {dimension_numbers = #tpu.dot_dimension_numbers<[1], [0], [0], [1], [0, 0, 1, 1], [], []>} : vector<64x128xbf16>, vector<128x128xbf16>, vector<64x128xf32> -> vector<64x128xf32>
    %18 = arith.addf %9, %17 : vector<64x128xf32>
    %c0_14 = arith.constant 0 : index
    %c1_15 = arith.constant 1 : index
    %c0_16 = arith.constant 0 : index
    %c0_17 = arith.constant 0 : index
    %19 = vector.load %arg1[%c0_14, %c1_15, %c0_16, %c0_17] : memref<1x9x9x128xbf16, #tpu.memory_space<vmem>>, vector<1x8x8x128xbf16>
    %20 = vector.shape_cast %19 : vector<1x8x8x128xbf16> to vector<8x8x128xbf16>
    %21 = arith.extf %20 : vector<8x8x128xbf16> to vector<8x8x128xf32>
    %22 = vector.shape_cast %21 : vector<8x8x128xf32> to vector<64x128xf32>
    %23 = arith.truncf %22 : vector<64x128xf32> to vector<64x128xbf16>
    %c2 = arith.constant 2 : index
    %c0_18 = arith.constant 0 : index
    %c0_19 = arith.constant 0 : index
    %24 = vector.load %arg2[%c2, %c0_18, %c0_19] : memref<4x128x128xbf16, #tpu.memory_space<vmem>>, vector<1x128x128xbf16>
    %25 = vector.shape_cast %24 : vector<1x128x128xbf16> to vector<128x128xbf16>
    %cst_20 = arith.constant dense<0.000000e+00> : vector<64x128xf32>
    %26 = tpu.matmul %23, %25, %cst_20 {dimension_numbers = #tpu.dot_dimension_numbers<[1], [0], [0], [1], [0, 0, 1, 1], [], []>} : vector<64x128xbf16>, vector<128x128xbf16>, vector<64x128xf32> -> vector<64x128xf32>
    %27 = arith.addf %18, %26 : vector<64x128xf32>
    %c0_21 = arith.constant 0 : index
    %c1_22 = arith.constant 1 : index
    %c1_23 = arith.constant 1 : index
    %c0_24 = arith.constant 0 : index
    %28 = vector.load %arg1[%c0_21, %c1_22, %c1_23, %c0_24] : memref<1x9x9x128xbf16, #tpu.memory_space<vmem>>, vector<1x8x8x128xbf16>
    %29 = vector.shape_cast %28 : vector<1x8x8x128xbf16> to vector<8x8x128xbf16>
    %30 = arith.extf %29 : vector<8x8x128xbf16> to vector<8x8x128xf32>
    %31 = vector.shape_cast %30 : vector<8x8x128xf32> to vector<64x128xf32>
    %32 = arith.truncf %31 : vector<64x128xf32> to vector<64x128xbf16>
    %c3 = arith.constant 3 : index
    %c0_25 = arith.constant 0 : index
    %c0_26 = arith.constant 0 : index
    %33 = vector.load %arg2[%c3, %c0_25, %c0_26] : memref<4x128x128xbf16, #tpu.memory_space<vmem>>, vector<1x128x128xbf16>
    %34 = vector.shape_cast %33 : vector<1x128x128xbf16> to vector<128x128xbf16>
    %cst_27 = arith.constant dense<0.000000e+00> : vector<64x128xf32>
    %35 = tpu.matmul %32, %34, %cst_27 {dimension_numbers = #tpu.dot_dimension_numbers<[1], [0], [0], [1], [0, 0, 1, 1], [], []>} : vector<64x128xbf16>, vector<128x128xbf16>, vector<64x128xf32> -> vector<64x128xf32>
    %36 = arith.addf %27, %35 : vector<64x128xf32>
    %37 = arith.truncf %36 : vector<64x128xf32> to vector<64x128xbf16>
    %c0_28 = arith.constant 0 : index
    %c0_29 = arith.constant 0 : index
    %c0_30 = arith.constant 0 : index
    %38 = vector.load %arg3[%c0_28, %c0_29, %c0_30] : memref<1x64x128xbf16, #tpu.memory_space<vmem>>, vector<1x64x128xbf16>
    %39 = vector.shape_cast %38 : vector<1x64x128xbf16> to vector<64x128xbf16>
    %40 = vector.shape_cast %37 : vector<64x128xbf16> to vector<1x64x128xbf16>
    tpu.vector_store %arg3[%c0_28, %c0_29, %c0_30], %40 {strides = array<i32>} : memref<1x64x128xbf16, #tpu.memory_space<vmem>>, vector<1x64x128xbf16>,
    %cst_31 = arith.constant dense<0.000000e+00> : vector<128xf32>
    %41 = vector.multi_reduction <add>, %36, %cst_31 [0] : vector<64x128xf32> to vector<128xf32>
    %42 = vector.shape_cast %41 : vector<128xf32> to vector<1x128xf32>
    %c0_32 = arith.constant 0 : index
    %c0_33 = arith.constant 0 : index
    %c0_34 = arith.constant 0 : index
    %43 = vector.load %arg4[%c0_32, %c0_33, %c0_34] : memref<1x1x128xf32, #tpu.memory_space<vmem>>, vector<1x1x128xf32>
    %44 = vector.shape_cast %43 : vector<1x1x128xf32> to vector<1x128xf32>
    %45 = vector.shape_cast %42 : vector<1x128xf32> to vector<1x1x128xf32>
    tpu.vector_store %arg4[%c0_32, %c0_33, %c0_34], %45 {strides = array<i32>} : memref<1x1x128xf32, #tpu.memory_space<vmem>>, vector<1x1x128xf32>,
    %46 = arith.mulf %36, %36 : vector<64x128xf32>
    %cst_35 = arith.constant dense<0.000000e+00> : vector<128xf32>
    %47 = vector.multi_reduction <add>, %46, %cst_35 [0] : vector<64x128xf32> to vector<128xf32>
    %48 = vector.shape_cast %47 : vector<128xf32> to vector<1x128xf32>
    %c0_36 = arith.constant 0 : index
    %c0_37 = arith.constant 0 : index
    %c0_38 = arith.constant 0 : index
    %49 = vector.load %arg5[%c0_36, %c0_37, %c0_38] : memref<1x1x128xf32, #tpu.memory_space<vmem>>, vector<1x1x128xf32>
    %50 = vector.shape_cast %49 : vector<1x1x128xf32> to vector<1x128xf32>
    %51 = vector.shape_cast %48 : vector<1x128xf32> to vector<1x1x128xf32>
    tpu.vector_store %arg5[%c0_36, %c0_37, %c0_38], %51 {strides = array<i32>} : memref<1x1x128xf32, #tpu.memory_space<vmem>>, vector<1x1x128xf32>,
    return
  }
  func.func @transform_0(%arg0: i32) -> (i32, i32, i32, i32) {
    %c0_i32 = arith.constant 0 : i32
    %c0_i32_0 = arith.constant 0 : i32
    %c0_i32_1 = arith.constant 0 : i32
    %c0_i32_2 = arith.constant 0 : i32
    return %arg0, %c0_i32, %c0_i32_0, %c0_i32_1 : i32, i32, i32, i32
  }
  func.func @transform_1(%arg0: i32) -> (i32, i32, i32) {
    %c0_i32 = arith.constant 0 : i32
    %c0_i32_0 = arith.constant 0 : i32
    %c0_i32_1 = arith.constant 0 : i32
    %c0_i32_2 = arith.constant 0 : i32
    return %c0_i32, %c0_i32_0, %c0_i32_1 : i32, i32, i32
  }
  func.func @transform_2(%arg0: i32) -> (i32, i32, i32) {
    %c0_i32 = arith.constant 0 : i32
    %c0_i32_0 = arith.constant 0 : i32
    %c0_i32_1 = arith.constant 0 : i32
    return %arg0, %c0_i32, %c0_i32_0 : i32, i32, i32
  }
  func.func @transform_3(%arg0: i32) -> (i32, i32, i32) {
    %c0_i32 = arith.constant 0 : i32
    %c0_i32_0 = arith.constant 0 : i32
    %c0_i32_1 = arith.constant 0 : i32
    return %arg0, %c0_i32, %c0_i32_0 : i32, i32, i32
  }
  func.func @transform_4(%arg0: i32) -> (i32, i32, i32) {
    %c0_i32 = arith.constant 0 : i32
    %c0_i32_0 = arith.constant 0 : i32
    %c0_i32_1 = arith.constant 0 : i32
    return %arg0, %c0_i32, %c0_i32_0 : i32, i32, i32
  }
}

module attributes {stable_mosaic.version = 11 : i64} {
  func.func @_conv2_stats_ds_kernel(%arg0: i32, %arg1: memref<1x64x128xbf16, #tpu.memory_space<vmem>>, %arg2: memref<1x128xf32, #tpu.memory_space<vmem>>, %arg3: memref<1x128xf32, #tpu.memory_space<vmem>>, %arg4: memref<9x128x128xbf16, #tpu.memory_space<vmem>>, %arg5: memref<1x64x128xbf16, #tpu.memory_space<vmem>>, %arg6: memref<128x128xbf16, #tpu.memory_space<vmem>>, %arg7: memref<1x64x128xbf16, #tpu.memory_space<vmem>>, %arg8: memref<1x1x128xf32, #tpu.memory_space<vmem>>, %arg9: memref<1x1x128xf32, #tpu.memory_space<vmem>>, %arg10: memref<1x1x128xf32, #tpu.memory_space<vmem>>, %arg11: memref<1x1x128xf32, #tpu.memory_space<vmem>>, %arg12: memref<10x10x128xf32, #tpu.memory_space<vmem>>) attributes {dimension_semantics = [#tpu.dimension_semantics<parallel>], iteration_bounds = array<i64: 2>, scalar_prefetch = 0 : i64, scratch_operands = 1 : i64, tpu.core_type = #tpu.core_type<tc>, window_params = [{transform_indices = @transform_0, window_bounds = array<i64: 1, 64, 128>}, {pipeline_mode = #tpu.pipeline_mode<synchronous>, transform_indices = @transform_1, window_bounds = array<i64: 1, 128>}, {pipeline_mode = #tpu.pipeline_mode<synchronous>, transform_indices = @transform_2, window_bounds = array<i64: 1, 128>}, {pipeline_mode = #tpu.pipeline_mode<synchronous>, transform_indices = @transform_3, window_bounds = array<i64: 9, 128, 128>}, {transform_indices = @transform_4, window_bounds = array<i64: 1, 64, 128>}, {pipeline_mode = #tpu.pipeline_mode<synchronous>, transform_indices = @transform_5, window_bounds = array<i64: 128, 128>}, {transform_indices = @transform_6, window_bounds = array<i64: 1, 64, 128>}, {transform_indices = @transform_7, window_bounds = array<i64: 1, 1, 128>}, {transform_indices = @transform_8, window_bounds = array<i64: 1, 1, 128>}, {transform_indices = @transform_9, window_bounds = array<i64: 1, 1, 128>}, {transform_indices = @transform_10, window_bounds = array<i64: 1, 1, 128>}]} {
    %c0 = arith.constant 0 : index
    %c0_0 = arith.constant 0 : index
    %c0_1 = arith.constant 0 : index
    %0 = vector.load %arg1[%c0, %c0_0, %c0_1] : memref<1x64x128xbf16, #tpu.memory_space<vmem>>, vector<1x64x128xbf16>
    %1 = vector.shape_cast %0 : vector<1x64x128xbf16> to vector<64x128xbf16>
    %2 = arith.extf %1 : vector<64x128xbf16> to vector<64x128xf32>
    %c0_2 = arith.constant 0 : index
    %c0_3 = arith.constant 0 : index
    %3 = vector.load %arg2[%c0_2, %c0_3] : memref<1x128xf32, #tpu.memory_space<vmem>>, vector<1x128xf32>
    %4 = vector.broadcast %3 : vector<1x128xf32> to vector<64x128xf32>
    %5 = arith.mulf %2, %4 : vector<64x128xf32>
    %c0_4 = arith.constant 0 : index
    %c0_5 = arith.constant 0 : index
    %6 = vector.load %arg3[%c0_4, %c0_5] : memref<1x128xf32, #tpu.memory_space<vmem>>, vector<1x128xf32>
    %7 = vector.broadcast %6 : vector<1x128xf32> to vector<64x128xf32>
    %8 = arith.addf %5, %7 : vector<64x128xf32>
    %cst = arith.constant 0.000000e+00 : f32
    %9 = vector.broadcast %cst : f32 to vector<64x128xf32>
    %10 = arith.maximumf %8, %9 : vector<64x128xf32>
    %cst_6 = arith.constant 0.000000e+00 : f32
    %11 = vector.broadcast %cst_6 : f32 to vector<10x10x128xf32>
    %c0_7 = arith.constant 0 : index
    %c0_8 = arith.constant 0 : index
    %c0_9 = arith.constant 0 : index
    %12 = vector.load %arg12[%c0_7, %c0_8, %c0_9] : memref<10x10x128xf32, #tpu.memory_space<vmem>>, vector<10x10x128xf32>
    tpu.vector_store %arg12[%c0_7, %c0_8, %c0_9], %11 {strides = array<i32>} : memref<10x10x128xf32, #tpu.memory_space<vmem>>, vector<10x10x128xf32>,
    %13 = vector.shape_cast %10 : vector<64x128xf32> to vector<8x8x128xf32>
    %c1 = arith.constant 1 : index
    %c1_10 = arith.constant 1 : index
    %c0_11 = arith.constant 0 : index
    %14 = vector.load %arg12[%c1, %c1_10, %c0_11] : memref<10x10x128xf32, #tpu.memory_space<vmem>>, vector<8x8x128xf32>
    tpu.vector_store %arg12[%c1, %c1_10, %c0_11], %13 {strides = array<i32>} : memref<10x10x128xf32, #tpu.memory_space<vmem>>, vector<8x8x128xf32>,
    %cst_12 = arith.constant 0.000000e+00 : f32
    %15 = vector.broadcast %cst_12 : f32 to vector<64x128xf32>
    %c0_13 = arith.constant 0 : index
    %c0_14 = arith.constant 0 : index
    %c0_15 = arith.constant 0 : index
    %16 = vector.load %arg12[%c0_13, %c0_14, %c0_15] : memref<10x10x128xf32, #tpu.memory_space<vmem>>, vector<8x8x128xf32>
    %17 = vector.shape_cast %16 : vector<8x8x128xf32> to vector<64x128xf32>
    %18 = arith.truncf %17 : vector<64x128xf32> to vector<64x128xbf16>
    %c0_16 = arith.constant 0 : index
    %c0_17 = arith.constant 0 : index
    %c0_18 = arith.constant 0 : index
    %19 = vector.load %arg4[%c0_16, %c0_17, %c0_18] : memref<9x128x128xbf16, #tpu.memory_space<vmem>>, vector<1x128x128xbf16>
    %20 = vector.shape_cast %19 : vector<1x128x128xbf16> to vector<128x128xbf16>
    %cst_19 = arith.constant dense<0.000000e+00> : vector<64x128xf32>
    %21 = tpu.matmul %18, %20, %cst_19 {dimension_numbers = #tpu.dot_dimension_numbers<[1], [0], [0], [1], [0, 0, 1, 1], [], []>} : vector<64x128xbf16>, vector<128x128xbf16>, vector<64x128xf32> -> vector<64x128xf32>
    %22 = arith.addf %15, %21 : vector<64x128xf32>
    %c0_20 = arith.constant 0 : index
    %c1_21 = arith.constant 1 : index
    %c0_22 = arith.constant 0 : index
    %23 = vector.load %arg12[%c0_20, %c1_21, %c0_22] : memref<10x10x128xf32, #tpu.memory_space<vmem>>, vector<8x8x128xf32>
    %24 = vector.shape_cast %23 : vector<8x8x128xf32> to vector<64x128xf32>
    %25 = arith.truncf %24 : vector<64x128xf32> to vector<64x128xbf16>
    %c1_23 = arith.constant 1 : index
    %c0_24 = arith.constant 0 : index
    %c0_25 = arith.constant 0 : index
    %26 = vector.load %arg4[%c1_23, %c0_24, %c0_25] : memref<9x128x128xbf16, #tpu.memory_space<vmem>>, vector<1x128x128xbf16>
    %27 = vector.shape_cast %26 : vector<1x128x128xbf16> to vector<128x128xbf16>
    %cst_26 = arith.constant dense<0.000000e+00> : vector<64x128xf32>
    %28 = tpu.matmul %25, %27, %cst_26 {dimension_numbers = #tpu.dot_dimension_numbers<[1], [0], [0], [1], [0, 0, 1, 1], [], []>} : vector<64x128xbf16>, vector<128x128xbf16>, vector<64x128xf32> -> vector<64x128xf32>
    %29 = arith.addf %22, %28 : vector<64x128xf32>
    %c0_27 = arith.constant 0 : index
    %c2 = arith.constant 2 : index
    %c0_28 = arith.constant 0 : index
    %30 = vector.load %arg12[%c0_27, %c2, %c0_28] : memref<10x10x128xf32, #tpu.memory_space<vmem>>, vector<8x8x128xf32>
    %31 = vector.shape_cast %30 : vector<8x8x128xf32> to vector<64x128xf32>
    %32 = arith.truncf %31 : vector<64x128xf32> to vector<64x128xbf16>
    %c2_29 = arith.constant 2 : index
    %c0_30 = arith.constant 0 : index
    %c0_31 = arith.constant 0 : index
    %33 = vector.load %arg4[%c2_29, %c0_30, %c0_31] : memref<9x128x128xbf16, #tpu.memory_space<vmem>>, vector<1x128x128xbf16>
    %34 = vector.shape_cast %33 : vector<1x128x128xbf16> to vector<128x128xbf16>
    %cst_32 = arith.constant dense<0.000000e+00> : vector<64x128xf32>
    %35 = tpu.matmul %32, %34, %cst_32 {dimension_numbers = #tpu.dot_dimension_numbers<[1], [0], [0], [1], [0, 0, 1, 1], [], []>} : vector<64x128xbf16>, vector<128x128xbf16>, vector<64x128xf32> -> vector<64x128xf32>
    %36 = arith.addf %29, %35 : vector<64x128xf32>
    %c1_33 = arith.constant 1 : index
    %c0_34 = arith.constant 0 : index
    %c0_35 = arith.constant 0 : index
    %37 = vector.load %arg12[%c1_33, %c0_34, %c0_35] : memref<10x10x128xf32, #tpu.memory_space<vmem>>, vector<8x8x128xf32>
    %38 = vector.shape_cast %37 : vector<8x8x128xf32> to vector<64x128xf32>
    %39 = arith.truncf %38 : vector<64x128xf32> to vector<64x128xbf16>
    %c3 = arith.constant 3 : index
    %c0_36 = arith.constant 0 : index
    %c0_37 = arith.constant 0 : index
    %40 = vector.load %arg4[%c3, %c0_36, %c0_37] : memref<9x128x128xbf16, #tpu.memory_space<vmem>>, vector<1x128x128xbf16>
    %41 = vector.shape_cast %40 : vector<1x128x128xbf16> to vector<128x128xbf16>
    %cst_38 = arith.constant dense<0.000000e+00> : vector<64x128xf32>
    %42 = tpu.matmul %39, %41, %cst_38 {dimension_numbers = #tpu.dot_dimension_numbers<[1], [0], [0], [1], [0, 0, 1, 1], [], []>} : vector<64x128xbf16>, vector<128x128xbf16>, vector<64x128xf32> -> vector<64x128xf32>
    %43 = arith.addf %36, %42 : vector<64x128xf32>
    %c1_39 = arith.constant 1 : index
    %c1_40 = arith.constant 1 : index
    %c0_41 = arith.constant 0 : index
    %44 = vector.load %arg12[%c1_39, %c1_40, %c0_41] : memref<10x10x128xf32, #tpu.memory_space<vmem>>, vector<8x8x128xf32>
    %45 = vector.shape_cast %44 : vector<8x8x128xf32> to vector<64x128xf32>
    %46 = arith.truncf %45 : vector<64x128xf32> to vector<64x128xbf16>
    %c4 = arith.constant 4 : index
    %c0_42 = arith.constant 0 : index
    %c0_43 = arith.constant 0 : index
    %47 = vector.load %arg4[%c4, %c0_42, %c0_43] : memref<9x128x128xbf16, #tpu.memory_space<vmem>>, vector<1x128x128xbf16>
    %48 = vector.shape_cast %47 : vector<1x128x128xbf16> to vector<128x128xbf16>
    %cst_44 = arith.constant dense<0.000000e+00> : vector<64x128xf32>
    %49 = tpu.matmul %46, %48, %cst_44 {dimension_numbers = #tpu.dot_dimension_numbers<[1], [0], [0], [1], [0, 0, 1, 1], [], []>} : vector<64x128xbf16>, vector<128x128xbf16>, vector<64x128xf32> -> vector<64x128xf32>
    %50 = arith.addf %43, %49 : vector<64x128xf32>
    %c1_45 = arith.constant 1 : index
    %c2_46 = arith.constant 2 : index
    %c0_47 = arith.constant 0 : index
    %51 = vector.load %arg12[%c1_45, %c2_46, %c0_47] : memref<10x10x128xf32, #tpu.memory_space<vmem>>, vector<8x8x128xf32>
    %52 = vector.shape_cast %51 : vector<8x8x128xf32> to vector<64x128xf32>
    %53 = arith.truncf %52 : vector<64x128xf32> to vector<64x128xbf16>
    %c5 = arith.constant 5 : index
    %c0_48 = arith.constant 0 : index
    %c0_49 = arith.constant 0 : index
    %54 = vector.load %arg4[%c5, %c0_48, %c0_49] : memref<9x128x128xbf16, #tpu.memory_space<vmem>>, vector<1x128x128xbf16>
    %55 = vector.shape_cast %54 : vector<1x128x128xbf16> to vector<128x128xbf16>
    %cst_50 = arith.constant dense<0.000000e+00> : vector<64x128xf32>
    %56 = tpu.matmul %53, %55, %cst_50 {dimension_numbers = #tpu.dot_dimension_numbers<[1], [0], [0], [1], [0, 0, 1, 1], [], []>} : vector<64x128xbf16>, vector<128x128xbf16>, vector<64x128xf32> -> vector<64x128xf32>
    %57 = arith.addf %50, %56 : vector<64x128xf32>
    %c2_51 = arith.constant 2 : index
    %c0_52 = arith.constant 0 : index
    %c0_53 = arith.constant 0 : index
    %58 = vector.load %arg12[%c2_51, %c0_52, %c0_53] : memref<10x10x128xf32, #tpu.memory_space<vmem>>, vector<8x8x128xf32>
    %59 = vector.shape_cast %58 : vector<8x8x128xf32> to vector<64x128xf32>
    %60 = arith.truncf %59 : vector<64x128xf32> to vector<64x128xbf16>
    %c6 = arith.constant 6 : index
    %c0_54 = arith.constant 0 : index
    %c0_55 = arith.constant 0 : index
    %61 = vector.load %arg4[%c6, %c0_54, %c0_55] : memref<9x128x128xbf16, #tpu.memory_space<vmem>>, vector<1x128x128xbf16>
    %62 = vector.shape_cast %61 : vector<1x128x128xbf16> to vector<128x128xbf16>
    %cst_56 = arith.constant dense<0.000000e+00> : vector<64x128xf32>
    %63 = tpu.matmul %60, %62, %cst_56 {dimension_numbers = #tpu.dot_dimension_numbers<[1], [0], [0], [1], [0, 0, 1, 1], [], []>} : vector<64x128xbf16>, vector<128x128xbf16>, vector<64x128xf32> -> vector<64x128xf32>
    %64 = arith.addf %57, %63 : vector<64x128xf32>
    %c2_57 = arith.constant 2 : index
    %c1_58 = arith.constant 1 : index
    %c0_59 = arith.constant 0 : index
    %65 = vector.load %arg12[%c2_57, %c1_58, %c0_59] : memref<10x10x128xf32, #tpu.memory_space<vmem>>, vector<8x8x128xf32>
    %66 = vector.shape_cast %65 : vector<8x8x128xf32> to vector<64x128xf32>
    %67 = arith.truncf %66 : vector<64x128xf32> to vector<64x128xbf16>
    %c7 = arith.constant 7 : index
    %c0_60 = arith.constant 0 : index
    %c0_61 = arith.constant 0 : index
    %68 = vector.load %arg4[%c7, %c0_60, %c0_61] : memref<9x128x128xbf16, #tpu.memory_space<vmem>>, vector<1x128x128xbf16>
    %69 = vector.shape_cast %68 : vector<1x128x128xbf16> to vector<128x128xbf16>
    %cst_62 = arith.constant dense<0.000000e+00> : vector<64x128xf32>
    %70 = tpu.matmul %67, %69, %cst_62 {dimension_numbers = #tpu.dot_dimension_numbers<[1], [0], [0], [1], [0, 0, 1, 1], [], []>} : vector<64x128xbf16>, vector<128x128xbf16>, vector<64x128xf32> -> vector<64x128xf32>
    %71 = arith.addf %64, %70 : vector<64x128xf32>
    %c2_63 = arith.constant 2 : index
    %c2_64 = arith.constant 2 : index
    %c0_65 = arith.constant 0 : index
    %72 = vector.load %arg12[%c2_63, %c2_64, %c0_65] : memref<10x10x128xf32, #tpu.memory_space<vmem>>, vector<8x8x128xf32>
    %73 = vector.shape_cast %72 : vector<8x8x128xf32> to vector<64x128xf32>
    %74 = arith.truncf %73 : vector<64x128xf32> to vector<64x128xbf16>
    %c8 = arith.constant 8 : index
    %c0_66 = arith.constant 0 : index
    %c0_67 = arith.constant 0 : index
    %75 = vector.load %arg4[%c8, %c0_66, %c0_67] : memref<9x128x128xbf16, #tpu.memory_space<vmem>>, vector<1x128x128xbf16>
    %76 = vector.shape_cast %75 : vector<1x128x128xbf16> to vector<128x128xbf16>
    %cst_68 = arith.constant dense<0.000000e+00> : vector<64x128xf32>
    %77 = tpu.matmul %74, %76, %cst_68 {dimension_numbers = #tpu.dot_dimension_numbers<[1], [0], [0], [1], [0, 0, 1, 1], [], []>} : vector<64x128xbf16>, vector<128x128xbf16>, vector<64x128xf32> -> vector<64x128xf32>
    %78 = arith.addf %71, %77 : vector<64x128xf32>
    %79 = arith.truncf %78 : vector<64x128xf32> to vector<64x128xbf16>
    %c0_69 = arith.constant 0 : index
    %c0_70 = arith.constant 0 : index
    %c0_71 = arith.constant 0 : index
    %80 = vector.load %arg7[%c0_69, %c0_70, %c0_71] : memref<1x64x128xbf16, #tpu.memory_space<vmem>>, vector<1x64x128xbf16>
    %81 = vector.shape_cast %80 : vector<1x64x128xbf16> to vector<64x128xbf16>
    %82 = vector.shape_cast %79 : vector<64x128xbf16> to vector<1x64x128xbf16>
    tpu.vector_store %arg7[%c0_69, %c0_70, %c0_71], %82 {strides = array<i32>} : memref<1x64x128xbf16, #tpu.memory_space<vmem>>, vector<1x64x128xbf16>,
    %cst_72 = arith.constant dense<0.000000e+00> : vector<128xf32>
    %83 = vector.multi_reduction <add>, %78, %cst_72 [0] : vector<64x128xf32> to vector<128xf32>
    %84 = vector.shape_cast %83 : vector<128xf32> to vector<1x128xf32>
    %c0_73 = arith.constant 0 : index
    %c0_74 = arith.constant 0 : index
    %c0_75 = arith.constant 0 : index
    %85 = vector.load %arg8[%c0_73, %c0_74, %c0_75] : memref<1x1x128xf32, #tpu.memory_space<vmem>>, vector<1x1x128xf32>
    %86 = vector.shape_cast %85 : vector<1x1x128xf32> to vector<1x128xf32>
    %87 = vector.shape_cast %84 : vector<1x128xf32> to vector<1x1x128xf32>
    tpu.vector_store %arg8[%c0_73, %c0_74, %c0_75], %87 {strides = array<i32>} : memref<1x1x128xf32, #tpu.memory_space<vmem>>, vector<1x1x128xf32>,
    %88 = arith.mulf %78, %78 : vector<64x128xf32>
    %cst_76 = arith.constant dense<0.000000e+00> : vector<128xf32>
    %89 = vector.multi_reduction <add>, %88, %cst_76 [0] : vector<64x128xf32> to vector<128xf32>
    %90 = vector.shape_cast %89 : vector<128xf32> to vector<1x128xf32>
    %c0_77 = arith.constant 0 : index
    %c0_78 = arith.constant 0 : index
    %c0_79 = arith.constant 0 : index
    %91 = vector.load %arg9[%c0_77, %c0_78, %c0_79] : memref<1x1x128xf32, #tpu.memory_space<vmem>>, vector<1x1x128xf32>
    %92 = vector.shape_cast %91 : vector<1x1x128xf32> to vector<1x128xf32>
    %93 = vector.shape_cast %90 : vector<1x128xf32> to vector<1x1x128xf32>
    tpu.vector_store %arg9[%c0_77, %c0_78, %c0_79], %93 {strides = array<i32>} : memref<1x1x128xf32, #tpu.memory_space<vmem>>, vector<1x1x128xf32>,
    %c0_80 = arith.constant 0 : index
    %c0_81 = arith.constant 0 : index
    %c0_82 = arith.constant 0 : index
    %94 = vector.load %arg5[%c0_80, %c0_81, %c0_82] : memref<1x64x128xbf16, #tpu.memory_space<vmem>>, vector<1x64x128xbf16>
    %95 = vector.shape_cast %94 : vector<1x64x128xbf16> to vector<64x128xbf16>
    %c0_83 = arith.constant 0 : index
    %c0_84 = arith.constant 0 : index
    %96 = vector.load %arg6[%c0_83, %c0_84] : memref<128x128xbf16, #tpu.memory_space<vmem>>, vector<128x128xbf16>
    %cst_85 = arith.constant dense<0.000000e+00> : vector<64x128xf32>
    %97 = tpu.matmul %95, %96, %cst_85 {dimension_numbers = #tpu.dot_dimension_numbers<[1], [0], [0], [1], [0, 0, 1, 1], [], []>} : vector<64x128xbf16>, vector<128x128xbf16>, vector<64x128xf32> -> vector<64x128xf32>
    %cst_86 = arith.constant dense<0.000000e+00> : vector<128xf32>
    %98 = vector.multi_reduction <add>, %97, %cst_86 [0] : vector<64x128xf32> to vector<128xf32>
    %99 = vector.shape_cast %98 : vector<128xf32> to vector<1x128xf32>
    %c0_87 = arith.constant 0 : index
    %c0_88 = arith.constant 0 : index
    %c0_89 = arith.constant 0 : index
    %100 = vector.load %arg10[%c0_87, %c0_88, %c0_89] : memref<1x1x128xf32, #tpu.memory_space<vmem>>, vector<1x1x128xf32>
    %101 = vector.shape_cast %100 : vector<1x1x128xf32> to vector<1x128xf32>
    %102 = vector.shape_cast %99 : vector<1x128xf32> to vector<1x1x128xf32>
    tpu.vector_store %arg10[%c0_87, %c0_88, %c0_89], %102 {strides = array<i32>} : memref<1x1x128xf32, #tpu.memory_space<vmem>>, vector<1x1x128xf32>,
    %103 = arith.mulf %97, %97 : vector<64x128xf32>
    %cst_90 = arith.constant dense<0.000000e+00> : vector<128xf32>
    %104 = vector.multi_reduction <add>, %103, %cst_90 [0] : vector<64x128xf32> to vector<128xf32>
    %105 = vector.shape_cast %104 : vector<128xf32> to vector<1x128xf32>
    %c0_91 = arith.constant 0 : index
    %c0_92 = arith.constant 0 : index
    %c0_93 = arith.constant 0 : index
    %106 = vector.load %arg11[%c0_91, %c0_92, %c0_93] : memref<1x1x128xf32, #tpu.memory_space<vmem>>, vector<1x1x128xf32>
    %107 = vector.shape_cast %106 : vector<1x1x128xf32> to vector<1x128xf32>
    %108 = vector.shape_cast %105 : vector<1x128xf32> to vector<1x1x128xf32>
    tpu.vector_store %arg11[%c0_91, %c0_92, %c0_93], %108 {strides = array<i32>} : memref<1x1x128xf32, #tpu.memory_space<vmem>>, vector<1x1x128xf32>,
    return
  }
  func.func @transform_0(%arg0: i32) -> (i32, i32, i32) {
    %c0_i32 = arith.constant 0 : i32
    %c0_i32_0 = arith.constant 0 : i32
    %c0_i32_1 = arith.constant 0 : i32
    return %arg0, %c0_i32, %c0_i32_0 : i32, i32, i32
  }
  func.func @transform_1(%arg0: i32) -> (i32, i32) {
    %c0_i32 = arith.constant 0 : i32
    %c0_i32_0 = arith.constant 0 : i32
    %c0_i32_1 = arith.constant 0 : i32
    return %c0_i32, %c0_i32_0 : i32, i32
  }
  func.func @transform_2(%arg0: i32) -> (i32, i32) {
    %c0_i32 = arith.constant 0 : i32
    %c0_i32_0 = arith.constant 0 : i32
    %c0_i32_1 = arith.constant 0 : i32
    return %c0_i32, %c0_i32_0 : i32, i32
  }
  func.func @transform_3(%arg0: i32) -> (i32, i32, i32) {
    %c0_i32 = arith.constant 0 : i32
    %c0_i32_0 = arith.constant 0 : i32
    %c0_i32_1 = arith.constant 0 : i32
    %c0_i32_2 = arith.constant 0 : i32
    return %c0_i32, %c0_i32_0, %c0_i32_1 : i32, i32, i32
  }
  func.func @transform_4(%arg0: i32) -> (i32, i32, i32) {
    %c0_i32 = arith.constant 0 : i32
    %c0_i32_0 = arith.constant 0 : i32
    %c0_i32_1 = arith.constant 0 : i32
    return %arg0, %c0_i32, %c0_i32_0 : i32, i32, i32
  }
  func.func @transform_5(%arg0: i32) -> (i32, i32) {
    %c0_i32 = arith.constant 0 : i32
    %c0_i32_0 = arith.constant 0 : i32
    %c0_i32_1 = arith.constant 0 : i32
    return %c0_i32, %c0_i32_0 : i32, i32
  }
  func.func @transform_6(%arg0: i32) -> (i32, i32, i32) {
    %c0_i32 = arith.constant 0 : i32
    %c0_i32_0 = arith.constant 0 : i32
    %c0_i32_1 = arith.constant 0 : i32
    return %arg0, %c0_i32, %c0_i32_0 : i32, i32, i32
  }
  func.func @transform_7(%arg0: i32) -> (i32, i32, i32) {
    %c0_i32 = arith.constant 0 : i32
    %c0_i32_0 = arith.constant 0 : i32
    %c0_i32_1 = arith.constant 0 : i32
    return %arg0, %c0_i32, %c0_i32_0 : i32, i32, i32
  }
  func.func @transform_8(%arg0: i32) -> (i32, i32, i32) {
    %c0_i32 = arith.constant 0 : i32
    %c0_i32_0 = arith.constant 0 : i32
    %c0_i32_1 = arith.constant 0 : i32
    return %arg0, %c0_i32, %c0_i32_0 : i32, i32, i32
  }
  func.func @transform_9(%arg0: i32) -> (i32, i32, i32) {
    %c0_i32 = arith.constant 0 : i32
    %c0_i32_0 = arith.constant 0 : i32
    %c0_i32_1 = arith.constant 0 : i32
    return %arg0, %c0_i32, %c0_i32_0 : i32, i32, i32
  }
  func.func @transform_10(%arg0: i32) -> (i32, i32, i32) {
    %c0_i32 = arith.constant 0 : i32
    %c0_i32_0 = arith.constant 0 : i32
    %c0_i32_1 = arith.constant 0 : i32
    return %arg0, %c0_i32, %c0_i32_0 : i32, i32, i32
  }
}

module attributes {stable_mosaic.version = 11 : i64} {
  func.func @_bn_ds_add_relu_kernel(%arg0: i32, %arg1: memref<1x64x128xbf16, #tpu.memory_space<vmem>>, %arg2: memref<1x64x128xbf16, #tpu.memory_space<vmem>>, %arg3: memref<128x128xbf16, #tpu.memory_space<vmem>>, %arg4: memref<1x128xf32, #tpu.memory_space<vmem>>, %arg5: memref<1x128xf32, #tpu.memory_space<vmem>>, %arg6: memref<1x128xf32, #tpu.memory_space<vmem>>, %arg7: memref<1x128xf32, #tpu.memory_space<vmem>>, %arg8: memref<1x64x128xf32, #tpu.memory_space<vmem>>) attributes {dimension_semantics = [#tpu.dimension_semantics<parallel>], iteration_bounds = array<i64: 2>, scalar_prefetch = 0 : i64, scratch_operands = 0 : i64, tpu.core_type = #tpu.core_type<tc>, window_params = [{transform_indices = @transform_0, window_bounds = array<i64: 1, 64, 128>}, {transform_indices = @transform_1, window_bounds = array<i64: 1, 64, 128>}, {pipeline_mode = #tpu.pipeline_mode<synchronous>, transform_indices = @transform_2, window_bounds = array<i64: 128, 128>}, {pipeline_mode = #tpu.pipeline_mode<synchronous>, transform_indices = @transform_3, window_bounds = array<i64: 1, 128>}, {pipeline_mode = #tpu.pipeline_mode<synchronous>, transform_indices = @transform_4, window_bounds = array<i64: 1, 128>}, {pipeline_mode = #tpu.pipeline_mode<synchronous>, transform_indices = @transform_5, window_bounds = array<i64: 1, 128>}, {pipeline_mode = #tpu.pipeline_mode<synchronous>, transform_indices = @transform_6, window_bounds = array<i64: 1, 128>}, {transform_indices = @transform_7, window_bounds = array<i64: 1, 64, 128>}]} {
    %c0 = arith.constant 0 : index
    %c0_0 = arith.constant 0 : index
    %c0_1 = arith.constant 0 : index
    %0 = vector.load %arg2[%c0, %c0_0, %c0_1] : memref<1x64x128xbf16, #tpu.memory_space<vmem>>, vector<1x64x128xbf16>
    %1 = vector.shape_cast %0 : vector<1x64x128xbf16> to vector<64x128xbf16>
    %c0_2 = arith.constant 0 : index
    %c0_3 = arith.constant 0 : index
    %2 = vector.load %arg3[%c0_2, %c0_3] : memref<128x128xbf16, #tpu.memory_space<vmem>>, vector<128x128xbf16>
    %cst = arith.constant dense<0.000000e+00> : vector<64x128xf32>
    %3 = tpu.matmul %1, %2, %cst {dimension_numbers = #tpu.dot_dimension_numbers<[1], [0], [0], [1], [0, 0, 1, 1], [], []>} : vector<64x128xbf16>, vector<128x128xbf16>, vector<64x128xf32> -> vector<64x128xf32>
    %c0_4 = arith.constant 0 : index
    %c0_5 = arith.constant 0 : index
    %c0_6 = arith.constant 0 : index
    %4 = vector.load %arg1[%c0_4, %c0_5, %c0_6] : memref<1x64x128xbf16, #tpu.memory_space<vmem>>, vector<1x64x128xbf16>
    %5 = vector.shape_cast %4 : vector<1x64x128xbf16> to vector<64x128xbf16>
    %6 = arith.extf %5 : vector<64x128xbf16> to vector<64x128xf32>
    %c0_7 = arith.constant 0 : index
    %c0_8 = arith.constant 0 : index
    %7 = vector.load %arg4[%c0_7, %c0_8] : memref<1x128xf32, #tpu.memory_space<vmem>>, vector<1x128xf32>
    %8 = vector.broadcast %7 : vector<1x128xf32> to vector<64x128xf32>
    %9 = arith.mulf %6, %8 : vector<64x128xf32>
    %c0_9 = arith.constant 0 : index
    %c0_10 = arith.constant 0 : index
    %10 = vector.load %arg5[%c0_9, %c0_10] : memref<1x128xf32, #tpu.memory_space<vmem>>, vector<1x128xf32>
    %11 = vector.broadcast %10 : vector<1x128xf32> to vector<64x128xf32>
    %12 = arith.addf %9, %11 : vector<64x128xf32>
    %c0_11 = arith.constant 0 : index
    %c0_12 = arith.constant 0 : index
    %13 = vector.load %arg6[%c0_11, %c0_12] : memref<1x128xf32, #tpu.memory_space<vmem>>, vector<1x128xf32>
    %14 = vector.broadcast %13 : vector<1x128xf32> to vector<64x128xf32>
    %15 = arith.mulf %3, %14 : vector<64x128xf32>
    %c0_13 = arith.constant 0 : index
    %c0_14 = arith.constant 0 : index
    %16 = vector.load %arg7[%c0_13, %c0_14] : memref<1x128xf32, #tpu.memory_space<vmem>>, vector<1x128xf32>
    %17 = vector.broadcast %16 : vector<1x128xf32> to vector<64x128xf32>
    %18 = arith.addf %15, %17 : vector<64x128xf32>
    %19 = arith.addf %12, %18 : vector<64x128xf32>
    %cst_15 = arith.constant 0.000000e+00 : f32
    %20 = vector.broadcast %cst_15 : f32 to vector<64x128xf32>
    %21 = arith.maximumf %19, %20 : vector<64x128xf32>
    %c0_16 = arith.constant 0 : index
    %c0_17 = arith.constant 0 : index
    %c0_18 = arith.constant 0 : index
    %22 = vector.load %arg8[%c0_16, %c0_17, %c0_18] : memref<1x64x128xf32, #tpu.memory_space<vmem>>, vector<1x64x128xf32>
    %23 = vector.shape_cast %22 : vector<1x64x128xf32> to vector<64x128xf32>
    %24 = vector.shape_cast %21 : vector<64x128xf32> to vector<1x64x128xf32>
    tpu.vector_store %arg8[%c0_16, %c0_17, %c0_18], %24 {strides = array<i32>} : memref<1x64x128xf32, #tpu.memory_space<vmem>>, vector<1x64x128xf32>,
    return
  }
  func.func @transform_0(%arg0: i32) -> (i32, i32, i32) {
    %c0_i32 = arith.constant 0 : i32
    %c0_i32_0 = arith.constant 0 : i32
    %c0_i32_1 = arith.constant 0 : i32
    return %arg0, %c0_i32, %c0_i32_0 : i32, i32, i32
  }
  func.func @transform_1(%arg0: i32) -> (i32, i32, i32) {
    %c0_i32 = arith.constant 0 : i32
    %c0_i32_0 = arith.constant 0 : i32
    %c0_i32_1 = arith.constant 0 : i32
    return %arg0, %c0_i32, %c0_i32_0 : i32, i32, i32
  }
  func.func @transform_2(%arg0: i32) -> (i32, i32) {
    %c0_i32 = arith.constant 0 : i32
    %c0_i32_0 = arith.constant 0 : i32
    %c0_i32_1 = arith.constant 0 : i32
    return %c0_i32, %c0_i32_0 : i32, i32
  }
  func.func @transform_3(%arg0: i32) -> (i32, i32) {
    %c0_i32 = arith.constant 0 : i32
    %c0_i32_0 = arith.constant 0 : i32
    %c0_i32_1 = arith.constant 0 : i32
    return %c0_i32, %c0_i32_0 : i32, i32
  }
  func.func @transform_4(%arg0: i32) -> (i32, i32) {
    %c0_i32 = arith.constant 0 : i32
    %c0_i32_0 = arith.constant 0 : i32
    %c0_i32_1 = arith.constant 0 : i32
    return %c0_i32, %c0_i32_0 : i32, i32
  }
  func.func @transform_5(%arg0: i32) -> (i32, i32) {
    %c0_i32 = arith.constant 0 : i32
    %c0_i32_0 = arith.constant 0 : i32
    %c0_i32_1 = arith.constant 0 : i32
    return %c0_i32, %c0_i32_0 : i32, i32
  }
  func.func @transform_6(%arg0: i32) -> (i32, i32) {
    %c0_i32 = arith.constant 0 : i32
    %c0_i32_0 = arith.constant 0 : i32
    %c0_i32_1 = arith.constant 0 : i32
    return %c0_i32, %c0_i32_0 : i32, i32
  }
  func.func @transform_7(%arg0: i32) -> (i32, i32, i32) {
    %c0_i32 = arith.constant 0 : i32
    %c0_i32_0 = arith.constant 0 : i32
    %c0_i32_1 = arith.constant 0 : i32
    return %arg0, %c0_i32, %c0_i32_0 : i32, i32, i32
  }
}

</mosaic_0001>

<llo_original>
// kernel: residual_block_forward.5
$region0: #{residual_block_forward.5}
  #allocation0 [shape = 'u32[]', space=smem, size = 0x4, offset = 0x4, fixed_abs, tag = 'smem constant byte address 0x4 - core index']
  #allocation1 [shape = 'u32[144,128]{1,0:T(1,128)}', space=vmem, size = 0x12000, scoped, tag = 'internal scratch']
  %s0 = inlined_call_operand.vmem [shape: bf16[2,64,128], index: 0, kind: input, shape index: {}]
  %s1 = inlined_call_operand.vmem [shape: bf16[2,64,128], index: 1, kind: input, shape index: {}]
  %s2 = inlined_call_operand.vmem [shape: bf16[128,128], index: 2, kind: input, shape index: {}]
  %s3 = inlined_call_operand.vmem [shape: f32[1,128], index: 3, kind: input, shape index: {}]
  %s4 = inlined_call_operand.vmem [shape: f32[1,128], index: 4, kind: input, shape index: {}]
  %s5 = inlined_call_operand.vmem [shape: f32[1,128], index: 5, kind: input, shape index: {}]
  %s6 = inlined_call_operand.vmem [shape: f32[1,128], index: 6, kind: input, shape index: {}]
  %s7 = inlined_call_operand.vmem [shape: f32[2,64,128], index: 7, kind: output, shape index: {}]
  %s8 = sld [smem:[#allocation0]]
  $region61: #{residual_block_forward.5} parent=0
    _
  %s10 = ssub.s32 1, %s8
  %s11 = scalar_select 0, %s10, %s8
  loop: start=0, step=1, limit=4
  $region2: #{residual_block_forward.5} parent=0 // loop_pre_header
    _
  $region3: #{residual_block_forward.5} parent=0 // loop_header
    %s13 = sphi 0, %s17
    %p14 = scmp.ge.s32.totalorder %s13, 4
    %s23 = sphi 0, %s25
    %s26 = sphi 0, %s23
    %s27 = sphi 0, %s26
    %s43 = sphi 0, %s27
    %s49 = sphi 0, %s51
    %s52 = sphi 0, %s49
    %s53 = sphi 0, %s52
    %s69 = sphi 0, %s53
    %s73 = sphi 0, %s73
    %s75 = sphi 0, %s73
    %s76 = sphi 0, %s75
    %s90 = sphi 0, %s76
    %s94 = sphi 0, %s94
    %s96 = sphi 0, %s94
    %s97 = sphi 0, %s96
    %s111 = sphi 0, %s97
    %s115 = sphi 0, %s115
    %s117 = sphi 0, %s115
    %s118 = sphi 0, %s117
    %s132 = sphi 0, %s118
    %s136 = sphi 0, %s136
    %s138 = sphi 0, %s136
    %s139 = sphi 0, %s138
    %s153 = sphi 0, %s139
    %s157 = sphi 0, %s157
    %s159 = sphi 0, %s157
    %s160 = sphi 0, %s159
    %s174 = sphi 0, %s160
    %s180 = sphi 0, %s182
    %s183 = sphi 0, %s180
    %s184 = sphi 0, %s183
    %s200 = sphi 0, %s184
  $region4: #{residual_block_forward.5} parent=0 // loop_header_branch
    %16 = sbr.rel (%p14) target = $region8
  $region5: #{residual_block_forward.5} parent=0 // loop_body
    %s18 = ssub.s32 %s13, 1
    %s19 = ssub.s32 %s13, 2
    %s20 = sadd.s32 %s13, 1
    %s21 = ssub.s32 %s13, %s20
    %p22 = scmp.eq.s32.totalorder %s21, 0
    %s24 = sadd.s32 %s23, 1
    %s25 = scalar_select %p22, %s23, %s24
    %p28 = pneg %p22
    %p29 = scmp.eq.s32.totalorder %s13, 1
    %p30 = por %p28, %p29
    %p31 = scmp.ne.s32.totalorder %s23, %s26
    %p32 = scmp.eq.s32.totalorder %s13, 0
    %p33 = por %p31, %p32
    %p34 = scmp.ne.s32.totalorder %s23, %s26
    %p35 = scmp.eq.s32.totalorder %s18, 1
    %p36 = por %p34, %p35
    %p37 = scmp.ne.s32.totalorder %s26, %s27
    %p38 = scmp.eq.s32.totalorder %s18, 0
    %p39 = por %p37, %p38
    %p40 = scmp.ne.s32.totalorder %s26, %s27
    %p41 = scmp.eq.s32.totalorder %s19, 1
    %p42 = por %p40, %p41
    %p44 = scmp.ne.s32.totalorder %s27, %s43
    %p45 = scmp.eq.s32.totalorder %s19, 0
    %p46 = por %p44, %p45
    %s47 = ssub.s32 %s13, %s20
    %p48 = scmp.eq.s32.totalorder %s47, 0
    %s50 = sadd.s32 %s49, 1
    %s51 = scalar_select %p48, %s49, %s50
    %p54 = pneg %p48
    %p55 = scmp.eq.s32.totalorder %s13, 1
    %p56 = por %p54, %p55
    %p57 = scmp.ne.s32.totalorder %s49, %s52
    %p58 = scmp.eq.s32.totalorder %s13, 0
    %p59 = por %p57, %p58
    %p60 = scmp.ne.s32.totalorder %s49, %s52
    %p61 = scmp.eq.s32.totalorder %s18, 1
    %p62 = por %p60, %p61
    %p63 = scmp.ne.s32.totalorder %s52, %s53
    %p64 = scmp.eq.s32.totalorder %s18, 0
    %p65 = por %p63, %p64
    %p66 = scmp.ne.s32.totalorder %s52, %s53
    %p67 = scmp.eq.s32.totalorder %s19, 1
    %p68 = por %p66, %p67
    %p70 = scmp.ne.s32.totalorder %s53, %s69
    %p71 = scmp.eq.s32.totalorder %s19, 0
    %p72 = por %p70, %p71
    %s74 = sadd.s32 %s73, 1
    %p77 = scmp.eq.s32.totalorder %s13, 1
    %p78 = scmp.ne.s32.totalorder %s73, %s75
    %p79 = scmp.eq.s32.totalorder %s13, 0
    %p80 = por %p78, %p79
    %p81 = scmp.ne.s32.totalorder %s73, %s75
    %p82 = scmp.eq.s32.totalorder %s18, 1
    %p83 = por %p81, %p82
    %p84 = scmp.ne.s32.totalorder %s75, %s76
    %p85 = scmp.eq.s32.totalorder %s18, 0
    %p86 = por %p84, %p85
    %p87 = scmp.ne.s32.totalorder %s75, %s76
    %p88 = scmp.eq.s32.totalorder %s19, 1
    %p89 = por %p87, %p88
    %p91 = scmp.ne.s32.totalorder %s76, %s90
    %p92 = scmp.eq.s32.totalorder %s19, 0
    %p93 = por %p91, %p92
    %s95 = sadd.s32 %s94, 1
    %p98 = scmp.eq.s32.totalorder %s13, 1
    %p99 = scmp.ne.s32.totalorder %s94, %s96
    %p100 = scmp.eq.s32.totalorder %s13, 0
    %p101 = por %p99, %p100
    %p102 = scmp.ne.s32.totalorder %s94, %s96
    %p103 = scmp.eq.s32.totalorder %s18, 1
    %p104 = por %p102, %p103
    %p105 = scmp.ne.s32.totalorder %s96, %s97
    %p106 = scmp.eq.s32.totalorder %s18, 0
    %p107 = por %p105, %p106
    %p108 = scmp.ne.s32.totalorder %s96, %s97
    %p109 = scmp.eq.s32.totalorder %s19, 1
    %p110 = por %p108, %p109
    %p112 = scmp.ne.s32.totalorder %s97, %s111
    %p113 = scmp.eq.s32.totalorder %s19, 0
    %p114 = por %p112, %p113
    %s116 = sadd.s32 %s115, 1
    %p119 = scmp.eq.s32.totalorder %s13, 1
    %p120 = scmp.ne.s32.totalorder %s115, %s117
    %p121 = scmp.eq.s32.totalorder %s13, 0
    %p122 = por %p120, %p121
    %p123 = scmp.ne.s32.totalorder %s115, %s117
    %p124 = scmp.eq.s32.totalorder %s18, 1
    %p125 = por %p123, %p124
    %p126 = scmp.ne.s32.totalorder %s117, %s118
    %p127 = scmp.eq.s32.totalorder %s18, 0
    %p128 = por %p126, %p127
    %p129 = scmp.ne.s32.totalorder %s117, %s118
    %p130 = scmp.eq.s32.totalorder %s19, 1
    %p131 = por %p129, %p130
    %p133 = scmp.ne.s32.totalorder %s118, %s132
    %p134 = scmp.eq.s32.totalorder %s19, 0
    %p135 = por %p133, %p134
    %s137 = sadd.s32 %s136, 1
    %p140 = scmp.eq.s32.totalorder %s13, 1
    %p141 = scmp.ne.s32.totalorder %s136, %s138
    %p142 = scmp.eq.s32.totalorder %s13, 0
    %p143 = por %p141, %p142
    %p144 = scmp.ne.s32.totalorder %s136, %s138
    %p145 = scmp.eq.s32.totalorder %s18, 1
    %p146 = por %p144, %p145
    %p147 = scmp.ne.s32.totalorder %s138, %s139
    %p148 = scmp.eq.s32.totalorder %s18, 0
    %p149 = por %p147, %p148
    %p150 = scmp.ne.s32.totalorder %s138, %s139
    %p151 = scmp.eq.s32.totalorder %s19, 1
    %p152 = por %p150, %p151
    %p154 = scmp.ne.s32.totalorder %s139, %s153
    %p155 = scmp.eq.s32.totalorder %s19, 0
    %p156 = por %p154, %p155
    %s158 = sadd.s32 %s157, 1
    %p161 = scmp.eq.s32.totalorder %s13, 1
    %p162 = scmp.ne.s32.totalorder %s157, %s159
    %p163 = scmp.eq.s32.totalorder %s13, 0
    %p164 = por %p162, %p163
    %p165 = scmp.ne.s32.totalorder %s157, %s159
    %p166 = scmp.eq.s32.totalorder %s18, 1
    %p167 = por %p165, %p166
    %p168 = scmp.ne.s32.totalorder %s159, %s160
    %p169 = scmp.eq.s32.totalorder %s18, 0
    %p170 = por %p168, %p169
    %p171 = scmp.ne.s32.totalorder %s159, %s160
    %p172 = scmp.eq.s32.totalorder %s19, 1
    %p173 = por %p171, %p172
    %p175 = scmp.ne.s32.totalorder %s160, %s174
    %p176 = scmp.eq.s32.totalorder %s19, 0
    %p177 = por %p175, %p176
    %s178 = ssub.s32 %s13, %s20
    %p179 = scmp.eq.s32.totalorder %s178, 0
    %s181 = sadd.s32 %s180, 1
    %s182 = scalar_select %p179, %s180, %s181
    %p185 = pneg %p179
    %p186 = scmp.eq.s32.totalorder %s13, 1
    %p187 = por %p185, %p186
    %p188 = scmp.ne.s32.totalorder %s180, %s183
    %p189 = scmp.eq.s32.totalorder %s13, 0
    %p190 = por %p188, %p189
    %p191 = scmp.ne.s32.totalorder %s180, %s183
    %p192 = scmp.eq.s32.totalorder %s18, 1
    %p193 = por %p191, %p192
    %p194 = scmp.ne.s32.totalorder %s183, %s184
    %p195 = scmp.eq.s32.totalorder %s18, 0
    %p196 = por %p194, %p195
    %p197 = scmp.ne.s32.totalorder %s183, %s184
    %p198 = scmp.eq.s32.totalorder %s19, 1
    %p199 = por %p197, %p198
    %p201 = scmp.ne.s32.totalorder %s184, %s200
    %p202 = scmp.eq.s32.totalorder %s19, 0
    %p203 = por %p201, %p202
    %p204 = scmp.le.s32.totalorder 1, %s13
    %p205 = scmp.lt.s32.totalorder %s13, 3
    %p206 = pnand %p204, %p205
    %p207 = pneg %p206
    // Predicated region
    $region9: #{residual_block_forward.5} parent=5 // pred_check
      _
    $region10: #{residual_block_forward.5} parent=5 // pred_check_branch
      %209 = sbr.rel (%p206) target = $region12
    $region11: #{residual_block_forward.5} parent=5 // pred_region
      %s210 = ssub.s32 %s13, 1
      // Predicated region
      $region13: #{residual_block_forward.5} parent=11 // pred_check
        %p211 = pneg %p86
      $region14: #{residual_block_forward.5} parent=11 // pred_check_branch
        %213 = sbr.rel (%p211) target = $region16
      $region15: #{residual_block_forward.5} parent=11 // pred_region
        _
      $region16: #{residual_block_forward.5} parent=11 // pred_fallthru
        _
      // Predicated region
      $region17: #{residual_block_forward.5} parent=11 // pred_check
        %p214 = pneg %p107
      $region18: #{residual_block_forward.5} parent=11 // pred_check_branch
        %216 = sbr.rel (%p214) target = $region20
      $region19: #{residual_block_forward.5} parent=11 // pred_region
        _
      $region20: #{residual_block_forward.5} parent=11 // pred_fallthru
        _
      // Predicated region
      $region21: #{residual_block_forward.5} parent=11 // pred_check
        %p217 = pneg %p128
      $region22: #{residual_block_forward.5} parent=11 // pred_check_branch
        %219 = sbr.rel (%p217) target = $region24
      $region23: #{residual_block_forward.5} parent=11 // pred_region
        _
      $region24: #{residual_block_forward.5} parent=11 // pred_fallthru
        _
      // Predicated region
      $region25: #{residual_block_forward.5} parent=11 // pred_check
        %p220 = pneg %p149
      $region26: #{residual_block_forward.5} parent=11 // pred_check_branch
        %222 = sbr.rel (%p220) target = $region28
      $region27: #{residual_block_forward.5} parent=11 // pred_region
        _
      $region28: #{residual_block_forward.5} parent=11 // pred_fallthru
        _
      // Predicated region
      $region29: #{residual_block_forward.5} parent=11 // pred_check
        %p223 = pneg %p170
      $region30: #{residual_block_forward.5} parent=11 // pred_check_branch
        %225 = sbr.rel (%p223) target = $region32
      $region31: #{residual_block_forward.5} parent=11 // pred_region
        _
      $region32: #{residual_block_forward.5} parent=11 // pred_fallthru
        _
    $region12: #{residual_block_forward.5} parent=5 // pred_fallthru
      _
    %p226 = scmp.lt.s32.totalorder %s13, 2
    // Predicated region
    $region33: #{residual_block_forward.5} parent=5 // pred_check
      %p227 = pneg %p226
    $region34: #{residual_block_forward.5} parent=5 // pred_check_branch
      %229 = sbr.rel (%p227) target = $region36
    $region35: #{residual_block_forward.5} parent=5 // pred_region
      // Predicated region
      $region37: #{residual_block_forward.5} parent=35 // pred_check
        %p230 = pneg %p33
      $region38: #{residual_block_forward.5} parent=35 // pred_check_branch
        %232 = sbr.rel (%p230) target = $region40
      $region39: #{residual_block_forward.5} parent=35 // pred_region
        %p233 = scmp.lt.s32.totalorder %s13, 1
        %s234 = scalar_select %p233, %s13, 1
        %s235 = smul.addr %s234, 8
        %s236 = smul.addr %s235, 4
        %s237 = scalar_lea.vmem %s0, %s236
      $region40: #{residual_block_forward.5} parent=35 // pred_fallthru
        _
      // Predicated region
      $region41: #{residual_block_forward.5} parent=35 // pred_check
        %p238 = pneg %p59
      $region42: #{residual_block_forward.5} parent=35 // pred_check_branch
        %240 = sbr.rel (%p238) target = $region44
      $region43: #{residual_block_forward.5} parent=35 // pred_region
        %p241 = scmp.lt.s32.totalorder %s13, 1
        %s242 = scalar_select %p241, %s13, 1
        %s243 = smul.addr %s242, 8
        %s244 = smul.addr %s243, 4
        %s245 = scalar_lea.vmem %s1, %s244
      $region44: #{residual_block_forward.5} parent=35 // pred_fallthru
        _
    $region36: #{residual_block_forward.5} parent=5 // pred_fallthru
      _
    %p246 = scmp.le.s32.totalorder 1, %s13
    %p247 = scmp.lt.s32.totalorder %s13, 3
    %p248 = pnand %p246, %p247
    %p249 = pneg %p248
    // Predicated region
    $region45: #{residual_block_forward.5} parent=5 // pred_check
      _
    $region46: #{residual_block_forward.5} parent=5 // pred_check_branch
      %251 = sbr.rel (%p248) target = $region48
    $region47: #{residual_block_forward.5} parent=5 // pred_region
      %s252 = ssub.s32 %s13, 1
      %p253 = scmp.lt.s32.totalorder %s18, 1
      %s254 = scalar_select %p253, %s18, 1
      %s255 = smul.addr %s254, 8
      %s256 = smul.addr %s255, 4
      %s257 = scalar_lea.vmem %s0, %s256
      %p258 = pneg %p39
      %p259 = pneg %p36
      %p260 = scmp.lt.s32.totalorder %s18, 1
      %s261 = scalar_select %p260, %s18, 1
      %s262 = smul.addr %s261, 8
      %s263 = smul.addr %s262, 4
      %s264 = scalar_lea.vmem %s1, %s263
      %p265 = pneg %p65
      %p266 = pneg %p62
      %p267 = pneg %p86
      %p268 = pneg %p83
      %p269 = pneg %p107
      %p270 = pneg %p104
      %p271 = pneg %p128
      %p272 = pneg %p125
      %p273 = pneg %p149
      %p274 = pneg %p146
      %p275 = pneg %p170
      %p276 = pneg %p167
      %p277 = pneg %p196
      %p278 = pneg %p193
      %p279 = scmp.lt.s32.totalorder %s18, 1
      %s280 = scalar_select %p279, %s18, 1
      %s281 = smul.addr %s280, 8
      %s282 = smul.addr %s281, 8
      %s283 = scalar_lea.vmem %s7, %s282
      %p284 = scmp.lt.s32.totalorder %s18, 1
      %s285 = scalar_select %p284, %s18, 1
      %s286 = smul.addr %s285, 8
      %s287 = smul.addr %s286, 4
      %s288 = scalar_lea.vmem %s0, %s287
      %p289 = scmp.lt.s32.totalorder %s18, 1
      %s290 = scalar_select %p289, %s18, 1
      %s291 = smul.addr %s290, 8
      %s292 = smul.addr %s291, 4
      %s293 = scalar_lea.vmem %s1, %s292
      %p294 = scmp.lt.s32.totalorder %s18, 1
      %s295 = scalar_select %p294, %s18, 1
      %s296 = smul.addr %s295, 8
      %s297 = smul.addr %s296, 8
      %s298 = scalar_lea.vmem %s7, %s297
      %v300 = vld [vmem:[%s293] sm:$0xf]
      %v301 = vld [vmem:[%s293 + $0x4] sm:$0xf]
      %v302 = vld [vmem:[%s293 + $0x8] sm:$0xf]
      %v303 = vld [vmem:[%s293 + $0xc] sm:$0xf]
      %v304 = vld [vmem:[%s293 + $0x10] sm:$0xf]
      %v305 = vld [vmem:[%s293 + $0x14] sm:$0xf]
      %v306 = vld [vmem:[%s293 + $0x18] sm:$0xf]
      %v307 = vld [vmem:[%s293 + $0x1c] sm:$0xf]
      %v308 = vld [vmem:[%s2] sm:$0xf]
      %v309 = vld [vmem:[%s2 + $0x4] sm:$0xf]
      %v310 = vld [vmem:[%s2 + $0x8] sm:$0xf]
      %v311 = vld [vmem:[%s2 + $0xc] sm:$0xf]
      %v312 = vld [vmem:[%s2 + $0x10] sm:$0xf]
      %v313 = vld [vmem:[%s2 + $0x14] sm:$0xf]
      %v314 = vld [vmem:[%s2 + $0x18] sm:$0xf]
      %v315 = vld [vmem:[%s2 + $0x1c] sm:$0xf]
      %v316 = vld [vmem:[%s2 + $0x20] sm:$0xf]
      %v317 = vld [vmem:[%s2 + $0x24] sm:$0xf]
      %v318 = vld [vmem:[%s2 + $0x28] sm:$0xf]
      %v319 = vld [vmem:[%s2 + $0x2c] sm:$0xf]
      %v320 = vld [vmem:[%s2 + $0x30] sm:$0xf]
      %v321 = vld [vmem:[%s2 + $0x34] sm:$0xf]
      %v322 = vld [vmem:[%s2 + $0x38] sm:$0xf]
      %v323 = vld [vmem:[%s2 + $0x3c] sm:$0xf]
      %v332 = vunpack.c.l.b16 %v300
      %v333 = vunpack.c.l.b16 %v301
      %v334 = vunpack.c.l.b16 %v302
      %v335 = vunpack.c.l.b16 %v303
      %v336 = vunpack.c.l.b16 %v304
      %v337 = vunpack.c.l.b16 %v305
      %v338 = vunpack.c.l.b16 %v306
      %v339 = vunpack.c.l.b16 %v307
      %v340 = vpack.c.b16 %v333, %v332
      %v341 = vpack.c.b16 %v335, %v334
      %v342 = vpack.c.b16 %v337, %v336
      %v343 = vpack.c.b16 %v339, %v338
      %v364 = vunpack.c.l.b16 %v308
      %v365 = vunpack.c.l.b16 %v309
      %v366 = vunpack.c.l.b16 %v310
      %v367 = vunpack.c.l.b16 %v311
      %v368 = vunpack.c.l.b16 %v312
      %v369 = vunpack.c.l.b16 %v313
      %v370 = vunpack.c.l.b16 %v314
      %v371 = vunpack.c.l.b16 %v315
      %v372 = vunpack.c.l.b16 %v316
      %v373 = vunpack.c.l.b16 %v317
      %v374 = vunpack.c.l.b16 %v318
      %v375 = vunpack.c.l.b16 %v319
      %v376 = vunpack.c.l.b16 %v320
      %v377 = vunpack.c.l.b16 %v321
      %v378 = vunpack.c.l.b16 %v322
      %v379 = vunpack.c.l.b16 %v323
      %v380 = vpack.c.b16 %v365, %v364
      %v381 = vpack.c.b16 %v367, %v366
      %v382 = vpack.c.b16 %v369, %v368
      %v383 = vpack.c.b16 %v371, %v370
      %v384 = vpack.c.b16 %v373, %v372
      %v385 = vpack.c.b16 %v375, %v374
      %v386 = vpack.c.b16 %v377, %v376
      %v387 = vpack.c.b16 %v379, %v378
      %396 = vmatprep.subr.bf16.mxu0 0
      %397 = vmatpush1.bf16.msra.mxu0 %v387
      %398 = vmatprep.subr.bf16.mxu0 0
      %399 = vmatpush1.bf16.msra.mxu0 %v386
      %400 = vmatprep.subr.bf16.mxu0 0
      %401 = vmatpush1.bf16.msra.mxu0 %v385
      %402 = vmatprep.subr.bf16.mxu0 0
      %403 = vmatpush1.bf16.msra.mxu0 %v384
      %404 = vmatprep.subr.bf16.mxu0 0
      %405 = vmatpush1.bf16.msra.mxu0 %v383
      %406 = vmatprep.subr.bf16.mxu0 0
      %407 = vmatpush1.bf16.msra.mxu0 %v382
      %408 = vmatprep.subr.bf16.mxu0 0
      %409 = vmatpush1.bf16.msra.mxu0 %v381
      %410 = vmatprep.subr.bf16.mxu0 0
      %411 = vmatpush1.bf16.msra.mxu0 %v380
      %412 = vmatprep.subr.bf16.mxu0 0
      %413 = vmatpush2.bf16.msra.mxu0 0
      %414 = vmatprep.subr.bf16.mxu0 0
      %415 = vmatpush2.bf16.msra.mxu0 0
      %416 = vmatprep.subr.bf16.mxu0 0
      %417 = vmatpush2.bf16.msra.mxu0 0
      %418 = vmatprep.subr.bf16.mxu0 0
      %419 = vmatpush2.bf16.msra.mxu0 0
      %420 = vmatprep.subr.bf16.mxu0 0
      %421 = vmatpush2.bf16.msra.mxu0 0
      %422 = vmatprep.subr.bf16.mxu0 0
      %423 = vmatpush2.bf16.msra.mxu0 0
      %424 = vmatprep.subr.bf16.mxu0 0
      %425 = vmatpush2.bf16.msra.mxu0 0
      %426 = vmatprep.subr.bf16.mxu0 0
      %427 = vmatpush2.bf16.msra.mxu0 0
      %428 = vmatprep.mubr.bf16.mxu0 0
      %429 = vmatmul.mubr.bf16.gmra.mxu0 %v340
      %v430 = vpop.f32.mrf.mxu0
      %v431 = vadd.f32 0.0, %v430
      %v432 = vpop.f32.mrf.mxu0
      %v433 = vpop.f32.mrf.mxu0
      %v434 = vadd.f32 0.0, %v433
      %v435 = vpop.f32.mrf.mxu0
      %436 = vmatprep.mubr.bf16.mxu0 0
      %437 = vmatmul.mubr.bf16.gmra.mxu0 %v341
      %v438 = vpop.f32.mrf.mxu0
      %v439 = vadd.f32 0.0, %v438
      %v440 = vpop.f32.mrf.mxu0
      %v441 = vpop.f32.mrf.mxu0
      %v442 = vadd.f32 0.0, %v441
      %v443 = vpop.f32.mrf.mxu0
      %444 = vmatprep.mubr.bf16.mxu0 0
      %445 = vmatmul.mubr.bf16.gmra.mxu0 %v342
      %v446 = vpop.f32.mrf.mxu0
      %v447 = vadd.f32 0.0, %v446
      %v448 = vpop.f32.mrf.mxu0
      %v449 = vpop.f32.mrf.mxu0
      %v450 = vadd.f32 0.0, %v449
      %v451 = vpop.f32.mrf.mxu0
      %452 = vmatprep.mubr.bf16.mxu0 0
      %453 = vmatmul.mubr.bf16.gmra.mxu0 %v343
      %v454 = vpop.f32.mrf.mxu0
      %v455 = vadd.f32 0.0, %v454
      %v456 = vpop.f32.mrf.mxu0
      %v457 = vpop.f32.mrf.mxu0
      %v458 = vadd.f32 0.0, %v457
      %v459 = vpop.f32.mrf.mxu0
      %460 = vdwg.mxu0
      %v461 = vld [vmem:[%s288] sm:$0xf]
      %v462 = vld [vmem:[%s288 + $0x4] sm:$0xf]
      %v463 = vld [vmem:[%s288 + $0x8] sm:$0xf]
      %v464 = vld [vmem:[%s288 + $0xc] sm:$0xf]
      %v465 = vld [vmem:[%s288 + $0x10] sm:$0xf]
      %v466 = vld [vmem:[%s288 + $0x14] sm:$0xf]
      %v467 = vld [vmem:[%s288 + $0x18] sm:$0xf]
      %v468 = vld [vmem:[%s288 + $0x1c] sm:$0xf]
      %v469 = vunpack.c.l.bf16 %v461
      %v470 = vunpack.c.l.bf16 %v462
      %v471 = vunpack.c.l.bf16 %v463
      %v472 = vunpack.c.l.bf16 %v464
      %v473 = vunpack.c.l.bf16 %v465
      %v474 = vunpack.c.l.bf16 %v466
      %v475 = vunpack.c.l.bf16 %v467
      %v476 = vunpack.c.l.bf16 %v468
      %v477 = vld [vmem:[%s3] sm:$0x1]
      %v479 = vlaneseq
      %v480 = vshrl.u32 %v479, 7
      %v481 = vsub.s32 0, %v480
      %v482 = vrot.slane %v477, %v481
      %v484 = vmul.f32 %v469, %v482
      %v485 = vmul.f32 %v470, %v482
      %v486 = vmul.f32 %v471, %v482
      %v487 = vmul.f32 %v472, %v482
      %v488 = vmul.f32 %v473, %v482
      %v489 = vmul.f32 %v474, %v482
      %v490 = vmul.f32 %v475, %v482
      %v491 = vmul.f32 %v476, %v482
      %v492 = vld [vmem:[%s4] sm:$0x1]
      %v494 = vlaneseq
      %v495 = vshrl.u32 %v494, 7
      %v496 = vsub.s32 0, %v495
      %v497 = vrot.slane %v492, %v496
      %v499 = vadd.f32 %v484, %v497
      %v500 = vadd.f32 %v485, %v497
      %v501 = vadd.f32 %v486, %v497
      %v502 = vadd.f32 %v487, %v497
      %v503 = vadd.f32 %v488, %v497
      %v504 = vadd.f32 %v489, %v497
      %v505 = vadd.f32 %v490, %v497
      %v506 = vadd.f32 %v491, %v497
      %v507 = vld [vmem:[%s5] sm:$0x1]
      %v509 = vlaneseq
      %v510 = vshrl.u32 %v509, 7
      %v511 = vsub.s32 0, %v510
      %v512 = vrot.slane %v507, %v511
      %v514 = vmul.f32 %v431, %v512
      %v515 = vmul.f32 %v434, %v512
      %v516 = vmul.f32 %v439, %v512
      %v517 = vmul.f32 %v442, %v512
      %v518 = vmul.f32 %v447, %v512
      %v519 = vmul.f32 %v450, %v512
      %v520 = vmul.f32 %v455, %v512
      %v521 = vmul.f32 %v458, %v512
      %v522 = vld [vmem:[%s6] sm:$0x1]
      %v524 = vlaneseq
      %v525 = vshrl.u32 %v524, 7
      %v526 = vsub.s32 0, %v525
      %v527 = vrot.slane %v522, %v526
      %v529 = vadd.f32 %v514, %v527
      %v530 = vadd.f32 %v515, %v527
      %v531 = vadd.f32 %v516, %v527
      %v532 = vadd.f32 %v517, %v527
      %v533 = vadd.f32 %v518, %v527
      %v534 = vadd.f32 %v519, %v527
      %v535 = vadd.f32 %v520, %v527
      %v536 = vadd.f32 %v521, %v527
      %v537 = vadd.f32 %v499, %v529
      %v538 = vadd.f32 %v500, %v530
      %v539 = vadd.f32 %v501, %v531
      %v540 = vadd.f32 %v502, %v532
      %v541 = vadd.f32 %v503, %v533
      %v542 = vadd.f32 %v504, %v534
      %v543 = vadd.f32 %v505, %v535
      %v544 = vadd.f32 %v506, %v536
      %v545 = vmax.f32 %v537, 0.0
      %v546 = vmax.f32 %v538, 0.0
      %v547 = vmax.f32 %v539, 0.0
      %v548 = vmax.f32 %v540, 0.0
      %v549 = vmax.f32 %v541, 0.0
      %v550 = vmax.f32 %v542, 0.0
      %v551 = vmax.f32 %v543, 0.0
      %v552 = vmax.f32 %v544, 0.0
      %553 = vst [vmem:[%s298] sm:$0xff] %v545
      %554 = vst [vmem:[%s298 + $0x8] sm:$0xff] %v546
      %555 = vst [vmem:[%s298 + $0x10] sm:$0xff] %v547
      %556 = vst [vmem:[%s298 + $0x18] sm:$0xff] %v548
      %557 = vst [vmem:[%s298 + $0x20] sm:$0xff] %v549
      %558 = vst [vmem:[%s298 + $0x28] sm:$0xff] %v550
      %559 = vst [vmem:[%s298 + $0x30] sm:$0xff] %v551
      %560 = vst [vmem:[%s298 + $0x38] sm:$0xff] %v552
      %p561 = scmp.lt.s32.totalorder %s18, 1
      %s562 = scalar_select %p561, %s18, 1
      %s563 = smul.addr %s562, 8
      %s564 = smul.addr %s563, 8
      %s565 = scalar_lea.vmem %s7, %s564
      // Predicated region
      $region49: #{residual_block_forward.5} parent=47 // pred_check
        %p566 = pneg %p193
      $region50: #{residual_block_forward.5} parent=47 // pred_check_branch
        %568 = sbr.rel (%p566) target = $region52
      $region51: #{residual_block_forward.5} parent=47 // pred_region
        _
      $region52: #{residual_block_forward.5} parent=47 // pred_fallthru
        _
    $region48: #{residual_block_forward.5} parent=5 // pred_fallthru
      _
    %p569 = scmp.le.s32.totalorder 2, %s13
    // Predicated region
    $region53: #{residual_block_forward.5} parent=5 // pred_check
      %p570 = pneg %p569
    $region54: #{residual_block_forward.5} parent=5 // pred_check_branch
      %572 = sbr.rel (%p570) target = $region56
    $region55: #{residual_block_forward.5} parent=5 // pred_region
      %s573 = ssub.s32 %s13, 2
      // Predicated region
      $region57: #{residual_block_forward.5} parent=55 // pred_check
        %p574 = pneg %p199
      $region58: #{residual_block_forward.5} parent=55 // pred_check_branch
        %576 = sbr.rel (%p574) target = $region60
      $region59: #{residual_block_forward.5} parent=55 // pred_region
        %p577 = scmp.lt.s32.totalorder %s19, 1
        %s578 = scalar_select %p577, %s19, 1
        %s579 = smul.addr %s578, 8
        %s580 = smul.addr %s579, 8
        %s581 = scalar_lea.vmem %s7, %s580
      $region60: #{residual_block_forward.5} parent=55 // pred_fallthru
        _
    $region56: #{residual_block_forward.5} parent=5 // pred_fallthru
      _
  $region6: #{residual_block_forward.5} parent=0 // loop_footer
    %s17 = sadd.s32 1, %s13
  $region7: #{residual_block_forward.5} parent=0 // loop_footer_branch
    %12 = sbr.rel target = $region3
  $region8: #{residual_block_forward.5} parent=0 // loop_exit
    _

// kernel: residual_block_forward.3
$region0: #{residual_block_forward.3}
  #allocation0 [shape = 'u32[]', space=smem, size = 0x4, offset = 0x4, fixed_abs, tag = 'smem constant byte address 0x4 - core index']
  #allocation1 [shape = 'u32[144,128]{1,0:T(1,128)}', space=vmem, size = 0x12000, scoped, tag = 'internal scratch']
  %s0 = inlined_call_operand.vmem [shape: bf16[2,9,9,128], index: 0, kind: input, shape index: {}]
  %s1 = inlined_call_operand.vmem [shape: bf16[4,128,128], index: 1, kind: input, shape index: {}]
  %s2 = inlined_call_operand.vmem [shape: bf16[2,64,128], index: 2, kind: output, shape index: {0}]
  %s3 = inlined_call_operand.vmem [shape: f32[2,1,128], index: 3, kind: output, shape index: {1}]
  %s4 = inlined_call_operand.vmem [shape: f32[2,1,128], index: 4, kind: output, shape index: {2}]
  %5 = xla_tuple %s2, %s3, %s4
  %s6 = sld [smem:[#allocation0]]
  $region57: #{residual_block_forward.3} parent=0
    _
  %s8 = ssub.s32 1, %s6
  %s9 = scalar_select 0, %s8, %s6
  loop: start=0, step=1, limit=4
  $region2: #{residual_block_forward.3} parent=0 // loop_pre_header
    _
  $region3: #{residual_block_forward.3} parent=0 // loop_header
    %s11 = sphi 0, %s15
    %p12 = scmp.ge.s32.totalorder %s11, 4
    %s21 = sphi 0, %s23
    %s24 = sphi 0, %s21
    %s25 = sphi 0, %s24
    %s41 = sphi 0, %s25
    %s45 = sphi 0, %s45
    %s47 = sphi 0, %s45
    %s48 = sphi 0, %s47
    %s62 = sphi 0, %s48
    %s68 = sphi 0, %s70
    %s71 = sphi 0, %s68
    %s72 = sphi 0, %s71
    %s88 = sphi 0, %s72
    %s94 = sphi 0, %s96
    %s97 = sphi 0, %s94
    %s98 = sphi 0, %s97
    %s114 = sphi 0, %s98
    %s120 = sphi 0, %s122
    %s123 = sphi 0, %s120
    %s124 = sphi 0, %s123
    %s140 = sphi 0, %s124
  $region4: #{residual_block_forward.3} parent=0 // loop_header_branch
    %14 = sbr.rel (%p12) target = $region8
  $region5: #{residual_block_forward.3} parent=0 // loop_body
    %s16 = ssub.s32 %s11, 1
    %s17 = ssub.s32 %s11, 2
    %s18 = sadd.s32 %s11, 1
    %s19 = ssub.s32 %s11, %s18
    %p20 = scmp.eq.s32.totalorder %s19, 0
    %s22 = sadd.s32 %s21, 1
    %s23 = scalar_select %p20, %s21, %s22
    %p26 = pneg %p20
    %p27 = scmp.eq.s32.totalorder %s11, 1
    %p28 = por %p26, %p27
    %p29 = scmp.ne.s32.totalorder %s21, %s24
    %p30 = scmp.eq.s32.totalorder %s11, 0
    %p31 = por %p29, %p30
    %p32 = scmp.ne.s32.totalorder %s21, %s24
    %p33 = scmp.eq.s32.totalorder %s16, 1
    %p34 = por %p32, %p33
    %p35 = scmp.ne.s32.totalorder %s24, %s25
    %p36 = scmp.eq.s32.totalorder %s16, 0
    %p37 = por %p35, %p36
    %p38 = scmp.ne.s32.totalorder %s24, %s25
    %p39 = scmp.eq.s32.totalorder %s17, 1
    %p40 = por %p38, %p39
    %p42 = scmp.ne.s32.totalorder %s25, %s41
    %p43 = scmp.eq.s32.totalorder %s17, 0
    %p44 = por %p42, %p43
    %s46 = sadd.s32 %s45, 1
    %p49 = scmp.eq.s32.totalorder %s11, 1
    %p50 = scmp.ne.s32.totalorder %s45, %s47
    %p51 = scmp.eq.s32.totalorder %s11, 0
    %p52 = por %p50, %p51
    %p53 = scmp.ne.s32.totalorder %s45, %s47
    %p54 = scmp.eq.s32.totalorder %s16, 1
    %p55 = por %p53, %p54
    %p56 = scmp.ne.s32.totalorder %s47, %s48
    %p57 = scmp.eq.s32.totalorder %s16, 0
    %p58 = por %p56, %p57
    %p59 = scmp.ne.s32.totalorder %s47, %s48
    %p60 = scmp.eq.s32.totalorder %s17, 1
    %p61 = por %p59, %p60
    %p63 = scmp.ne.s32.totalorder %s48, %s62
    %p64 = scmp.eq.s32.totalorder %s17, 0
    %p65 = por %p63, %p64
    %s66 = ssub.s32 %s11, %s18
    %p67 = scmp.eq.s32.totalorder %s66, 0
    %s69 = sadd.s32 %s68, 1
    %s70 = scalar_select %p67, %s68, %s69
    %p73 = pneg %p67
    %p74 = scmp.eq.s32.totalorder %s11, 1
    %p75 = por %p73, %p74
    %p76 = scmp.ne.s32.totalorder %s68, %s71
    %p77 = scmp.eq.s32.totalorder %s11, 0
    %p78 = por %p76, %p77
    %p79 = scmp.ne.s32.totalorder %s68, %s71
    %p80 = scmp.eq.s32.totalorder %s16, 1
    %p81 = por %p79, %p80
    %p82 = scmp.ne.s32.totalorder %s71, %s72
    %p83 = scmp.eq.s32.totalorder %s16, 0
    %p84 = por %p82, %p83
    %p85 = scmp.ne.s32.totalorder %s71, %s72
    %p86 = scmp.eq.s32.totalorder %s17, 1
    %p87 = por %p85, %p86
    %p89 = scmp.ne.s32.totalorder %s72, %s88
    %p90 = scmp.eq.s32.totalorder %s17, 0
    %p91 = por %p89, %p90
    %s92 = ssub.s32 %s11, %s18
    %p93 = scmp.eq.s32.totalorder %s92, 0
    %s95 = sadd.s32 %s94, 1
    %s96 = scalar_select %p93, %s94, %s95
    %p99 = pneg %p93
    %p100 = scmp.eq.s32.totalorder %s11, 1
    %p101 = por %p99, %p100
    %p102 = scmp.ne.s32.totalorder %s94, %s97
    %p103 = scmp.eq.s32.totalorder %s11, 0
    %p104 = por %p102, %p103
    %p105 = scmp.ne.s32.totalorder %s94, %s97
    %p106 = scmp.eq.s32.totalorder %s16, 1
    %p107 = por %p105, %p106
    %p108 = scmp.ne.s32.totalorder %s97, %s98
    %p109 = scmp.eq.s32.totalorder %s16, 0
    %p110 = por %p108, %p109
    %p111 = scmp.ne.s32.totalorder %s97, %s98
    %p112 = scmp.eq.s32.totalorder %s17, 1
    %p113 = por %p111, %p112
    %p115 = scmp.ne.s32.totalorder %s98, %s114
    %p116 = scmp.eq.s32.totalorder %s17, 0
    %p117 = por %p115, %p116
    %s118 = ssub.s32 %s11, %s18
    %p119 = scmp.eq.s32.totalorder %s118, 0
    %s121 = sadd.s32 %s120, 1
    %s122 = scalar_select %p119, %s120, %s121
    %p125 = pneg %p119
    %p126 = scmp.eq.s32.totalorder %s11, 1
    %p127 = por %p125, %p126
    %p128 = scmp.ne.s32.totalorder %s120, %s123
    %p129 = scmp.eq.s32.totalorder %s11, 0
    %p130 = por %p128, %p129
    %p131 = scmp.ne.s32.totalorder %s120, %s123
    %p132 = scmp.eq.s32.totalorder %s16, 1
    %p133 = por %p131, %p132
    %p134 = scmp.ne.s32.totalorder %s123, %s124
    %p135 = scmp.eq.s32.totalorder %s16, 0
    %p136 = por %p134, %p135
    %p137 = scmp.ne.s32.totalorder %s123, %s124
    %p138 = scmp.eq.s32.totalorder %s17, 1
    %p139 = por %p137, %p138
    %p141 = scmp.ne.s32.totalorder %s124, %s140
    %p142 = scmp.eq.s32.totalorder %s17, 0
    %p143 = por %p141, %p142
    %p144 = scmp.le.s32.totalorder 1, %s11
    %p145 = scmp.lt.s32.totalorder %s11, 3
    %p146 = pnand %p144, %p145
    %p147 = pneg %p146
    // Predicated region
    $region9: #{residual_block_forward.3} parent=5 // pred_check
      _
    $region10: #{residual_block_forward.3} parent=5 // pred_check_branch
      %149 = sbr.rel (%p146) target = $region12
    $region11: #{residual_block_forward.3} parent=5 // pred_region
      %s150 = ssub.s32 %s11, 1
      // Predicated region
      $region13: #{residual_block_forward.3} parent=11 // pred_check
        %p151 = pneg %p58
      $region14: #{residual_block_forward.3} parent=11 // pred_check_branch
        %153 = sbr.rel (%p151) target = $region16
      $region15: #{residual_block_forward.3} parent=11 // pred_region
        _
      $region16: #{residual_block_forward.3} parent=11 // pred_fallthru
        _
    $region12: #{residual_block_forward.3} parent=5 // pred_fallthru
      _
    %p154 = scmp.lt.s32.totalorder %s11, 2
    // Predicated region
    $region17: #{residual_block_forward.3} parent=5 // pred_check
      %p155 = pneg %p154
    $region18: #{residual_block_forward.3} parent=5 // pred_check_branch
      %157 = sbr.rel (%p155) target = $region20
    $region19: #{residual_block_forward.3} parent=5 // pred_region
      // Predicated region
      $region21: #{residual_block_forward.3} parent=19 // pred_check
        %p158 = pneg %p31
      $region22: #{residual_block_forward.3} parent=19 // pred_check_branch
        %160 = sbr.rel (%p158) target = $region24
      $region23: #{residual_block_forward.3} parent=19 // pred_region
        %p161 = scmp.lt.s32.totalorder %s11, 1
        %s162 = scalar_select %p161, %s11, 1
        %s163 = smul.addr %s162, 18
        %s164 = smul.addr %s163, 4
        %s165 = scalar_lea.vmem %s0, %s164
      $region24: #{residual_block_forward.3} parent=19 // pred_fallthru
        _
    $region20: #{residual_block_forward.3} parent=5 // pred_fallthru
      _
    %p166 = scmp.le.s32.totalorder 1, %s11
    %p167 = scmp.lt.s32.totalorder %s11, 3
    %p168 = pnand %p166, %p167
    %p169 = pneg %p168
    // Predicated region
    $region25: #{residual_block_forward.3} parent=5 // pred_check
      _
    $region26: #{residual_block_forward.3} parent=5 // pred_check_branch
      %171 = sbr.rel (%p168) target = $region28
    $region27: #{residual_block_forward.3} parent=5 // pred_region
      %s172 = ssub.s32 %s11, 1
      %p173 = scmp.lt.s32.totalorder %s16, 1
      %s174 = scalar_select %p173, %s16, 1
      %s175 = smul.addr %s174, 18
      %s176 = smul.addr %s175, 4
      %s177 = scalar_lea.vmem %s0, %s176
      %p178 = pneg %p37
      %p179 = pneg %p34
      %p180 = pneg %p58
      %p181 = pneg %p55
      %p182 = pneg %p84
      %p183 = pneg %p81
      %p184 = scmp.lt.s32.totalorder %s16, 1
      %s185 = scalar_select %p184, %s16, 1
      %s186 = smul.addr %s185, 8
      %s187 = smul.addr %s186, 4
      %s188 = scalar_lea.vmem %s2, %s187
      %p189 = pneg %p110
      %p190 = pneg %p107
      %p191 = scmp.lt.s32.totalorder %s16, 1
      %s192 = scalar_select %p191, %s16, 1
      %s193 = scalar_lea.vmem %s3, %s192
      %p194 = pneg %p136
      %p195 = pneg %p133
      %p196 = scmp.lt.s32.totalorder %s16, 1
      %s197 = scalar_select %p196, %s16, 1
      %s198 = scalar_lea.vmem %s4, %s197
      %p199 = scmp.lt.s32.totalorder %s16, 1
      %s200 = scalar_select %p199, %s16, 1
      %s201 = smul.addr %s200, 18
      %s202 = smul.addr %s201, 4
      %s203 = scalar_lea.vmem %s0, %s202
      %p204 = scmp.lt.s32.totalorder %s16, 1
      %s205 = scalar_select %p204, %s16, 1
      %s206 = smul.addr %s205, 8
      %s207 = smul.addr %s206, 4
      %s208 = scalar_lea.vmem %s2, %s207
      %p209 = scmp.lt.s32.totalorder %s16, 1
      %s210 = scalar_select %p209, %s16, 1
      %s211 = scalar_lea.vmem %s3, %s210
      %p212 = scmp.lt.s32.totalorder %s16, 1
      %s213 = scalar_select %p212, %s16, 1
      %s214 = scalar_lea.vmem %s4, %s213
      %v216 = vld [vmem:[%s203] sm:$0xf]
      %v217 = vld [vmem:[%s203 + $0x8] sm:$0xf]
      %v218 = vld [vmem:[%s203 + $0x10] sm:$0xf]
      %v219 = vld [vmem:[%s203 + $0x18] sm:$0xf]
      %v220 = vld [vmem:[%s203 + $0x20] sm:$0xf]
      %v221 = vld [vmem:[%s203 + $0x28] sm:$0xf]
      %v222 = vld [vmem:[%s203 + $0x30] sm:$0xf]
      %v223 = vld [vmem:[%s203 + $0x38] sm:$0xf]
      %v224 = vunpack.c.l.bf16 %v216
      %v225 = vunpack.c.l.bf16 %v217
      %v226 = vunpack.c.l.bf16 %v218
      %v227 = vunpack.c.l.bf16 %v219
      %v228 = vunpack.c.l.bf16 %v220
      %v229 = vunpack.c.l.bf16 %v221
      %v230 = vunpack.c.l.bf16 %v222
      %v231 = vunpack.c.l.bf16 %v223
      %v232 = vpack.c.bf16 %v225, %v224
      %v233 = vpack.c.bf16 %v227, %v226
      %v234 = vpack.c.bf16 %v229, %v228
      %v235 = vpack.c.bf16 %v231, %v230
      %v236 = vld [vmem:[%s1] sm:$0xf]
      %v237 = vld [vmem:[%s1 + $0x4] sm:$0xf]
      %v238 = vld [vmem:[%s1 + $0x8] sm:$0xf]
      %v239 = vld [vmem:[%s1 + $0xc] sm:$0xf]
      %v240 = vld [vmem:[%s1 + $0x10] sm:$0xf]
      %v241 = vld [vmem:[%s1 + $0x14] sm:$0xf]
      %v242 = vld [vmem:[%s1 + $0x18] sm:$0xf]
      %v243 = vld [vmem:[%s1 + $0x1c] sm:$0xf]
      %v244 = vld [vmem:[%s1 + $0x20] sm:$0xf]
      %v245 = vld [vmem:[%s1 + $0x24] sm:$0xf]
      %v246 = vld [vmem:[%s1 + $0x28] sm:$0xf]
      %v247 = vld [vmem:[%s1 + $0x2c] sm:$0xf]
      %v248 = vld [vmem:[%s1 + $0x30] sm:$0xf]
      %v249 = vld [vmem:[%s1 + $0x34] sm:$0xf]
      %v250 = vld [vmem:[%s1 + $0x38] sm:$0xf]
      %v251 = vld [vmem:[%s1 + $0x3c] sm:$0xf]
      %v252 = vld [vmem:[%s203 + $0x4] sm:$0x1]
      %v253 = vld [vmem:[%s203 + $0xc] sm:$0x1]
      %v254 = vld [vmem:[%s203 + $0x14] sm:$0x1]
      %v255 = vld [vmem:[%s203 + $0x1c] sm:$0x1]
      %v256 = vld [vmem:[%s203 + $0x24] sm:$0x1]
      %v257 = vld [vmem:[%s203 + $0x2c] sm:$0x1]
      %v258 = vld [vmem:[%s203 + $0x34] sm:$0x1]
      %v259 = vld [vmem:[%s203 + $0x3c] sm:$0x1]
      %v260 = vunpack.c.l.bf16 %v252
      %v261 = vunpack.c.l.bf16 %v253
      %v262 = vunpack.c.l.bf16 %v254
      %v263 = vunpack.c.l.bf16 %v255
      %v264 = vunpack.c.l.bf16 %v256
      %v265 = vunpack.c.l.bf16 %v257
      %v266 = vunpack.c.l.bf16 %v258
      %v267 = vunpack.c.l.bf16 %v259
      %vm284 = vcmask 1046528
      %v285 = vrot.slane %v224, 1
      %v286 = vrot.slane %v260, 1
      %v287 = vsel %vm284, %v285, %v286
      %v288 = vrot.slane %v225, 1
      %v289 = vrot.slane %v261, 1
      %v290 = vsel %vm284, %v288, %v289
      %v291 = vrot.slane %v226, 1
      %v292 = vrot.slane %v262, 1
      %v293 = vsel %vm284, %v291, %v292
      %v294 = vrot.slane %v227, 1
      %v295 = vrot.slane %v263, 1
      %v296 = vsel %vm284, %v294, %v295
      %v297 = vrot.slane %v228, 1
      %v298 = vrot.slane %v264, 1
      %v299 = vsel %vm284, %v297, %v298
      %v300 = vrot.slane %v229, 1
      %v301 = vrot.slane %v265, 1
      %v302 = vsel %vm284, %v300, %v301
      %v303 = vrot.slane %v230, 1
      %v304 = vrot.slane %v266, 1
      %v305 = vsel %vm284, %v303, %v304
      %v306 = vrot.slane %v231, 1
      %v307 = vrot.slane %v267, 1
      %v308 = vsel %vm284, %v306, %v307
      %v317 = vpack.c.bf16 %v290, %v287
      %v318 = vpack.c.bf16 %v296, %v293
      %v319 = vpack.c.bf16 %v302, %v299
      %v320 = vpack.c.bf16 %v308, %v305
      %s321 = scalar_lea.vmem %s1, 64
      %v322 = vld [vmem:[%s321] sm:$0xf]
      %v323 = vld [vmem:[%s321 + $0x4] sm:$0xf]
      %v324 = vld [vmem:[%s321 + $0x8] sm:$0xf]
      %v325 = vld [vmem:[%s321 + $0xc] sm:$0xf]
      %v326 = vld [vmem:[%s321 + $0x10] sm:$0xf]
      %v327 = vld [vmem:[%s321 + $0x14] sm:$0xf]
      %v328 = vld [vmem:[%s321 + $0x18] sm:$0xf]
      %v329 = vld [vmem:[%s321 + $0x1c] sm:$0xf]
      %v330 = vld [vmem:[%s321 + $0x20] sm:$0xf]
      %v331 = vld [vmem:[%s321 + $0x24] sm:$0xf]
      %v332 = vld [vmem:[%s321 + $0x28] sm:$0xf]
      %v333 = vld [vmem:[%s321 + $0x2c] sm:$0xf]
      %v334 = vld [vmem:[%s321 + $0x30] sm:$0xf]
      %v335 = vld [vmem:[%s321 + $0x34] sm:$0xf]
      %v336 = vld [vmem:[%s321 + $0x38] sm:$0xf]
      %v337 = vld [vmem:[%s321 + $0x3c] sm:$0xf]
      %v354 = vunpack.c.l.b16 %v322
      %v355 = vunpack.c.l.b16 %v323
      %v356 = vunpack.c.l.b16 %v324
      %v357 = vunpack.c.l.b16 %v325
      %v358 = vunpack.c.l.b16 %v326
      %v359 = vunpack.c.l.b16 %v327
      %v360 = vunpack.c.l.b16 %v328
      %v361 = vunpack.c.l.b16 %v329
      %v362 = vunpack.c.l.b16 %v330
      %v363 = vunpack.c.l.b16 %v331
      %v364 = vunpack.c.l.b16 %v332
      %v365 = vunpack.c.l.b16 %v333
      %v366 = vunpack.c.l.b16 %v334
      %v367 = vunpack.c.l.b16 %v335
      %v368 = vunpack.c.l.b16 %v336
      %v369 = vunpack.c.l.b16 %v337
      %v370 = vpack.c.b16 %v355, %v354
      %v371 = vpack.c.b16 %v357, %v356
      %v372 = vpack.c.b16 %v359, %v358
      %v373 = vpack.c.b16 %v361, %v360
      %v374 = vpack.c.b16 %v363, %v362
      %v375 = vpack.c.b16 %v365, %v364
      %v376 = vpack.c.b16 %v367, %v366
      %v377 = vpack.c.b16 %v369, %v368
      %386 = vmatprep.subr.bf16.mxu0 0
      %387 = vmatpush1.bf16.msra.mxu0 %v377
      %388 = vmatprep.subr.bf16.mxu0 0
      %389 = vmatpush1.bf16.msra.mxu0 %v376
      %390 = vmatprep.subr.bf16.mxu0 0
      %391 = vmatpush1.bf16.msra.mxu0 %v375
      %392 = vmatprep.subr.bf16.mxu0 0
      %393 = vmatpush1.bf16.msra.mxu0 %v374
      %394 = vmatprep.subr.bf16.mxu0 0
      %395 = vmatpush1.bf16.msra.mxu0 %v373
      %396 = vmatprep.subr.bf16.mxu0 0
      %397 = vmatpush1.bf16.msra.mxu0 %v372
      %398 = vmatprep.subr.bf16.mxu0 0
      %399 = vmatpush1.bf16.msra.mxu0 %v371
      %400 = vmatprep.subr.bf16.mxu0 0
      %401 = vmatpush1.bf16.msra.mxu0 %v370
      %402 = vmatprep.subr.bf16.mxu0 0
      %403 = vmatpush2.bf16.msra.mxu0 0
      %404 = vmatprep.subr.bf16.mxu0 0
      %405 = vmatpush2.bf16.msra.mxu0 0
      %406 = vmatprep.subr.bf16.mxu0 0
      %407 = vmatpush2.bf16.msra.mxu0 0
      %408 = vmatprep.subr.bf16.mxu0 0
      %409 = vmatpush2.bf16.msra.mxu0 0
      %410 = vmatprep.subr.bf16.mxu0 0
      %411 = vmatpush2.bf16.msra.mxu0 0
      %412 = vmatprep.subr.bf16.mxu0 0
      %413 = vmatpush2.bf16.msra.mxu0 0
      %414 = vmatprep.subr.bf16.mxu0 0
      %415 = vmatpush2.bf16.msra.mxu0 0
      %416 = vmatprep.subr.bf16.mxu0 0
      %417 = vmatpush2.bf16.msra.mxu0 0
      %418 = vmatprep.mubr.bf16.mxu0 0
      %419 = vmatmul.mubr.bf16.gmra.mxu0 %v317
      %v420 = vpop.f32.mrf.mxu0
      %v421 = vadd.f32 0.0, %v420
      %v422 = vpop.f32.mrf.mxu0
      %v423 = vpop.f32.mrf.mxu0
      %v424 = vadd.f32 0.0, %v423
      %v425 = vpop.f32.mrf.mxu0
      %426 = vmatprep.mubr.bf16.mxu0 0
      %427 = vmatmul.mubr.bf16.gmra.mxu0 %v318
      %v428 = vpop.f32.mrf.mxu0
      %v429 = vadd.f32 0.0, %v428
      %v430 = vpop.f32.mrf.mxu0
      %v431 = vpop.f32.mrf.mxu0
      %v432 = vadd.f32 0.0, %v431
      %v433 = vpop.f32.mrf.mxu0
      %434 = vmatprep.mubr.bf16.mxu0 0
      %435 = vmatmul.mubr.bf16.gmra.mxu0 %v319
      %v436 = vpop.f32.mrf.mxu0
      %v437 = vadd.f32 0.0, %v436
      %v438 = vpop.f32.mrf.mxu0
      %v439 = vpop.f32.mrf.mxu0
      %v440 = vadd.f32 0.0, %v439
      %v441 = vpop.f32.mrf.mxu0
      %442 = vmatprep.mubr.bf16.mxu0 0
      %443 = vmatmul.mubr.bf16.gmra.mxu0 %v320
      %v444 = vpop.f32.mrf.mxu0
      %v445 = vadd.f32 0.0, %v444
      %v446 = vpop.f32.mrf.mxu0
      %v447 = vpop.f32.mrf.mxu0
      %v448 = vadd.f32 0.0, %v447
      %v449 = vpop.f32.mrf.mxu0
      %450 = vdwg.mxu0
      %v467 = vunpack.c.l.b16 %v236
      %v468 = vunpack.c.l.b16 %v237
      %v469 = vunpack.c.l.b16 %v238
      %v470 = vunpack.c.l.b16 %v239
      %v471 = vunpack.c.l.b16 %v240
      %v472 = vunpack.c.l.b16 %v241
      %v473 = vunpack.c.l.b16 %v242
      %v474 = vunpack.c.l.b16 %v243
      %v475 = vunpack.c.l.b16 %v244
      %v476 = vunpack.c.l.b16 %v245
      %v477 = vunpack.c.l.b16 %v246
      %v478 = vunpack.c.l.b16 %v247
      %v479 = vunpack.c.l.b16 %v248
      %v480 = vunpack.c.l.b16 %v249
      %v481 = vunpack.c.l.b16 %v250
      %v482 = vunpack.c.l.b16 %v251
      %v483 = vpack.c.b16 %v468, %v467
      %v484 = vpack.c.b16 %v470, %v469
      %v485 = vpack.c.b16 %v472, %v471
      %v486 = vpack.c.b16 %v474, %v473
      %v487 = vpack.c.b16 %v476, %v475
      %v488 = vpack.c.b16 %v478, %v477
      %v489 = vpack.c.b16 %v480, %v479
      %v490 = vpack.c.b16 %v482, %v481
      %499 = vmatprep.subr.bf16.mxu0 0
      %500 = vmatpush1.bf16.msra.mxu0 %v490
      %501 = vmatprep.subr.bf16.mxu0 0
      %502 = vmatpush1.bf16.msra.mxu0 %v489
      %503 = vmatprep.subr.bf16.mxu0 0
      %504 = vmatpush1.bf16.msra.mxu0 %v488
      %505 = vmatprep.subr.bf16.mxu0 0
      %506 = vmatpush1.bf16.msra.mxu0 %v487
      %507 = vmatprep.subr.bf16.mxu0 0
      %508 = vmatpush1.bf16.msra.mxu0 %v486
      %509 = vmatprep.subr.bf16.mxu0 0
      %510 = vmatpush1.bf16.msra.mxu0 %v485
      %511 = vmatprep.subr.bf16.mxu0 0
      %512 = vmatpush1.bf16.msra.mxu0 %v484
      %513 = vmatprep.subr.bf16.mxu0 0
      %514 = vmatpush1.bf16.msra.mxu0 %v483
      %515 = vmatprep.subr.bf16.mxu0 0
      %516 = vmatpush2.bf16.msra.mxu0 0
      %517 = vmatprep.subr.bf16.mxu0 0
      %518 = vmatpush2.bf16.msra.mxu0 0
      %519 = vmatprep.subr.bf16.mxu0 0
      %520 = vmatpush2.bf16.msra.mxu0 0
      %521 = vmatprep.subr.bf16.mxu0 0
      %522 = vmatpush2.bf16.msra.mxu0 0
      %523 = vmatprep.subr.bf16.mxu0 0
      %524 = vmatpush2.bf16.msra.mxu0 0
      %525 = vmatprep.subr.bf16.mxu0 0
      %526 = vmatpush2.bf16.msra.mxu0 0
      %527 = vmatprep.subr.bf16.mxu0 0
      %528 = vmatpush2.bf16.msra.mxu0 0
      %529 = vmatprep.subr.bf16.mxu0 0
      %530 = vmatpush2.bf16.msra.mxu0 0
      %531 = vmatprep.mubr.bf16.mxu0 0
      %532 = vmatmul.mubr.bf16.gmra.mxu0 %v232
      %v533 = vpop.f32.mrf.mxu0
      %v534 = vadd.f32 %v421, %v533
      %v535 = vpop.f32.mrf.mxu0
      %v536 = vpop.f32.mrf.mxu0
      %v537 = vadd.f32 %v424, %v536
      %v538 = vpop.f32.mrf.mxu0
      %539 = vmatprep.mubr.bf16.mxu0 0
      %540 = vmatmul.mubr.bf16.gmra.mxu0 %v233
      %v541 = vpop.f32.mrf.mxu0
      %v542 = vadd.f32 %v429, %v541
      %v543 = vpop.f32.mrf.mxu0
      %v544 = vpop.f32.mrf.mxu0
      %v545 = vadd.f32 %v432, %v544
      %v546 = vpop.f32.mrf.mxu0
      %547 = vmatprep.mubr.bf16.mxu0 0
      %548 = vmatmul.mubr.bf16.gmra.mxu0 %v234
      %v549 = vpop.f32.mrf.mxu0
      %v550 = vadd.f32 %v437, %v549
      %v551 = vpop.f32.mrf.mxu0
      %v552 = vpop.f32.mrf.mxu0
      %v553 = vadd.f32 %v440, %v552
      %v554 = vpop.f32.mrf.mxu0
      %555 = vmatprep.mubr.bf16.mxu0 0
      %556 = vmatmul.mubr.bf16.gmra.mxu0 %v235
      %v557 = vpop.f32.mrf.mxu0
      %v558 = vadd.f32 %v445, %v557
      %v559 = vpop.f32.mrf.mxu0
      %v560 = vpop.f32.mrf.mxu0
      %v561 = vadd.f32 %v448, %v560
      %v562 = vpop.f32.mrf.mxu0
      %563 = vdwg.mxu0
      %s564 = scalar_lea.vmem %s203, 8
      %v565 = vld [vmem:[%s564] sm:$0xf]
      %v566 = vld [vmem:[%s564 + $0x8] sm:$0xf]
      %v567 = vld [vmem:[%s564 + $0x10] sm:$0xf]
      %v568 = vld [vmem:[%s564 + $0x18] sm:$0xf]
      %v569 = vld [vmem:[%s564 + $0x20] sm:$0xf]
      %v570 = vld [vmem:[%s564 + $0x28] sm:$0xf]
      %v571 = vld [vmem:[%s564 + $0x30] sm:$0xf]
      %v572 = vld [vmem:[%s564 + $0x38] sm:$0xf]
      %v573 = vunpack.c.l.bf16 %v565
      %v574 = vunpack.c.l.bf16 %v566
      %v575 = vunpack.c.l.bf16 %v567
      %v576 = vunpack.c.l.bf16 %v568
      %v577 = vunpack.c.l.bf16 %v569
      %v578 = vunpack.c.l.bf16 %v570
      %v579 = vunpack.c.l.bf16 %v571
      %v580 = vunpack.c.l.bf16 %v572
      %v581 = vpack.c.bf16 %v574, %v573
      %v582 = vpack.c.bf16 %v576, %v575
      %v583 = vpack.c.bf16 %v578, %v577
      %v584 = vpack.c.bf16 %v580, %v579
      %s585 = scalar_lea.vmem %s1, 128
      %v586 = vld [vmem:[%s585] sm:$0xf]
      %v587 = vld [vmem:[%s585 + $0x4] sm:$0xf]
      %v588 = vld [vmem:[%s585 + $0x8] sm:$0xf]
      %v589 = vld [vmem:[%s585 + $0xc] sm:$0xf]
      %v590 = vld [vmem:[%s585 + $0x10] sm:$0xf]
      %v591 = vld [vmem:[%s585 + $0x14] sm:$0xf]
      %v592 = vld [vmem:[%s585 + $0x18] sm:$0xf]
      %v593 = vld [vmem:[%s585 + $0x1c] sm:$0xf]
      %v594 = vld [vmem:[%s585 + $0x20] sm:$0xf]
      %v595 = vld [vmem:[%s585 + $0x24] sm:$0xf]
      %v596 = vld [vmem:[%s585 + $0x28] sm:$0xf]
      %v597 = vld [vmem:[%s585 + $0x2c] sm:$0xf]
      %v598 = vld [vmem:[%s585 + $0x30] sm:$0xf]
      %v599 = vld [vmem:[%s585 + $0x34] sm:$0xf]
      %v600 = vld [vmem:[%s585 + $0x38] sm:$0xf]
      %v601 = vld [vmem:[%s585 + $0x3c] sm:$0xf]
      %v618 = vunpack.c.l.b16 %v586
      %v619 = vunpack.c.l.b16 %v587
      %v620 = vunpack.c.l.b16 %v588
      %v621 = vunpack.c.l.b16 %v589
      %v622 = vunpack.c.l.b16 %v590
      %v623 = vunpack.c.l.b16 %v591
      %v624 = vunpack.c.l.b16 %v592
      %v625 = vunpack.c.l.b16 %v593
      %v626 = vunpack.c.l.b16 %v594
      %v627 = vunpack.c.l.b16 %v595
      %v628 = vunpack.c.l.b16 %v596
      %v629 = vunpack.c.l.b16 %v597
      %v630 = vunpack.c.l.b16 %v598
      %v631 = vunpack.c.l.b16 %v599
      %v632 = vunpack.c.l.b16 %v600
      %v633 = vunpack.c.l.b16 %v601
      %v634 = vpack.c.b16 %v619, %v618
      %v635 = vpack.c.b16 %v621, %v620
      %v636 = vpack.c.b16 %v623, %v622
      %v637 = vpack.c.b16 %v625, %v624
      %v638 = vpack.c.b16 %v627, %v626
      %v639 = vpack.c.b16 %v629, %v628
      %v640 = vpack.c.b16 %v631, %v630
      %v641 = vpack.c.b16 %v633, %v632
      %650 = vmatprep.subr.bf16.mxu0 0
      %651 = vmatpush1.bf16.msra.mxu0 %v641
      %652 = vmatprep.subr.bf16.mxu0 0
      %653 = vmatpush1.bf16.msra.mxu0 %v640
      %654 = vmatprep.subr.bf16.mxu0 0
      %655 = vmatpush1.bf16.msra.mxu0 %v639
      %656 = vmatprep.subr.bf16.mxu0 0
      %657 = vmatpush1.bf16.msra.mxu0 %v638
      %658 = vmatprep.subr.bf16.mxu0 0
      %659 = vmatpush1.bf16.msra.mxu0 %v637
      %660 = vmatprep.subr.bf16.mxu0 0
      %661 = vmatpush1.bf16.msra.mxu0 %v636
      %662 = vmatprep.subr.bf16.mxu0 0
      %663 = vmatpush1.bf16.msra.mxu0 %v635
      %664 = vmatprep.subr.bf16.mxu0 0
      %665 = vmatpush1.bf16.msra.mxu0 %v634
      %666 = vmatprep.subr.bf16.mxu0 0
      %667 = vmatpush2.bf16.msra.mxu0 0
      %668 = vmatprep.subr.bf16.mxu0 0
      %669 = vmatpush2.bf16.msra.mxu0 0
      %670 = vmatprep.subr.bf16.mxu0 0
      %671 = vmatpush2.bf16.msra.mxu0 0
      %672 = vmatprep.subr.bf16.mxu0 0
      %673 = vmatpush2.bf16.msra.mxu0 0
      %674 = vmatprep.subr.bf16.mxu0 0
      %675 = vmatpush2.bf16.msra.mxu0 0
      %676 = vmatprep.subr.bf16.mxu0 0
      %677 = vmatpush2.bf16.msra.mxu0 0
      %678 = vmatprep.subr.bf16.mxu0 0
      %679 = vmatpush2.bf16.msra.mxu0 0
      %680 = vmatprep.subr.bf16.mxu0 0
      %681 = vmatpush2.bf16.msra.mxu0 0
      %682 = vmatprep.mubr.bf16.mxu0 0
      %683 = vmatmul.mubr.bf16.gmra.mxu0 %v581
      %v684 = vpop.f32.mrf.mxu0
      %v685 = vadd.f32 0.0, %v684
      %v686 = vpop.f32.mrf.mxu0
      %v687 = vpop.f32.mrf.mxu0
      %v688 = vadd.f32 0.0, %v687
      %v689 = vpop.f32.mrf.mxu0
      %690 = vmatprep.mubr.bf16.mxu0 0
      %691 = vmatmul.mubr.bf16.gmra.mxu0 %v582
      %v692 = vpop.f32.mrf.mxu0
      %v693 = vadd.f32 0.0, %v692
      %v694 = vpop.f32.mrf.mxu0
      %v695 = vpop.f32.mrf.mxu0
      %v696 = vadd.f32 0.0, %v695
      %v697 = vpop.f32.mrf.mxu0
      %698 = vmatprep.mubr.bf16.mxu0 0
      %699 = vmatmul.mubr.bf16.gmra.mxu0 %v583
      %v700 = vpop.f32.mrf.mxu0
      %v701 = vadd.f32 0.0, %v700
      %v702 = vpop.f32.mrf.mxu0
      %v703 = vpop.f32.mrf.mxu0
      %v704 = vadd.f32 0.0, %v703
      %v705 = vpop.f32.mrf.mxu0
      %706 = vmatprep.mubr.bf16.mxu0 0
      %707 = vmatmul.mubr.bf16.gmra.mxu0 %v584
      %v708 = vpop.f32.mrf.mxu0
      %v709 = vadd.f32 0.0, %v708
      %v710 = vpop.f32.mrf.mxu0
      %v711 = vpop.f32.mrf.mxu0
      %v712 = vadd.f32 0.0, %v711
      %v713 = vpop.f32.mrf.mxu0
      %714 = vdwg.mxu0
      %v715 = vadd.f32 %v534, %v685
      %v716 = vadd.f32 %v537, %v688
      %v717 = vadd.f32 %v542, %v693
      %v718 = vadd.f32 %v545, %v696
      %v719 = vadd.f32 %v550, %v701
      %v720 = vadd.f32 %v553, %v704
      %v721 = vadd.f32 %v558, %v709
      %v722 = vadd.f32 %v561, %v712
      %v723 = vld [vmem:[%s564] sm:$0xf]
      %v724 = vld [vmem:[%s564 + $0x4] sm:$0x1]
      %v725 = vld [vmem:[%s564 + $0x8] sm:$0xf]
      %v726 = vld [vmem:[%s564 + $0xc] sm:$0x1]
      %v727 = vld [vmem:[%s564 + $0x10] sm:$0xf]
      %v728 = vld [vmem:[%s564 + $0x14] sm:$0x1]
      %v729 = vld [vmem:[%s564 + $0x18] sm:$0xf]
      %v730 = vld [vmem:[%s564 + $0x1c] sm:$0x1]
      %v731 = vld [vmem:[%s564 + $0x20] sm:$0xf]
      %v732 = vld [vmem:[%s564 + $0x24] sm:$0x1]
      %v733 = vld [vmem:[%s564 + $0x28] sm:$0xf]
      %v734 = vld [vmem:[%s564 + $0x2c] sm:$0x1]
      %v735 = vld [vmem:[%s564 + $0x30] sm:$0xf]
      %v736 = vld [vmem:[%s564 + $0x34] sm:$0x1]
      %v737 = vld [vmem:[%s564 + $0x38] sm:$0xf]
      %v738 = vld [vmem:[%s564 + $0x3c] sm:$0x1]
      %v739 = vunpack.c.l.bf16 %v723
      %v740 = vunpack.c.l.bf16 %v724
      %v741 = vunpack.c.l.bf16 %v725
      %v742 = vunpack.c.l.bf16 %v726
      %v743 = vunpack.c.l.bf16 %v727
      %v744 = vunpack.c.l.bf16 %v728
      %v745 = vunpack.c.l.bf16 %v729
      %v746 = vunpack.c.l.bf16 %v730
      %v747 = vunpack.c.l.bf16 %v731
      %v748 = vunpack.c.l.bf16 %v732
      %v749 = vunpack.c.l.bf16 %v733
      %v750 = vunpack.c.l.bf16 %v734
      %v751 = vunpack.c.l.bf16 %v735
      %v752 = vunpack.c.l.bf16 %v736
      %v753 = vunpack.c.l.bf16 %v737
      %v754 = vunpack.c.l.bf16 %v738
      %v771 = vrot.slane %v739, 1
      %v772 = vrot.slane %v740, 1
      %v773 = vsel %vm284, %v771, %v772
      %v774 = vrot.slane %v741, 1
      %v775 = vrot.slane %v742, 1
      %v776 = vsel %vm284, %v774, %v775
      %v777 = vrot.slane %v743, 1
      %v778 = vrot.slane %v744, 1
      %v779 = vsel %vm284, %v777, %v778
      %v780 = vrot.slane %v745, 1
      %v781 = vrot.slane %v746, 1
      %v782 = vsel %vm284, %v780, %v781
      %v783 = vrot.slane %v747, 1
      %v784 = vrot.slane %v748, 1
      %v785 = vsel %vm284, %v783, %v784
      %v786 = vrot.slane %v749, 1
      %v787 = vrot.slane %v750, 1
      %v788 = vsel %vm284, %v786, %v787
      %v789 = vrot.slane %v751, 1
      %v790 = vrot.slane %v752, 1
      %v791 = vsel %vm284, %v789, %v790
      %v792 = vrot.slane %v753, 1
      %v793 = vrot.slane %v754, 1
      %v794 = vsel %vm284, %v792, %v793
      %v803 = vpack.c.bf16 %v776, %v773
      %v804 = vpack.c.bf16 %v782, %v779
      %v805 = vpack.c.bf16 %v788, %v785
      %v806 = vpack.c.bf16 %v794, %v791
      %s807 = scalar_lea.vmem %s1, 192
      %v808 = vld [vmem:[%s807] sm:$0xf]
      %v809 = vld [vmem:[%s807 + $0x4] sm:$0xf]
      %v810 = vld [vmem:[%s807 + $0x8] sm:$0xf]
      %v811 = vld [vmem:[%s807 + $0xc] sm:$0xf]
      %v812 = vld [vmem:[%s807 + $0x10] sm:$0xf]
      %v813 = vld [vmem:[%s807 + $0x14] sm:$0xf]
      %v814 = vld [vmem:[%s807 + $0x18] sm:$0xf]
      %v815 = vld [vmem:[%s807 + $0x1c] sm:$0xf]
      %v816 = vld [vmem:[%s807 + $0x20] sm:$0xf]
      %v817 = vld [vmem:[%s807 + $0x24] sm:$0xf]
      %v818 = vld [vmem:[%s807 + $0x28] sm:$0xf]
      %v819 = vld [vmem:[%s807 + $0x2c] sm:$0xf]
      %v820 = vld [vmem:[%s807 + $0x30] sm:$0xf]
      %v821 = vld [vmem:[%s807 + $0x34] sm:$0xf]
      %v822 = vld [vmem:[%s807 + $0x38] sm:$0xf]
      %v823 = vld [vmem:[%s807 + $0x3c] sm:$0xf]
      %v840 = vunpack.c.l.b16 %v808
      %v841 = vunpack.c.l.b16 %v809
      %v842 = vunpack.c.l.b16 %v810
      %v843 = vunpack.c.l.b16 %v811
      %v844 = vunpack.c.l.b16 %v812
      %v845 = vunpack.c.l.b16 %v813
      %v846 = vunpack.c.l.b16 %v814
      %v847 = vunpack.c.l.b16 %v815
      %v848 = vunpack.c.l.b16 %v816
      %v849 = vunpack.c.l.b16 %v817
      %v850 = vunpack.c.l.b16 %v818
      %v851 = vunpack.c.l.b16 %v819
      %v852 = vunpack.c.l.b16 %v820
      %v853 = vunpack.c.l.b16 %v821
      %v854 = vunpack.c.l.b16 %v822
      %v855 = vunpack.c.l.b16 %v823
      %v856 = vpack.c.b16 %v841, %v840
      %v857 = vpack.c.b16 %v843, %v842
      %v858 = vpack.c.b16 %v845, %v844
      %v859 = vpack.c.b16 %v847, %v846
      %v860 = vpack.c.b16 %v849, %v848
      %v861 = vpack.c.b16 %v851, %v850
      %v862 = vpack.c.b16 %v853, %v852
      %v863 = vpack.c.b16 %v855, %v854
      %872 = vmatprep.subr.bf16.mxu0 0
      %873 = vmatpush1.bf16.msra.mxu0 %v863
      %874 = vmatprep.subr.bf16.mxu0 0
      %875 = vmatpush1.bf16.msra.mxu0 %v862
      %876 = vmatprep.subr.bf16.mxu0 0
      %877 = vmatpush1.bf16.msra.mxu0 %v861
      %878 = vmatprep.subr.bf16.mxu0 0
      %879 = vmatpush1.bf16.msra.mxu0 %v860
      %880 = vmatprep.subr.bf16.mxu0 0
      %881 = vmatpush1.bf16.msra.mxu0 %v859
      %882 = vmatprep.subr.bf16.mxu0 0
      %883 = vmatpush1.bf16.msra.mxu0 %v858
      %884 = vmatprep.subr.bf16.mxu0 0
      %885 = vmatpush1.bf16.msra.mxu0 %v857
      %886 = vmatprep.subr.bf16.mxu0 0
      %887 = vmatpush1.bf16.msra.mxu0 %v856
      %888 = vmatprep.subr.bf16.mxu0 0
      %889 = vmatpush2.bf16.msra.mxu0 0
      %890 = vmatprep.subr.bf16.mxu0 0
      %891 = vmatpush2.bf16.msra.mxu0 0
      %892 = vmatprep.subr.bf16.mxu0 0
      %893 = vmatpush2.bf16.msra.mxu0 0
      %894 = vmatprep.subr.bf16.mxu0 0
      %895 = vmatpush2.bf16.msra.mxu0 0
      %896 = vmatprep.subr.bf16.mxu0 0
      %897 = vmatpush2.bf16.msra.mxu0 0
      %898 = vmatprep.subr.bf16.mxu0 0
      %899 = vmatpush2.bf16.msra.mxu0 0
      %900 = vmatprep.subr.bf16.mxu0 0
      %901 = vmatpush2.bf16.msra.mxu0 0
      %902 = vmatprep.subr.bf16.mxu0 0
      %903 = vmatpush2.bf16.msra.mxu0 0
      %904 = vmatprep.mubr.bf16.mxu0 0
      %905 = vmatmul.mubr.bf16.gmra.mxu0 %v803
      %v906 = vpop.f32.mrf.mxu0
      %v907 = vadd.f32 0.0, %v906
      %v908 = vpop.f32.mrf.mxu0
      %v909 = vpop.f32.mrf.mxu0
      %v910 = vadd.f32 0.0, %v909
      %v911 = vpop.f32.mrf.mxu0
      %912 = vmatprep.mubr.bf16.mxu0 0
      %913 = vmatmul.mubr.bf16.gmra.mxu0 %v804
      %v914 = vpop.f32.mrf.mxu0
      %v915 = vadd.f32 0.0, %v914
      %v916 = vpop.f32.mrf.mxu0
      %v917 = vpop.f32.mrf.mxu0
      %v918 = vadd.f32 0.0, %v917
      %v919 = vpop.f32.mrf.mxu0
      %920 = vmatprep.mubr.bf16.mxu0 0
      %921 = vmatmul.mubr.bf16.gmra.mxu0 %v805
      %v922 = vpop.f32.mrf.mxu0
      %v923 = vadd.f32 0.0, %v922
      %v924 = vpop.f32.mrf.mxu0
      %v925 = vpop.f32.mrf.mxu0
      %v926 = vadd.f32 0.0, %v925
      %v927 = vpop.f32.mrf.mxu0
      %928 = vmatprep.mubr.bf16.mxu0 0
      %929 = vmatmul.mubr.bf16.gmra.mxu0 %v806
      %v930 = vpop.f32.mrf.mxu0
      %v931 = vadd.f32 0.0, %v930
      %v932 = vpop.f32.mrf.mxu0
      %v933 = vpop.f32.mrf.mxu0
      %v934 = vadd.f32 0.0, %v933
      %v935 = vpop.f32.mrf.mxu0
      %936 = vdwg.mxu0
      %v937 = vadd.f32 %v715, %v907
      %v938 = vadd.f32 %v716, %v910
      %v939 = vadd.f32 %v717, %v915
      %v940 = vadd.f32 %v718, %v918
      %v941 = vadd.f32 %v719, %v923
      %v942 = vadd.f32 %v720, %v926
      %v943 = vadd.f32 %v721, %v931
      %v944 = vadd.f32 %v722, %v934
      %v945 = vpack.c.bf16 %v938, %v937
      %v946 = vpack.c.bf16 %v940, %v939
      %v947 = vpack.c.bf16 %v942, %v941
      %v948 = vpack.c.bf16 %v944, %v943
      %v953 = vunpack.c.l.b16 %v945
      %v954 = vunpack.c.h.b16 %v945
      %v955 = vunpack.c.l.b16 %v946
      %v956 = vunpack.c.h.b16 %v946
      %v957 = vunpack.c.l.b16 %v947
      %v958 = vunpack.c.h.b16 %v947
      %v959 = vunpack.c.l.b16 %v948
      %v960 = vunpack.c.h.b16 %v948
      %v961 = vpack.c.b16 %v953, %v953
      %v962 = vpack.c.b16 %v954, %v954
      %v963 = vpack.c.b16 %v955, %v955
      %v964 = vpack.c.b16 %v956, %v956
      %v965 = vpack.c.b16 %v957, %v957
      %v966 = vpack.c.b16 %v958, %v958
      %v967 = vpack.c.b16 %v959, %v959
      %v968 = vpack.c.b16 %v960, %v960
      %977 = vst [vmem:[%s208] sm:$0xf] %v961
      %978 = vst [vmem:[%s208 + $0x4] sm:$0xf] %v962
      %979 = vst [vmem:[%s208 + $0x8] sm:$0xf] %v963
      %980 = vst [vmem:[%s208 + $0xc] sm:$0xf] %v964
      %981 = vst [vmem:[%s208 + $0x10] sm:$0xf] %v965
      %982 = vst [vmem:[%s208 + $0x14] sm:$0xf] %v966
      %983 = vst [vmem:[%s208 + $0x18] sm:$0xf] %v967
      %984 = vst [vmem:[%s208 + $0x1c] sm:$0xf] %v968
      %v985 = vadd.f32 %v937, %v938
      %v986 = vadd.f32 %v985, %v939
      %v987 = vadd.f32 %v986, %v940
      %v988 = vadd.f32 %v987, %v941
      %v989 = vadd.f32 %v988, %v942
      %v990 = vadd.f32 %v989, %v943
      %v991 = vadd.f32 %v990, %v944
      %v992 = vrot.slane %v991, 4
      %v993 = vadd.f32 %v991, %v992
      %v994 = vrot.slane %v993, 2
      %v995 = vadd.f32 %v993, %v994
      %v996 = vrot.slane %v995, 1
      %v997 = vadd.f32 %v995, %v996
      %998 = vst [vmem:[%s211] sm:$0x1] %v997
      %v999 = vmul.f32 %v937, %v937
      %v1000 = vmul.f32 %v938, %v938
      %v1001 = vmul.f32 %v939, %v939
      %v1002 = vmul.f32 %v940, %v940
      %v1003 = vmul.f32 %v941, %v941
      %v1004 = vmul.f32 %v942, %v942
      %v1005 = vmul.f32 %v943, %v943
      %v1006 = vmul.f32 %v944, %v944
      %v1007 = vadd.f32 %v999, %v1000
      %v1008 = vadd.f32 %v1007, %v1001
      %v1009 = vadd.f32 %v1008, %v1002
      %v1010 = vadd.f32 %v1009, %v1003
      %v1011 = vadd.f32 %v1010, %v1004
      %v1012 = vadd.f32 %v1011, %v1005
      %v1013 = vadd.f32 %v1012, %v1006
      %v1014 = vrot.slane %v1013, 4
      %v1015 = vadd.f32 %v1013, %v1014
      %v1016 = vrot.slane %v1015, 2
      %v1017 = vadd.f32 %v1015, %v1016
      %v1018 = vrot.slane %v1017, 1
      %v1019 = vadd.f32 %v1017, %v1018
      %1020 = vst [vmem:[%s214] sm:$0x1] %v1019
      %p1021 = scmp.lt.s32.totalorder %s16, 1
      %s1022 = scalar_select %p1021, %s16, 1
      %s1023 = smul.addr %s1022, 8
      %s1024 = smul.addr %s1023, 4
      %s1025 = scalar_lea.vmem %s2, %s1024
      %p1026 = scmp.lt.s32.totalorder %s16, 1
      %s1027 = scalar_select %p1026, %s16, 1
      %s1028 = scalar_lea.vmem %s3, %s1027
      %p1029 = scmp.lt.s32.totalorder %s16, 1
      %s1030 = scalar_select %p1029, %s16, 1
      %s1031 = scalar_lea.vmem %s4, %s1030
      // Predicated region
      $region29: #{residual_block_forward.3} parent=27 // pred_check
        %p1032 = pneg %p81
      $region30: #{residual_block_forward.3} parent=27 // pred_check_branch
        %1034 = sbr.rel (%p1032) target = $region32
      $region31: #{residual_block_forward.3} parent=27 // pred_region
        _
      $region32: #{residual_block_forward.3} parent=27 // pred_fallthru
        _
      // Predicated region
      $region33: #{residual_block_forward.3} parent=27 // pred_check
        %p1035 = pneg %p107
      $region34: #{residual_block_forward.3} parent=27 // pred_check_branch
        %1037 = sbr.rel (%p1035) target = $region36
      $region35: #{residual_block_forward.3} parent=27 // pred_region
        _
      $region36: #{residual_block_forward.3} parent=27 // pred_fallthru
        _
      // Predicated region
      $region37: #{residual_block_forward.3} parent=27 // pred_check
        %p1038 = pneg %p133
      $region38: #{residual_block_forward.3} parent=27 // pred_check_branch
        %1040 = sbr.rel (%p1038) target = $region40
      $region39: #{residual_block_forward.3} parent=27 // pred_region
        _
      $region40: #{residual_block_forward.3} parent=27 // pred_fallthru
        _
    $region28: #{residual_block_forward.3} parent=5 // pred_fallthru
      _
    %p1041 = scmp.le.s32.totalorder 2, %s11
    // Predicated region
    $region41: #{residual_block_forward.3} parent=5 // pred_check
      %p1042 = pneg %p1041
    $region42: #{residual_block_forward.3} parent=5 // pred_check_branch
      %1044 = sbr.rel (%p1042) target = $region44
    $region43: #{residual_block_forward.3} parent=5 // pred_region
      %s1045 = ssub.s32 %s11, 2
      // Predicated region
      $region45: #{residual_block_forward.3} parent=43 // pred_check
        %p1046 = pneg %p87
      $region46: #{residual_block_forward.3} parent=43 // pred_check_branch
        %1048 = sbr.rel (%p1046) target = $region48
      $region47: #{residual_block_forward.3} parent=43 // pred_region
        %p1049 = scmp.lt.s32.totalorder %s17, 1
        %s1050 = scalar_select %p1049, %s17, 1
        %s1051 = smul.addr %s1050, 8
        %s1052 = smul.addr %s1051, 4
        %s1053 = scalar_lea.vmem %s2, %s1052
      $region48: #{residual_block_forward.3} parent=43 // pred_fallthru
        _
      // Predicated region
      $region49: #{residual_block_forward.3} parent=43 // pred_check
        %p1054 = pneg %p113
      $region50: #{residual_block_forward.3} parent=43 // pred_check_branch
        %1056 = sbr.rel (%p1054) target = $region52
      $region51: #{residual_block_forward.3} parent=43 // pred_region
        %p1057 = scmp.lt.s32.totalorder %s17, 1
        %s1058 = scalar_select %p1057, %s17, 1
        %s1059 = scalar_lea.vmem %s3, %s1058
      $region52: #{residual_block_forward.3} parent=43 // pred_fallthru
        _
      // Predicated region
      $region53: #{residual_block_forward.3} parent=43 // pred_check
        %p1060 = pneg %p139
      $region54: #{residual_block_forward.3} parent=43 // pred_check_branch
        %1062 = sbr.rel (%p1060) target = $region56
      $region55: #{residual_block_forward.3} parent=43 // pred_region
        %p1063 = scmp.lt.s32.totalorder %s17, 1
        %s1064 = scalar_select %p1063, %s17, 1
        %s1065 = scalar_lea.vmem %s4, %s1064
      $region56: #{residual_block_forward.3} parent=43 // pred_fallthru
        _
    $region44: #{residual_block_forward.3} parent=5 // pred_fallthru
      _
  $region6: #{residual_block_forward.3} parent=0 // loop_footer
    %s15 = sadd.s32 1, %s11
  $region7: #{residual_block_forward.3} parent=0 // loop_footer_branch
    %10 = sbr.rel target = $region3
  $region8: #{residual_block_forward.3} parent=0 // loop_exit
    _

// kernel: residual_block_forward.4
$region0: #{residual_block_forward.4}
  #allocation0 [shape = 'u32[]', space=smem, size = 0x4, offset = 0x4, fixed_abs, tag = 'smem constant byte address 0x4 - core index']
  #allocation1 [shape = 'u32[144,128]{1,0:T(1,128)}', space=vmem, size = 0x12000, scoped, tag = 'internal scratch']
  #allocation2 [shape = 'f32[10,10,128]{2,1,0:T(8,128)}', space=vmem, size = 0x14000, scoped, tag = 'scratch operand']
  %s0 = inlined_call_operand.vmem [shape: bf16[2,64,128], index: 0, kind: input, shape index: {}]
  %s1 = inlined_call_operand.vmem [shape: f32[1,128], index: 1, kind: input, shape index: {}]
  %s2 = inlined_call_operand.vmem [shape: f32[1,128], index: 2, kind: input, shape index: {}]
  %s3 = inlined_call_operand.vmem [shape: bf16[9,128,128], index: 3, kind: input, shape index: {}]
  %s4 = inlined_call_operand.vmem [shape: bf16[2,64,128], index: 4, kind: input, shape index: {}]
  %s5 = inlined_call_operand.vmem [shape: bf16[128,128], index: 5, kind: input, shape index: {}]
  %s6 = inlined_call_operand.vmem [shape: bf16[2,64,128], index: 6, kind: output, shape index: {0}]
  %s7 = inlined_call_operand.vmem [shape: f32[2,1,128], index: 7, kind: output, shape index: {1}]
  %s8 = inlined_call_operand.vmem [shape: f32[2,1,128], index: 8, kind: output, shape index: {2}]
  %s9 = inlined_call_operand.vmem [shape: f32[2,1,128], index: 9, kind: output, shape index: {3}]
  %s10 = inlined_call_operand.vmem [shape: f32[2,1,128], index: 10, kind: output, shape index: {4}]
  %11 = xla_tuple %s6, %s7, %s8, %s9, %s10
  %s12 = sld [smem:[#allocation0]]
  $region89: #{residual_block_forward.4} parent=0
    _
  %s14 = ssub.s32 1, %s12
  %s15 = scalar_select 0, %s14, %s12
  loop: start=0, step=1, limit=4
  $region2: #{residual_block_forward.4} parent=0 // loop_pre_header
    _
  $region3: #{residual_block_forward.4} parent=0 // loop_header
    %s17 = sphi 0, %s21
    %p18 = scmp.ge.s32.totalorder %s17, 4
    %s27 = sphi 0, %s29
    %s30 = sphi 0, %s27
    %s31 = sphi 0, %s30
    %s47 = sphi 0, %s31
    %s51 = sphi 0, %s51
    %s53 = sphi 0, %s51
    %s54 = sphi 0, %s53
    %s68 = sphi 0, %s54
    %s72 = sphi 0, %s72
    %s74 = sphi 0, %s72
    %s75 = sphi 0, %s74
    %s89 = sphi 0, %s75
    %s93 = sphi 0, %s93
    %s95 = sphi 0, %s93
    %s96 = sphi 0, %s95
    %s110 = sphi 0, %s96
    %s116 = sphi 0, %s118
    %s119 = sphi 0, %s116
    %s120 = sphi 0, %s119
    %s136 = sphi 0, %s120
    %s140 = sphi 0, %s140
    %s142 = sphi 0, %s140
    %s143 = sphi 0, %s142
    %s157 = sphi 0, %s143
    %s163 = sphi 0, %s165
    %s166 = sphi 0, %s163
    %s167 = sphi 0, %s166
    %s183 = sphi 0, %s167
    %s189 = sphi 0, %s191
    %s192 = sphi 0, %s189
    %s193 = sphi 0, %s192
    %s209 = sphi 0, %s193
    %s215 = sphi 0, %s217
    %s218 = sphi 0, %s215
    %s219 = sphi 0, %s218
    %s235 = sphi 0, %s219
    %s241 = sphi 0, %s243
    %s244 = sphi 0, %s241
    %s245 = sphi 0, %s244
    %s261 = sphi 0, %s245
    %s267 = sphi 0, %s269
    %s270 = sphi 0, %s267
    %s271 = sphi 0, %s270
    %s287 = sphi 0, %s271
  $region4: #{residual_block_forward.4} parent=0 // loop_header_branch
    %20 = sbr.rel (%p18) target = $region8
  $region5: #{residual_block_forward.4} parent=0 // loop_body
    %s22 = ssub.s32 %s17, 1
    %s23 = ssub.s32 %s17, 2
    %s24 = sadd.s32 %s17, 1
    %s25 = ssub.s32 %s17, %s24
    %p26 = scmp.eq.s32.totalorder %s25, 0
    %s28 = sadd.s32 %s27, 1
    %s29 = scalar_select %p26, %s27, %s28
    %p32 = pneg %p26
    %p33 = scmp.eq.s32.totalorder %s17, 1
    %p34 = por %p32, %p33
    %p35 = scmp.ne.s32.totalorder %s27, %s30
    %p36 = scmp.eq.s32.totalorder %s17, 0
    %p37 = por %p35, %p36
    %p38 = scmp.ne.s32.totalorder %s27, %s30
    %p39 = scmp.eq.s32.totalorder %s22, 1
    %p40 = por %p38, %p39
    %p41 = scmp.ne.s32.totalorder %s30, %s31
    %p42 = scmp.eq.s32.totalorder %s22, 0
    %p43 = por %p41, %p42
    %p44 = scmp.ne.s32.totalorder %s30, %s31
    %p45 = scmp.eq.s32.totalorder %s23, 1
    %p46 = por %p44, %p45
    %p48 = scmp.ne.s32.totalorder %s31, %s47
    %p49 = scmp.eq.s32.totalorder %s23, 0
    %p50 = por %p48, %p49
    %s52 = sadd.s32 %s51, 1
    %p55 = scmp.eq.s32.totalorder %s17, 1
    %p56 = scmp.ne.s32.totalorder %s51, %s53
    %p57 = scmp.eq.s32.totalorder %s17, 0
    %p58 = por %p56, %p57
    %p59 = scmp.ne.s32.totalorder %s51, %s53
    %p60 = scmp.eq.s32.totalorder %s22, 1
    %p61 = por %p59, %p60
    %p62 = scmp.ne.s32.totalorder %s53, %s54
    %p63 = scmp.eq.s32.totalorder %s22, 0
    %p64 = por %p62, %p63
    %p65 = scmp.ne.s32.totalorder %s53, %s54
    %p66 = scmp.eq.s32.totalorder %s23, 1
    %p67 = por %p65, %p66
    %p69 = scmp.ne.s32.totalorder %s54, %s68
    %p70 = scmp.eq.s32.totalorder %s23, 0
    %p71 = por %p69, %p70
    %s73 = sadd.s32 %s72, 1
    %p76 = scmp.eq.s32.totalorder %s17, 1
    %p77 = scmp.ne.s32.totalorder %s72, %s74
    %p78 = scmp.eq.s32.totalorder %s17, 0
    %p79 = por %p77, %p78
    %p80 = scmp.ne.s32.totalorder %s72, %s74
    %p81 = scmp.eq.s32.totalorder %s22, 1
    %p82 = por %p80, %p81
    %p83 = scmp.ne.s32.totalorder %s74, %s75
    %p84 = scmp.eq.s32.totalorder %s22, 0
    %p85 = por %p83, %p84
    %p86 = scmp.ne.s32.totalorder %s74, %s75
    %p87 = scmp.eq.s32.totalorder %s23, 1
    %p88 = por %p86, %p87
    %p90 = scmp.ne.s32.totalorder %s75, %s89
    %p91 = scmp.eq.s32.totalorder %s23, 0
    %p92 = por %p90, %p91
    %s94 = sadd.s32 %s93, 1
    %p97 = scmp.eq.s32.totalorder %s17, 1
    %p98 = scmp.ne.s32.totalorder %s93, %s95
    %p99 = scmp.eq.s32.totalorder %s17, 0
    %p100 = por %p98, %p99
    %p101 = scmp.ne.s32.totalorder %s93, %s95
    %p102 = scmp.eq.s32.totalorder %s22, 1
    %p103 = por %p101, %p102
    %p104 = scmp.ne.s32.totalorder %s95, %s96
    %p105 = scmp.eq.s32.totalorder %s22, 0
    %p106 = por %p104, %p105
    %p107 = scmp.ne.s32.totalorder %s95, %s96
    %p108 = scmp.eq.s32.totalorder %s23, 1
    %p109 = por %p107, %p108
    %p111 = scmp.ne.s32.totalorder %s96, %s110
    %p112 = scmp.eq.s32.totalorder %s23, 0
    %p113 = por %p111, %p112
    %s114 = ssub.s32 %s17, %s24
    %p115 = scmp.eq.s32.totalorder %s114, 0
    %s117 = sadd.s32 %s116, 1
    %s118 = scalar_select %p115, %s116, %s117
    %p121 = pneg %p115
    %p122 = scmp.eq.s32.totalorder %s17, 1
    %p123 = por %p121, %p122
    %p124 = scmp.ne.s32.totalorder %s116, %s119
    %p125 = scmp.eq.s32.totalorder %s17, 0
    %p126 = por %p124, %p125
    %p127 = scmp.ne.s32.totalorder %s116, %s119
    %p128 = scmp.eq.s32.totalorder %s22, 1
    %p129 = por %p127, %p128
    %p130 = scmp.ne.s32.totalorder %s119, %s120
    %p131 = scmp.eq.s32.totalorder %s22, 0
    %p132 = por %p130, %p131
    %p133 = scmp.ne.s32.totalorder %s119, %s120
    %p134 = scmp.eq.s32.totalorder %s23, 1
    %p135 = por %p133, %p134
    %p137 = scmp.ne.s32.totalorder %s120, %s136
    %p138 = scmp.eq.s32.totalorder %s23, 0
    %p139 = por %p137, %p138
    %s141 = sadd.s32 %s140, 1
    %p144 = scmp.eq.s32.totalorder %s17, 1
    %p145 = scmp.ne.s32.totalorder %s140, %s142
    %p146 = scmp.eq.s32.totalorder %s17, 0
    %p147 = por %p145, %p146
    %p148 = scmp.ne.s32.totalorder %s140, %s142
    %p149 = scmp.eq.s32.totalorder %s22, 1
    %p150 = por %p148, %p149
    %p151 = scmp.ne.s32.totalorder %s142, %s143
    %p152 = scmp.eq.s32.totalorder %s22, 0
    %p153 = por %p151, %p152
    %p154 = scmp.ne.s32.totalorder %s142, %s143
    %p155 = scmp.eq.s32.totalorder %s23, 1
    %p156 = por %p154, %p155
    %p158 = scmp.ne.s32.totalorder %s143, %s157
    %p159 = scmp.eq.s32.totalorder %s23, 0
    %p160 = por %p158, %p159
    %s161 = ssub.s32 %s17, %s24
    %p162 = scmp.eq.s32.totalorder %s161, 0
    %s164 = sadd.s32 %s163, 1
    %s165 = scalar_select %p162, %s163, %s164
    %p168 = pneg %p162
    %p169 = scmp.eq.s32.totalorder %s17, 1
    %p170 = por %p168, %p169
    %p171 = scmp.ne.s32.totalorder %s163, %s166
    %p172 = scmp.eq.s32.totalorder %s17, 0
    %p173 = por %p171, %p172
    %p174 = scmp.ne.s32.totalorder %s163, %s166
    %p175 = scmp.eq.s32.totalorder %s22, 1
    %p176 = por %p174, %p175
    %p177 = scmp.ne.s32.totalorder %s166, %s167
    %p178 = scmp.eq.s32.totalorder %s22, 0
    %p179 = por %p177, %p178
    %p180 = scmp.ne.s32.totalorder %s166, %s167
    %p181 = scmp.eq.s32.totalorder %s23, 1
    %p182 = por %p180, %p181
    %p184 = scmp.ne.s32.totalorder %s167, %s183
    %p185 = scmp.eq.s32.totalorder %s23, 0
    %p186 = por %p184, %p185
    %s187 = ssub.s32 %s17, %s24
    %p188 = scmp.eq.s32.totalorder %s187, 0
    %s190 = sadd.s32 %s189, 1
    %s191 = scalar_select %p188, %s189, %s190
    %p194 = pneg %p188
    %p195 = scmp.eq.s32.totalorder %s17, 1
    %p196 = por %p194, %p195
    %p197 = scmp.ne.s32.totalorder %s189, %s192
    %p198 = scmp.eq.s32.totalorder %s17, 0
    %p199 = por %p197, %p198
    %p200 = scmp.ne.s32.totalorder %s189, %s192
    %p201 = scmp.eq.s32.totalorder %s22, 1
    %p202 = por %p200, %p201
    %p203 = scmp.ne.s32.totalorder %s192, %s193
    %p204 = scmp.eq.s32.totalorder %s22, 0
    %p205 = por %p203, %p204
    %p206 = scmp.ne.s32.totalorder %s192, %s193
    %p207 = scmp.eq.s32.totalorder %s23, 1
    %p208 = por %p206, %p207
    %p210 = scmp.ne.s32.totalorder %s193, %s209
    %p211 = scmp.eq.s32.totalorder %s23, 0
    %p212 = por %p210, %p211
    %s213 = ssub.s32 %s17, %s24
    %p214 = scmp.eq.s32.totalorder %s213, 0
    %s216 = sadd.s32 %s215, 1
    %s217 = scalar_select %p214, %s215, %s216
    %p220 = pneg %p214
    %p221 = scmp.eq.s32.totalorder %s17, 1
    %p222 = por %p220, %p221
    %p223 = scmp.ne.s32.totalorder %s215, %s218
    %p224 = scmp.eq.s32.totalorder %s17, 0
    %p225 = por %p223, %p224
    %p226 = scmp.ne.s32.totalorder %s215, %s218
    %p227 = scmp.eq.s32.totalorder %s22, 1
    %p228 = por %p226, %p227
    %p229 = scmp.ne.s32.totalorder %s218, %s219
    %p230 = scmp.eq.s32.totalorder %s22, 0
    %p231 = por %p229, %p230
    %p232 = scmp.ne.s32.totalorder %s218, %s219
    %p233 = scmp.eq.s32.totalorder %s23, 1
    %p234 = por %p232, %p233
    %p236 = scmp.ne.s32.totalorder %s219, %s235
    %p237 = scmp.eq.s32.totalorder %s23, 0
    %p238 = por %p236, %p237
    %s239 = ssub.s32 %s17, %s24
    %p240 = scmp.eq.s32.totalorder %s239, 0
    %s242 = sadd.s32 %s241, 1
    %s243 = scalar_select %p240, %s241, %s242
    %p246 = pneg %p240
    %p247 = scmp.eq.s32.totalorder %s17, 1
    %p248 = por %p246, %p247
    %p249 = scmp.ne.s32.totalorder %s241, %s244
    %p250 = scmp.eq.s32.totalorder %s17, 0
    %p251 = por %p249, %p250
    %p252 = scmp.ne.s32.totalorder %s241, %s244
    %p253 = scmp.eq.s32.totalorder %s22, 1
    %p254 = por %p252, %p253
    %p255 = scmp.ne.s32.totalorder %s244, %s245
    %p256 = scmp.eq.s32.totalorder %s22, 0
    %p257 = por %p255, %p256
    %p258 = scmp.ne.s32.totalorder %s244, %s245
    %p259 = scmp.eq.s32.totalorder %s23, 1
    %p260 = por %p258, %p259
    %p262 = scmp.ne.s32.totalorder %s245, %s261
    %p263 = scmp.eq.s32.totalorder %s23, 0
    %p264 = por %p262, %p263
    %s265 = ssub.s32 %s17, %s24
    %p266 = scmp.eq.s32.totalorder %s265, 0
    %s268 = sadd.s32 %s267, 1
    %s269 = scalar_select %p266, %s267, %s268
    %p272 = pneg %p266
    %p273 = scmp.eq.s32.totalorder %s17, 1
    %p274 = por %p272, %p273
    %p275 = scmp.ne.s32.totalorder %s267, %s270
    %p276 = scmp.eq.s32.totalorder %s17, 0
    %p277 = por %p275, %p276
    %p278 = scmp.ne.s32.totalorder %s267, %s270
    %p279 = scmp.eq.s32.totalorder %s22, 1
    %p280 = por %p278, %p279
    %p281 = scmp.ne.s32.totalorder %s270, %s271
    %p282 = scmp.eq.s32.totalorder %s22, 0
    %p283 = por %p281, %p282
    %p284 = scmp.ne.s32.totalorder %s270, %s271
    %p285 = scmp.eq.s32.totalorder %s23, 1
    %p286 = por %p284, %p285
    %p288 = scmp.ne.s32.totalorder %s271, %s287
    %p289 = scmp.eq.s32.totalorder %s23, 0
    %p290 = por %p288, %p289
    %p291 = scmp.le.s32.totalorder 1, %s17
    %p292 = scmp.lt.s32.totalorder %s17, 3
    %p293 = pnand %p291, %p292
    %p294 = pneg %p293
    // Predicated region
    $region9: #{residual_block_forward.4} parent=5 // pred_check
      _
    $region10: #{residual_block_forward.4} parent=5 // pred_check_branch
      %296 = sbr.rel (%p293) target = $region12
    $region11: #{residual_block_forward.4} parent=5 // pred_region
      %s297 = ssub.s32 %s17, 1
      // Predicated region
      $region13: #{residual_block_forward.4} parent=11 // pred_check
        %p298 = pneg %p64
      $region14: #{residual_block_forward.4} parent=11 // pred_check_branch
        %300 = sbr.rel (%p298) target = $region16
      $region15: #{residual_block_forward.4} parent=11 // pred_region
        _
      $region16: #{residual_block_forward.4} parent=11 // pred_fallthru
        _
      // Predicated region
      $region17: #{residual_block_forward.4} parent=11 // pred_check
        %p301 = pneg %p85
      $region18: #{residual_block_forward.4} parent=11 // pred_check_branch
        %303 = sbr.rel (%p301) target = $region20
      $region19: #{residual_block_forward.4} parent=11 // pred_region
        _
      $region20: #{residual_block_forward.4} parent=11 // pred_fallthru
        _
      // Predicated region
      $region21: #{residual_block_forward.4} parent=11 // pred_check
        %p304 = pneg %p106
      $region22: #{residual_block_forward.4} parent=11 // pred_check_branch
        %306 = sbr.rel (%p304) target = $region24
      $region23: #{residual_block_forward.4} parent=11 // pred_region
        _
      $region24: #{residual_block_forward.4} parent=11 // pred_fallthru
        _
      // Predicated region
      $region25: #{residual_block_forward.4} parent=11 // pred_check
        %p307 = pneg %p153
      $region26: #{residual_block_forward.4} parent=11 // pred_check_branch
        %309 = sbr.rel (%p307) target = $region28
      $region27: #{residual_block_forward.4} parent=11 // pred_region
        _
      $region28: #{residual_block_forward.4} parent=11 // pred_fallthru
        _
    $region12: #{residual_block_forward.4} parent=5 // pred_fallthru
      _
    %p310 = scmp.lt.s32.totalorder %s17, 2
    // Predicated region
    $region29: #{residual_block_forward.4} parent=5 // pred_check
      %p311 = pneg %p310
    $region30: #{residual_block_forward.4} parent=5 // pred_check_branch
      %313 = sbr.rel (%p311) target = $region32
    $region31: #{residual_block_forward.4} parent=5 // pred_region
      // Predicated region
      $region33: #{residual_block_forward.4} parent=31 // pred_check
        %p314 = pneg %p37
      $region34: #{residual_block_forward.4} parent=31 // pred_check_branch
        %316 = sbr.rel (%p314) target = $region36
      $region35: #{residual_block_forward.4} parent=31 // pred_region
        %p317 = scmp.lt.s32.totalorder %s17, 1
        %s318 = scalar_select %p317, %s17, 1
        %s319 = smul.addr %s318, 8
        %s320 = smul.addr %s319, 4
        %s321 = scalar_lea.vmem %s0, %s320
      $region36: #{residual_block_forward.4} parent=31 // pred_fallthru
        _
      // Predicated region
      $region37: #{residual_block_forward.4} parent=31 // pred_check
        %p322 = pneg %p126
      $region38: #{residual_block_forward.4} parent=31 // pred_check_branch
        %324 = sbr.rel (%p322) target = $region40
      $region39: #{residual_block_forward.4} parent=31 // pred_region
        %p325 = scmp.lt.s32.totalorder %s17, 1
        %s326 = scalar_select %p325, %s17, 1
        %s327 = smul.addr %s326, 8
        %s328 = smul.addr %s327, 4
        %s329 = scalar_lea.vmem %s4, %s328
      $region40: #{residual_block_forward.4} parent=31 // pred_fallthru
        _
    $region32: #{residual_block_forward.4} parent=5 // pred_fallthru
      _
    %p330 = scmp.le.s32.totalorder 1, %s17
    %p331 = scmp.lt.s32.totalorder %s17, 3
    %p332 = pnand %p330, %p331
    %p333 = pneg %p332
    // Predicated region
    $region41: #{residual_block_forward.4} parent=5 // pred_check
      _
    $region42: #{residual_block_forward.4} parent=5 // pred_check_branch
      %335 = sbr.rel (%p332) target = $region44
    $region43: #{residual_block_forward.4} parent=5 // pred_region
      %s336 = ssub.s32 %s17, 1
      %p337 = scmp.lt.s32.totalorder %s22, 1
      %s338 = scalar_select %p337, %s22, 1
      %s339 = smul.addr %s338, 8
      %s340 = smul.addr %s339, 4
      %s341 = scalar_lea.vmem %s0, %s340
      %p342 = pneg %p43
      %p343 = pneg %p40
      %p344 = pneg %p64
      %p345 = pneg %p61
      %p346 = pneg %p85
      %p347 = pneg %p82
      %p348 = pneg %p106
      %p349 = pneg %p103
      %p350 = scmp.lt.s32.totalorder %s22, 1
      %s351 = scalar_select %p350, %s22, 1
      %s352 = smul.addr %s351, 8
      %s353 = smul.addr %s352, 4
      %s354 = scalar_lea.vmem %s4, %s353
      %p355 = pneg %p132
      %p356 = pneg %p129
      %p357 = pneg %p153
      %p358 = pneg %p150
      %p359 = pneg %p179
      %p360 = pneg %p176
      %p361 = scmp.lt.s32.totalorder %s22, 1
      %s362 = scalar_select %p361, %s22, 1
      %s363 = smul.addr %s362, 8
      %s364 = smul.addr %s363, 4
      %s365 = scalar_lea.vmem %s6, %s364
      %p366 = pneg %p205
      %p367 = pneg %p202
      %p368 = scmp.lt.s32.totalorder %s22, 1
      %s369 = scalar_select %p368, %s22, 1
      %s370 = scalar_lea.vmem %s7, %s369
      %p371 = pneg %p231
      %p372 = pneg %p228
      %p373 = scmp.lt.s32.totalorder %s22, 1
      %s374 = scalar_select %p373, %s22, 1
      %s375 = scalar_lea.vmem %s8, %s374
      %p376 = pneg %p257
      %p377 = pneg %p254
      %p378 = scmp.lt.s32.totalorder %s22, 1
      %s379 = scalar_select %p378, %s22, 1
      %s380 = scalar_lea.vmem %s9, %s379
      %p381 = pneg %p283
      %p382 = pneg %p280
      %p383 = scmp.lt.s32.totalorder %s22, 1
      %s384 = scalar_select %p383, %s22, 1
      %s385 = scalar_lea.vmem %s10, %s384
      %p386 = scmp.lt.s32.totalorder %s22, 1
      %s387 = scalar_select %p386, %s22, 1
      %s388 = smul.addr %s387, 8
      %s389 = smul.addr %s388, 4
      %s390 = scalar_lea.vmem %s0, %s389
      %p391 = scmp.lt.s32.totalorder %s22, 1
      %s392 = scalar_select %p391, %s22, 1
      %s393 = smul.addr %s392, 8
      %s394 = smul.addr %s393, 4
      %s395 = scalar_lea.vmem %s4, %s394
      %p396 = scmp.lt.s32.totalorder %s22, 1
      %s397 = scalar_select %p396, %s22, 1
      %s398 = smul.addr %s397, 8
      %s399 = smul.addr %s398, 4
      %s400 = scalar_lea.vmem %s6, %s399
      %p401 = scmp.lt.s32.totalorder %s22, 1
      %s402 = scalar_select %p401, %s22, 1
      %s403 = scalar_lea.vmem %s7, %s402
      %p404 = scmp.lt.s32.totalorder %s22, 1
      %s405 = scalar_select %p404, %s22, 1
      %s406 = scalar_lea.vmem %s8, %s405
      %p407 = scmp.lt.s32.totalorder %s22, 1
      %s408 = scalar_select %p407, %s22, 1
      %s409 = scalar_lea.vmem %s9, %s408
      %p410 = scmp.lt.s32.totalorder %s22, 1
      %s411 = scalar_select %p410, %s22, 1
      %s412 = scalar_lea.vmem %s10, %s411
      %v414 = vld [vmem:[%s390] sm:$0xf]
      %v415 = vld [vmem:[%s390 + $0x4] sm:$0xf]
      %v416 = vld [vmem:[%s390 + $0x8] sm:$0xf]
      %v417 = vld [vmem:[%s390 + $0xc] sm:$0xf]
      %v418 = vld [vmem:[%s390 + $0x10] sm:$0xf]
      %v419 = vld [vmem:[%s390 + $0x14] sm:$0xf]
      %v420 = vld [vmem:[%s390 + $0x18] sm:$0xf]
      %v421 = vld [vmem:[%s390 + $0x1c] sm:$0xf]
      %v422 = vunpack.c.l.bf16 %v414
      %v423 = vunpack.c.l.bf16 %v415
      %v424 = vunpack.c.l.bf16 %v416
      %v425 = vunpack.c.l.bf16 %v417
      %v426 = vunpack.c.l.bf16 %v418
      %v427 = vunpack.c.l.bf16 %v419
      %v428 = vunpack.c.l.bf16 %v420
      %v429 = vunpack.c.l.bf16 %v421
      %v430 = vld [vmem:[%s1] sm:$0x1]
      %v432 = vlaneseq
      %v433 = vshrl.u32 %v432, 7
      %v434 = vsub.s32 0, %v433
      %v435 = vrot.slane %v430, %v434
      %v437 = vmul.f32 %v422, %v435
      %v438 = vmul.f32 %v423, %v435
      %v439 = vmul.f32 %v424, %v435
      %v440 = vmul.f32 %v425, %v435
      %v441 = vmul.f32 %v426, %v435
      %v442 = vmul.f32 %v427, %v435
      %v443 = vmul.f32 %v428, %v435
      %v444 = vmul.f32 %v429, %v435
      %v445 = vld [vmem:[%s2] sm:$0x1]
      %v447 = vlaneseq
      %v448 = vshrl.u32 %v447, 7
      %v449 = vsub.s32 0, %v448
      %v450 = vrot.slane %v445, %v449
      %v452 = vadd.f32 %v437, %v450
      %v453 = vadd.f32 %v438, %v450
      %v454 = vadd.f32 %v439, %v450
      %v455 = vadd.f32 %v440, %v450
      %v456 = vadd.f32 %v441, %v450
      %v457 = vadd.f32 %v442, %v450
      %v458 = vadd.f32 %v443, %v450
      %v459 = vadd.f32 %v444, %v450
      %v460 = vmax.f32 %v452, 0.0
      %v461 = vmax.f32 %v453, 0.0
      %v462 = vmax.f32 %v454, 0.0
      %v463 = vmax.f32 %v455, 0.0
      %v464 = vmax.f32 %v456, 0.0
      %v465 = vmax.f32 %v457, 0.0
      %v466 = vmax.f32 %v458, 0.0
      %v467 = vmax.f32 %v459, 0.0
      %468 = vst [vmem:[#allocation2] sm:$0xff] 0.0
      %469 = vst [vmem:[#allocation2 + $0x8] sm:$0x3] 0.0
      %470 = vst [vmem:[#allocation2 + $0x10] sm:$0xff] 0.0
      %471 = vst [vmem:[#allocation2 + $0x18] sm:$0x3] 0.0
      %472 = vst [vmem:[#allocation2 + $0x20] sm:$0xff] 0.0
      %473 = vst [vmem:[#allocation2 + $0x28] sm:$0x3] 0.0
      %474 = vst [vmem:[#allocation2 + $0x30] sm:$0xff] 0.0
      %475 = vst [vmem:[#allocation2 + $0x38] sm:$0x3] 0.0
      %476 = vst [vmem:[#allocation2 + $0x40] sm:$0xff] 0.0
      %477 = vst [vmem:[#allocation2 + $0x48] sm:$0x3] 0.0
      %478 = vst [vmem:[#allocation2 + $0x50] sm:$0xff] 0.0
      %479 = vst [vmem:[#allocation2 + $0x58] sm:$0x3] 0.0
      %480 = vst [vmem:[#allocation2 + $0x60] sm:$0xff] 0.0
      %481 = vst [vmem:[#allocation2 + $0x68] sm:$0x3] 0.0
      %482 = vst [vmem:[#allocation2 + $0x70] sm:$0xff] 0.0
      %483 = vst [vmem:[#allocation2 + $0x78] sm:$0x3] 0.0
      %484 = vst [vmem:[#allocation2 + $0x80] sm:$0xff] 0.0
      %485 = vst [vmem:[#allocation2 + $0x88] sm:$0x3] 0.0
      %486 = vst [vmem:[#allocation2 + $0x90] sm:$0xff] 0.0
      %487 = vst [vmem:[#allocation2 + $0x98] sm:$0x3] 0.0
      %s488 = scalar_lea.vmem [#allocation2], 16
      %489 = vst [vmem:[%s488 + $0x1] sm:$0xff] %v460
      %490 = vst [vmem:[%s488 + $0x11] sm:$0xff] %v461
      %491 = vst [vmem:[%s488 + $0x21] sm:$0xff] %v462
      %492 = vst [vmem:[%s488 + $0x31] sm:$0xff] %v463
      %493 = vst [vmem:[%s488 + $0x41] sm:$0xff] %v464
      %494 = vst [vmem:[%s488 + $0x51] sm:$0xff] %v465
      %495 = vst [vmem:[%s488 + $0x61] sm:$0xff] %v466
      %496 = vst [vmem:[%s488 + $0x71] sm:$0xff] %v467
      %v497 = vld [vmem:[#allocation2] sm:$0xff]
      %v498 = vld [vmem:[#allocation2 + $0x10] sm:$0xff]
      %v499 = vld [vmem:[#allocation2 + $0x20] sm:$0xff]
      %v500 = vld [vmem:[#allocation2 + $0x30] sm:$0xff]
      %v501 = vld [vmem:[#allocation2 + $0x40] sm:$0xff]
      %v502 = vld [vmem:[#allocation2 + $0x50] sm:$0xff]
      %v503 = vld [vmem:[#allocation2 + $0x60] sm:$0xff]
      %v504 = vld [vmem:[#allocation2 + $0x70] sm:$0xff]
      %v505 = vpack.c.bf16 %v498, %v497
      %v506 = vpack.c.bf16 %v500, %v499
      %v507 = vpack.c.bf16 %v502, %v501
      %v508 = vpack.c.bf16 %v504, %v503
      %v509 = vld [vmem:[%s3] sm:$0xf]
      %v510 = vld [vmem:[%s3 + $0x4] sm:$0xf]
      %v511 = vld [vmem:[%s3 + $0x8] sm:$0xf]
      %v512 = vld [vmem:[%s3 + $0xc] sm:$0xf]
      %v513 = vld [vmem:[%s3 + $0x10] sm:$0xf]
      %v514 = vld [vmem:[%s3 + $0x14] sm:$0xf]
      %v515 = vld [vmem:[%s3 + $0x18] sm:$0xf]
      %v516 = vld [vmem:[%s3 + $0x1c] sm:$0xf]
      %v517 = vld [vmem:[%s3 + $0x20] sm:$0xf]
      %v518 = vld [vmem:[%s3 + $0x24] sm:$0xf]
      %v519 = vld [vmem:[%s3 + $0x28] sm:$0xf]
      %v520 = vld [vmem:[%s3 + $0x2c] sm:$0xf]
      %v521 = vld [vmem:[%s3 + $0x30] sm:$0xf]
      %v522 = vld [vmem:[%s3 + $0x34] sm:$0xf]
      %v523 = vld [vmem:[%s3 + $0x38] sm:$0xf]
      %v524 = vld [vmem:[%s3 + $0x3c] sm:$0xf]
      %v525 = vld [vmem:[#allocation2 + $0x1] sm:$0xff]
      %v526 = vld [vmem:[#allocation2 + $0x11] sm:$0xff]
      %v527 = vld [vmem:[#allocation2 + $0x21] sm:$0xff]
      %v528 = vld [vmem:[#allocation2 + $0x31] sm:$0xff]
      %v529 = vld [vmem:[#allocation2 + $0x41] sm:$0xff]
      %v530 = vld [vmem:[#allocation2 + $0x51] sm:$0xff]
      %v531 = vld [vmem:[#allocation2 + $0x61] sm:$0xff]
      %v532 = vld [vmem:[#allocation2 + $0x71] sm:$0xff]
      %v533 = vpack.c.bf16 %v526, %v525
      %v534 = vpack.c.bf16 %v528, %v527
      %v535 = vpack.c.bf16 %v530, %v529
      %v536 = vpack.c.bf16 %v532, %v531
      %s537 = scalar_lea.vmem %s3, 64
      %v538 = vld [vmem:[%s537] sm:$0xf]
      %v539 = vld [vmem:[%s537 + $0x4] sm:$0xf]
      %v540 = vld [vmem:[%s537 + $0x8] sm:$0xf]
      %v541 = vld [vmem:[%s537 + $0xc] sm:$0xf]
      %v542 = vld [vmem:[%s537 + $0x10] sm:$0xf]
      %v543 = vld [vmem:[%s537 + $0x14] sm:$0xf]
      %v544 = vld [vmem:[%s537 + $0x18] sm:$0xf]
      %v545 = vld [vmem:[%s537 + $0x1c] sm:$0xf]
      %v546 = vld [vmem:[%s537 + $0x20] sm:$0xf]
      %v547 = vld [vmem:[%s537 + $0x24] sm:$0xf]
      %v548 = vld [vmem:[%s537 + $0x28] sm:$0xf]
      %v549 = vld [vmem:[%s537 + $0x2c] sm:$0xf]
      %v550 = vld [vmem:[%s537 + $0x30] sm:$0xf]
      %v551 = vld [vmem:[%s537 + $0x34] sm:$0xf]
      %v552 = vld [vmem:[%s537 + $0x38] sm:$0xf]
      %v553 = vld [vmem:[%s537 + $0x3c] sm:$0xf]
      %v570 = vunpack.c.l.b16 %v538
      %v571 = vunpack.c.l.b16 %v539
      %v572 = vunpack.c.l.b16 %v540
      %v573 = vunpack.c.l.b16 %v541
      %v574 = vunpack.c.l.b16 %v542
      %v575 = vunpack.c.l.b16 %v543
      %v576 = vunpack.c.l.b16 %v544
      %v577 = vunpack.c.l.b16 %v545
      %v578 = vunpack.c.l.b16 %v546
      %v579 = vunpack.c.l.b16 %v547
      %v580 = vunpack.c.l.b16 %v548
      %v581 = vunpack.c.l.b16 %v549
      %v582 = vunpack.c.l.b16 %v550
      %v583 = vunpack.c.l.b16 %v551
      %v584 = vunpack.c.l.b16 %v552
      %v585 = vunpack.c.l.b16 %v553
      %v586 = vpack.c.b16 %v571, %v570
      %v587 = vpack.c.b16 %v573, %v572
      %v588 = vpack.c.b16 %v575, %v574
      %v589 = vpack.c.b16 %v577, %v576
      %v590 = vpack.c.b16 %v579, %v578
      %v591 = vpack.c.b16 %v581, %v580
      %v592 = vpack.c.b16 %v583, %v582
      %v593 = vpack.c.b16 %v585, %v584
      %602 = vmatprep.subr.bf16.mxu0 0
      %603 = vmatpush1.bf16.msra.mxu0 %v593
      %604 = vmatprep.subr.bf16.mxu0 0
      %605 = vmatpush1.bf16.msra.mxu0 %v592
      %606 = vmatprep.subr.bf16.mxu0 0
      %607 = vmatpush1.bf16.msra.mxu0 %v591
      %608 = vmatprep.subr.bf16.mxu0 0
      %609 = vmatpush1.bf16.msra.mxu0 %v590
      %610 = vmatprep.subr.bf16.mxu0 0
      %611 = vmatpush1.bf16.msra.mxu0 %v589
      %612 = vmatprep.subr.bf16.mxu0 0
      %613 = vmatpush1.bf16.msra.mxu0 %v588
      %614 = vmatprep.subr.bf16.mxu0 0
      %615 = vmatpush1.bf16.msra.mxu0 %v587
      %616 = vmatprep.subr.bf16.mxu0 0
      %617 = vmatpush1.bf16.msra.mxu0 %v586
      %618 = vmatprep.subr.bf16.mxu0 0
      %619 = vmatpush2.bf16.msra.mxu0 0
      %620 = vmatprep.subr.bf16.mxu0 0
      %621 = vmatpush2.bf16.msra.mxu0 0
      %622 = vmatprep.subr.bf16.mxu0 0
      %623 = vmatpush2.bf16.msra.mxu0 0
      %624 = vmatprep.subr.bf16.mxu0 0
      %625 = vmatpush2.bf16.msra.mxu0 0
      %626 = vmatprep.subr.bf16.mxu0 0
      %627 = vmatpush2.bf16.msra.mxu0 0
      %628 = vmatprep.subr.bf16.mxu0 0
      %629 = vmatpush2.bf16.msra.mxu0 0
      %630 = vmatprep.subr.bf16.mxu0 0
      %631 = vmatpush2.bf16.msra.mxu0 0
      %632 = vmatprep.subr.bf16.mxu0 0
      %633 = vmatpush2.bf16.msra.mxu0 0
      %634 = vmatprep.mubr.bf16.mxu0 0
      %635 = vmatmul.mubr.bf16.gmra.mxu0 %v533
      %v636 = vpop.f32.mrf.mxu0
      %v637 = vadd.f32 0.0, %v636
      %v638 = vpop.f32.mrf.mxu0
      %v639 = vpop.f32.mrf.mxu0
      %v640 = vadd.f32 0.0, %v639
      %v641 = vpop.f32.mrf.mxu0
      %642 = vmatprep.mubr.bf16.mxu0 0
      %643 = vmatmul.mubr.bf16.gmra.mxu0 %v534
      %v644 = vpop.f32.mrf.mxu0
      %v645 = vadd.f32 0.0, %v644
      %v646 = vpop.f32.mrf.mxu0
      %v647 = vpop.f32.mrf.mxu0
      %v648 = vadd.f32 0.0, %v647
      %v649 = vpop.f32.mrf.mxu0
      %650 = vmatprep.mubr.bf16.mxu0 0
      %651 = vmatmul.mubr.bf16.gmra.mxu0 %v535
      %v652 = vpop.f32.mrf.mxu0
      %v653 = vadd.f32 0.0, %v652
      %v654 = vpop.f32.mrf.mxu0
      %v655 = vpop.f32.mrf.mxu0
      %v656 = vadd.f32 0.0, %v655
      %v657 = vpop.f32.mrf.mxu0
      %658 = vmatprep.mubr.bf16.mxu0 0
      %659 = vmatmul.mubr.bf16.gmra.mxu0 %v536
      %v660 = vpop.f32.mrf.mxu0
      %v661 = vadd.f32 0.0, %v660
      %v662 = vpop.f32.mrf.mxu0
      %v663 = vpop.f32.mrf.mxu0
      %v664 = vadd.f32 0.0, %v663
      %v665 = vpop.f32.mrf.mxu0
      %666 = vdwg.mxu0
      %v683 = vunpack.c.l.b16 %v509
      %v684 = vunpack.c.l.b16 %v510
      %v685 = vunpack.c.l.b16 %v511
      %v686 = vunpack.c.l.b16 %v512
      %v687 = vunpack.c.l.b16 %v513
      %v688 = vunpack.c.l.b16 %v514
      %v689 = vunpack.c.l.b16 %v515
      %v690 = vunpack.c.l.b16 %v516
      %v691 = vunpack.c.l.b16 %v517
      %v692 = vunpack.c.l.b16 %v518
      %v693 = vunpack.c.l.b16 %v519
      %v694 = vunpack.c.l.b16 %v520
      %v695 = vunpack.c.l.b16 %v521
      %v696 = vunpack.c.l.b16 %v522
      %v697 = vunpack.c.l.b16 %v523
      %v698 = vunpack.c.l.b16 %v524
      %v699 = vpack.c.b16 %v684, %v683
      %v700 = vpack.c.b16 %v686, %v685
      %v701 = vpack.c.b16 %v688, %v687
      %v702 = vpack.c.b16 %v690, %v689
      %v703 = vpack.c.b16 %v692, %v691
      %v704 = vpack.c.b16 %v694, %v693
      %v705 = vpack.c.b16 %v696, %v695
      %v706 = vpack.c.b16 %v698, %v697
      %715 = vmatprep.subr.bf16.mxu0 0
      %716 = vmatpush1.bf16.msra.mxu0 %v706
      %717 = vmatprep.subr.bf16.mxu0 0
      %718 = vmatpush1.bf16.msra.mxu0 %v705
      %719 = vmatprep.subr.bf16.mxu0 0
      %720 = vmatpush1.bf16.msra.mxu0 %v704
      %721 = vmatprep.subr.bf16.mxu0 0
      %722 = vmatpush1.bf16.msra.mxu0 %v703
      %723 = vmatprep.subr.bf16.mxu0 0
      %724 = vmatpush1.bf16.msra.mxu0 %v702
      %725 = vmatprep.subr.bf16.mxu0 0
      %726 = vmatpush1.bf16.msra.mxu0 %v701
      %727 = vmatprep.subr.bf16.mxu0 0
      %728 = vmatpush1.bf16.msra.mxu0 %v700
      %729 = vmatprep.subr.bf16.mxu0 0
      %730 = vmatpush1.bf16.msra.mxu0 %v699
      %731 = vmatprep.subr.bf16.mxu0 0
      %732 = vmatpush2.bf16.msra.mxu0 0
      %733 = vmatprep.subr.bf16.mxu0 0
      %734 = vmatpush2.bf16.msra.mxu0 0
      %735 = vmatprep.subr.bf16.mxu0 0
      %736 = vmatpush2.bf16.msra.mxu0 0
      %737 = vmatprep.subr.bf16.mxu0 0
      %738 = vmatpush2.bf16.msra.mxu0 0
      %739 = vmatprep.subr.bf16.mxu0 0
      %740 = vmatpush2.bf16.msra.mxu0 0
      %741 = vmatprep.subr.bf16.mxu0 0
      %742 = vmatpush2.bf16.msra.mxu0 0
      %743 = vmatprep.subr.bf16.mxu0 0
      %744 = vmatpush2.bf16.msra.mxu0 0
      %745 = vmatprep.subr.bf16.mxu0 0
      %746 = vmatpush2.bf16.msra.mxu0 0
      %747 = vmatprep.mubr.bf16.mxu0 0
      %748 = vmatmul.mubr.bf16.gmra.mxu0 %v505
      %v749 = vpop.f32.mrf.mxu0
      %v750 = vadd.f32 %v637, %v749
      %v751 = vpop.f32.mrf.mxu0
      %v752 = vpop.f32.mrf.mxu0
      %v753 = vadd.f32 %v640, %v752
      %v754 = vpop.f32.mrf.mxu0
      %755 = vmatprep.mubr.bf16.mxu0 0
      %756 = vmatmul.mubr.bf16.gmra.mxu0 %v506
      %v757 = vpop.f32.mrf.mxu0
      %v758 = vadd.f32 %v645, %v757
      %v759 = vpop.f32.mrf.mxu0
      %v760 = vpop.f32.mrf.mxu0
      %v761 = vadd.f32 %v648, %v760
      %v762 = vpop.f32.mrf.mxu0
      %763 = vmatprep.mubr.bf16.mxu0 0
      %764 = vmatmul.mubr.bf16.gmra.mxu0 %v507
      %v765 = vpop.f32.mrf.mxu0
      %v766 = vadd.f32 %v653, %v765
      %v767 = vpop.f32.mrf.mxu0
      %v768 = vpop.f32.mrf.mxu0
      %v769 = vadd.f32 %v656, %v768
      %v770 = vpop.f32.mrf.mxu0
      %771 = vmatprep.mubr.bf16.mxu0 0
      %772 = vmatmul.mubr.bf16.gmra.mxu0 %v508
      %v773 = vpop.f32.mrf.mxu0
      %v774 = vadd.f32 %v661, %v773
      %v775 = vpop.f32.mrf.mxu0
      %v776 = vpop.f32.mrf.mxu0
      %v777 = vadd.f32 %v664, %v776
      %v778 = vpop.f32.mrf.mxu0
      %779 = vdwg.mxu0
      %v780 = vld [vmem:[#allocation2 + $0x2] sm:$0xff]
      %v781 = vld [vmem:[#allocation2 + $0x12] sm:$0xff]
      %v782 = vld [vmem:[#allocation2 + $0x22] sm:$0xff]
      %v783 = vld [vmem:[#allocation2 + $0x32] sm:$0xff]
      %v784 = vld [vmem:[#allocation2 + $0x42] sm:$0xff]
      %v785 = vld [vmem:[#allocation2 + $0x52] sm:$0xff]
      %v786 = vld [vmem:[#allocation2 + $0x62] sm:$0xff]
      %v787 = vld [vmem:[#allocation2 + $0x72] sm:$0xff]
      %v788 = vpack.c.bf16 %v781, %v780
      %v789 = vpack.c.bf16 %v783, %v782
      %v790 = vpack.c.bf16 %v785, %v784
      %v791 = vpack.c.bf16 %v787, %v786
      %s792 = scalar_lea.vmem %s3, 128
      %v793 = vld [vmem:[%s792] sm:$0xf]
      %v794 = vld [vmem:[%s792 + $0x4] sm:$0xf]
      %v795 = vld [vmem:[%s792 + $0x8] sm:$0xf]
      %v796 = vld [vmem:[%s792 + $0xc] sm:$0xf]
      %v797 = vld [vmem:[%s792 + $0x10] sm:$0xf]
      %v798 = vld [vmem:[%s792 + $0x14] sm:$0xf]
      %v799 = vld [vmem:[%s792 + $0x18] sm:$0xf]
      %v800 = vld [vmem:[%s792 + $0x1c] sm:$0xf]
      %v801 = vld [vmem:[%s792 + $0x20] sm:$0xf]
      %v802 = vld [vmem:[%s792 + $0x24] sm:$0xf]
      %v803 = vld [vmem:[%s792 + $0x28] sm:$0xf]
      %v804 = vld [vmem:[%s792 + $0x2c] sm:$0xf]
      %v805 = vld [vmem:[%s792 + $0x30] sm:$0xf]
      %v806 = vld [vmem:[%s792 + $0x34] sm:$0xf]
      %v807 = vld [vmem:[%s792 + $0x38] sm:$0xf]
      %v808 = vld [vmem:[%s792 + $0x3c] sm:$0xf]
      %v825 = vunpack.c.l.b16 %v793
      %v826 = vunpack.c.l.b16 %v794
      %v827 = vunpack.c.l.b16 %v795
      %v828 = vunpack.c.l.b16 %v796
      %v829 = vunpack.c.l.b16 %v797
      %v830 = vunpack.c.l.b16 %v798
      %v831 = vunpack.c.l.b16 %v799
      %v832 = vunpack.c.l.b16 %v800
      %v833 = vunpack.c.l.b16 %v801
      %v834 = vunpack.c.l.b16 %v802
      %v835 = vunpack.c.l.b16 %v803
      %v836 = vunpack.c.l.b16 %v804
      %v837 = vunpack.c.l.b16 %v805
      %v838 = vunpack.c.l.b16 %v806
      %v839 = vunpack.c.l.b16 %v807
      %v840 = vunpack.c.l.b16 %v808
      %v841 = vpack.c.b16 %v826, %v825
      %v842 = vpack.c.b16 %v828, %v827
      %v843 = vpack.c.b16 %v830, %v829
      %v844 = vpack.c.b16 %v832, %v831
      %v845 = vpack.c.b16 %v834, %v833
      %v846 = vpack.c.b16 %v836, %v835
      %v847 = vpack.c.b16 %v838, %v837
      %v848 = vpack.c.b16 %v840, %v839
      %857 = vmatprep.subr.bf16.mxu0 0
      %858 = vmatpush1.bf16.msra.mxu0 %v848
      %859 = vmatprep.subr.bf16.mxu0 0
      %860 = vmatpush1.bf16.msra.mxu0 %v847
      %861 = vmatprep.subr.bf16.mxu0 0
      %862 = vmatpush1.bf16.msra.mxu0 %v846
      %863 = vmatprep.subr.bf16.mxu0 0
      %864 = vmatpush1.bf16.msra.mxu0 %v845
      %865 = vmatprep.subr.bf16.mxu0 0
      %866 = vmatpush1.bf16.msra.mxu0 %v844
      %867 = vmatprep.subr.bf16.mxu0 0
      %868 = vmatpush1.bf16.msra.mxu0 %v843
      %869 = vmatprep.subr.bf16.mxu0 0
      %870 = vmatpush1.bf16.msra.mxu0 %v842
      %871 = vmatprep.subr.bf16.mxu0 0
      %872 = vmatpush1.bf16.msra.mxu0 %v841
      %873 = vmatprep.subr.bf16.mxu0 0
      %874 = vmatpush2.bf16.msra.mxu0 0
      %875 = vmatprep.subr.bf16.mxu0 0
      %876 = vmatpush2.bf16.msra.mxu0 0
      %877 = vmatprep.subr.bf16.mxu0 0
      %878 = vmatpush2.bf16.msra.mxu0 0
      %879 = vmatprep.subr.bf16.mxu0 0
      %880 = vmatpush2.bf16.msra.mxu0 0
      %881 = vmatprep.subr.bf16.mxu0 0
      %882 = vmatpush2.bf16.msra.mxu0 0
      %883 = vmatprep.subr.bf16.mxu0 0
      %884 = vmatpush2.bf16.msra.mxu0 0
      %885 = vmatprep.subr.bf16.mxu0 0
      %886 = vmatpush2.bf16.msra.mxu0 0
      %887 = vmatprep.subr.bf16.mxu0 0
      %888 = vmatpush2.bf16.msra.mxu0 0
      %889 = vmatprep.mubr.bf16.mxu0 0
      %890 = vmatmul.mubr.bf16.gmra.mxu0 %v788
      %v891 = vpop.f32.mrf.mxu0
      %v892 = vadd.f32 0.0, %v891
      %v893 = vpop.f32.mrf.mxu0
      %v894 = vpop.f32.mrf.mxu0
      %v895 = vadd.f32 0.0, %v894
      %v896 = vpop.f32.mrf.mxu0
      %897 = vmatprep.mubr.bf16.mxu0 0
      %898 = vmatmul.mubr.bf16.gmra.mxu0 %v789
      %v899 = vpop.f32.mrf.mxu0
      %v900 = vadd.f32 0.0, %v899
      %v901 = vpop.f32.mrf.mxu0
      %v902 = vpop.f32.mrf.mxu0
      %v903 = vadd.f32 0.0, %v902
      %v904 = vpop.f32.mrf.mxu0
      %905 = vmatprep.mubr.bf16.mxu0 0
      %906 = vmatmul.mubr.bf16.gmra.mxu0 %v790
      %v907 = vpop.f32.mrf.mxu0
      %v908 = vadd.f32 0.0, %v907
      %v909 = vpop.f32.mrf.mxu0
      %v910 = vpop.f32.mrf.mxu0
      %v911 = vadd.f32 0.0, %v910
      %v912 = vpop.f32.mrf.mxu0
      %913 = vmatprep.mubr.bf16.mxu0 0
      %914 = vmatmul.mubr.bf16.gmra.mxu0 %v791
      %v915 = vpop.f32.mrf.mxu0
      %v916 = vadd.f32 0.0, %v915
      %v917 = vpop.f32.mrf.mxu0
      %v918 = vpop.f32.mrf.mxu0
      %v919 = vadd.f32 0.0, %v918
      %v920 = vpop.f32.mrf.mxu0
      %921 = vdwg.mxu0
      %v922 = vadd.f32 %v750, %v892
      %v923 = vadd.f32 %v753, %v895
      %v924 = vadd.f32 %v758, %v900
      %v925 = vadd.f32 %v761, %v903
      %v926 = vadd.f32 %v766, %v908
      %v927 = vadd.f32 %v769, %v911
      %v928 = vadd.f32 %v774, %v916
      %v929 = vadd.f32 %v777, %v919
      %v930 = vld [vmem:[%s488] sm:$0xff]
      %v931 = vld [vmem:[%s488 + $0x10] sm:$0xff]
      %v932 = vld [vmem:[%s488 + $0x20] sm:$0xff]
      %v933 = vld [vmem:[%s488 + $0x30] sm:$0xff]
      %v934 = vld [vmem:[%s488 + $0x40] sm:$0xff]
      %v935 = vld [vmem:[%s488 + $0x50] sm:$0xff]
      %v936 = vld [vmem:[%s488 + $0x60] sm:$0xff]
      %v937 = vld [vmem:[%s488 + $0x70] sm:$0xff]
      %v938 = vpack.c.bf16 %v931, %v930
      %v939 = vpack.c.bf16 %v933, %v932
      %v940 = vpack.c.bf16 %v935, %v934
      %v941 = vpack.c.bf16 %v937, %v936
      %s942 = scalar_lea.vmem %s3, 192
      %v943 = vld [vmem:[%s942] sm:$0xf]
      %v944 = vld [vmem:[%s942 + $0x4] sm:$0xf]
      %v945 = vld [vmem:[%s942 + $0x8] sm:$0xf]
      %v946 = vld [vmem:[%s942 + $0xc] sm:$0xf]
      %v947 = vld [vmem:[%s942 + $0x10] sm:$0xf]
      %v948 = vld [vmem:[%s942 + $0x14] sm:$0xf]
      %v949 = vld [vmem:[%s942 + $0x18] sm:$0xf]
      %v950 = vld [vmem:[%s942 + $0x1c] sm:$0xf]
      %v951 = vld [vmem:[%s942 + $0x20] sm:$0xf]
      %v952 = vld [vmem:[%s942 + $0x24] sm:$0xf]
      %v953 = vld [vmem:[%s942 + $0x28] sm:$0xf]
      %v954 = vld [vmem:[%s942 + $0x2c] sm:$0xf]
      %v955 = vld [vmem:[%s942 + $0x30] sm:$0xf]
      %v956 = vld [vmem:[%s942 + $0x34] sm:$0xf]
      %v957 = vld [vmem:[%s942 + $0x38] sm:$0xf]
      %v958 = vld [vmem:[%s942 + $0x3c] sm:$0xf]
      %v975 = vunpack.c.l.b16 %v943
      %v976 = vunpack.c.l.b16 %v944
      %v977 = vunpack.c.l.b16 %v945
      %v978 = vunpack.c.l.b16 %v946
      %v979 = vunpack.c.l.b16 %v947
      %v980 = vunpack.c.l.b16 %v948
      %v981 = vunpack.c.l.b16 %v949
      %v982 = vunpack.c.l.b16 %v950
      %v983 = vunpack.c.l.b16 %v951
      %v984 = vunpack.c.l.b16 %v952
      %v985 = vunpack.c.l.b16 %v953
      %v986 = vunpack.c.l.b16 %v954
      %v987 = vunpack.c.l.b16 %v955
      %v988 = vunpack.c.l.b16 %v956
      %v989 = vunpack.c.l.b16 %v957
      %v990 = vunpack.c.l.b16 %v958
      %v991 = vpack.c.b16 %v976, %v975
      %v992 = vpack.c.b16 %v978, %v977
      %v993 = vpack.c.b16 %v980, %v979
      %v994 = vpack.c.b16 %v982, %v981
      %v995 = vpack.c.b16 %v984, %v983
      %v996 = vpack.c.b16 %v986, %v985
      %v997 = vpack.c.b16 %v988, %v987
      %v998 = vpack.c.b16 %v990, %v989
      %1007 = vmatprep.subr.bf16.mxu0 0
      %1008 = vmatpush1.bf16.msra.mxu0 %v998
      %1009 = vmatprep.subr.bf16.mxu0 0
      %1010 = vmatpush1.bf16.msra.mxu0 %v997
      %1011 = vmatprep.subr.bf16.mxu0 0
      %1012 = vmatpush1.bf16.msra.mxu0 %v996
      %1013 = vmatprep.subr.bf16.mxu0 0
      %1014 = vmatpush1.bf16.msra.mxu0 %v995
      %1015 = vmatprep.subr.bf16.mxu0 0
      %1016 = vmatpush1.bf16.msra.mxu0 %v994
      %1017 = vmatprep.subr.bf16.mxu0 0
      %1018 = vmatpush1.bf16.msra.mxu0 %v993
      %1019 = vmatprep.subr.bf16.mxu0 0
      %1020 = vmatpush1.bf16.msra.mxu0 %v992
      %1021 = vmatprep.subr.bf16.mxu0 0
      %1022 = vmatpush1.bf16.msra.mxu0 %v991
      %1023 = vmatprep.subr.bf16.mxu0 0
      %1024 = vmatpush2.bf16.msra.mxu0 0
      %1025 = vmatprep.subr.bf16.mxu0 0
      %1026 = vmatpush2.bf16.msra.mxu0 0
      %1027 = vmatprep.subr.bf16.mxu0 0
      %1028 = vmatpush2.bf16.msra.mxu0 0
      %1029 = vmatprep.subr.bf16.mxu0 0
      %1030 = vmatpush2.bf16.msra.mxu0 0
      %1031 = vmatprep.subr.bf16.mxu0 0
      %1032 = vmatpush2.bf16.msra.mxu0 0
      %1033 = vmatprep.subr.bf16.mxu0 0
      %1034 = vmatpush2.bf16.msra.mxu0 0
      %1035 = vmatprep.subr.bf16.mxu0 0
      %1036 = vmatpush2.bf16.msra.mxu0 0
      %1037 = vmatprep.subr.bf16.mxu0 0
      %1038 = vmatpush2.bf16.msra.mxu0 0
      %1039 = vmatprep.mubr.bf16.mxu0 0
      %1040 = vmatmul.mubr.bf16.gmra.mxu0 %v938
      %v1041 = vpop.f32.mrf.mxu0
      %v1042 = vadd.f32 0.0, %v1041
      %v1043 = vpop.f32.mrf.mxu0
      %v1044 = vpop.f32.mrf.mxu0
      %v1045 = vadd.f32 0.0, %v1044
      %v1046 = vpop.f32.mrf.mxu0
      %1047 = vmatprep.mubr.bf16.mxu0 0
      %1048 = vmatmul.mubr.bf16.gmra.mxu0 %v939
      %v1049 = vpop.f32.mrf.mxu0
      %v1050 = vadd.f32 0.0, %v1049
      %v1051 = vpop.f32.mrf.mxu0
      %v1052 = vpop.f32.mrf.mxu0
      %v1053 = vadd.f32 0.0, %v1052
      %v1054 = vpop.f32.mrf.mxu0
      %1055 = vmatprep.mubr.bf16.mxu0 0
      %1056 = vmatmul.mubr.bf16.gmra.mxu0 %v940
      %v1057 = vpop.f32.mrf.mxu0
      %v1058 = vadd.f32 0.0, %v1057
      %v1059 = vpop.f32.mrf.mxu0
      %v1060 = vpop.f32.mrf.mxu0
      %v1061 = vadd.f32 0.0, %v1060
      %v1062 = vpop.f32.mrf.mxu0
      %1063 = vmatprep.mubr.bf16.mxu0 0
      %1064 = vmatmul.mubr.bf16.gmra.mxu0 %v941
      %v1065 = vpop.f32.mrf.mxu0
      %v1066 = vadd.f32 0.0, %v1065
      %v1067 = vpop.f32.mrf.mxu0
      %v1068 = vpop.f32.mrf.mxu0
      %v1069 = vadd.f32 0.0, %v1068
      %v1070 = vpop.f32.mrf.mxu0
      %1071 = vdwg.mxu0
      %v1072 = vadd.f32 %v922, %v1042
      %v1073 = vadd.f32 %v923, %v1045
      %v1074 = vadd.f32 %v924, %v1050
      %v1075 = vadd.f32 %v925, %v1053
      %v1076 = vadd.f32 %v926, %v1058
      %v1077 = vadd.f32 %v927, %v1061
      %v1078 = vadd.f32 %v928, %v1066
      %v1079 = vadd.f32 %v929, %v1069
      %v1080 = vld [vmem:[%s488 + $0x1] sm:$0xff]
      %v1081 = vld [vmem:[%s488 + $0x11] sm:$0xff]
      %v1082 = vld [vmem:[%s488 + $0x21] sm:$0xff]
      %v1083 = vld [vmem:[%s488 + $0x31] sm:$0xff]
      %v1084 = vld [vmem:[%s488 + $0x41] sm:$0xff]
      %v1085 = vld [vmem:[%s488 + $0x51] sm:$0xff]
      %v1086 = vld [vmem:[%s488 + $0x61] sm:$0xff]
      %v1087 = vld [vmem:[%s488 + $0x71] sm:$0xff]
      %v1088 = vpack.c.bf16 %v1081, %v1080
      %v1089 = vpack.c.bf16 %v1083, %v1082
      %v1090 = vpack.c.bf16 %v1085, %v1084
      %v1091 = vpack.c.bf16 %v1087, %v1086
      %s1092 = scalar_lea.vmem %s3, 256
      %v1093 = vld [vmem:[%s1092] sm:$0xf]
      %v1094 = vld [vmem:[%s1092 + $0x4] sm:$0xf]
      %v1095 = vld [vmem:[%s1092 + $0x8] sm:$0xf]
      %v1096 = vld [vmem:[%s1092 + $0xc] sm:$0xf]
      %v1097 = vld [vmem:[%s1092 + $0x10] sm:$0xf]
      %v1098 = vld [vmem:[%s1092 + $0x14] sm:$0xf]
      %v1099 = vld [vmem:[%s1092 + $0x18] sm:$0xf]
      %v1100 = vld [vmem:[%s1092 + $0x1c] sm:$0xf]
      %v1101 = vld [vmem:[%s1092 + $0x20] sm:$0xf]
      %v1102 = vld [vmem:[%s1092 + $0x24] sm:$0xf]
      %v1103 = vld [vmem:[%s1092 + $0x28] sm:$0xf]
      %v1104 = vld [vmem:[%s1092 + $0x2c] sm:$0xf]
      %v1105 = vld [vmem:[%s1092 + $0x30] sm:$0xf]
      %v1106 = vld [vmem:[%s1092 + $0x34] sm:$0xf]
      %v1107 = vld [vmem:[%s1092 + $0x38] sm:$0xf]
      %v1108 = vld [vmem:[%s1092 + $0x3c] sm:$0xf]
      %v1125 = vunpack.c.l.b16 %v1093
      %v1126 = vunpack.c.l.b16 %v1094
      %v1127 = vunpack.c.l.b16 %v1095
      %v1128 = vunpack.c.l.b16 %v1096
      %v1129 = vunpack.c.l.b16 %v1097
      %v1130 = vunpack.c.l.b16 %v1098
      %v1131 = vunpack.c.l.b16 %v1099
      %v1132 = vunpack.c.l.b16 %v1100
      %v1133 = vunpack.c.l.b16 %v1101
      %v1134 = vunpack.c.l.b16 %v1102
      %v1135 = vunpack.c.l.b16 %v1103
      %v1136 = vunpack.c.l.b16 %v1104
      %v1137 = vunpack.c.l.b16 %v1105
      %v1138 = vunpack.c.l.b16 %v1106
      %v1139 = vunpack.c.l.b16 %v1107
      %v1140 = vunpack.c.l.b16 %v1108
      %v1141 = vpack.c.b16 %v1126, %v1125
      %v1142 = vpack.c.b16 %v1128, %v1127
      %v1143 = vpack.c.b16 %v1130, %v1129
      %v1144 = vpack.c.b16 %v1132, %v1131
      %v1145 = vpack.c.b16 %v1134, %v1133
      %v1146 = vpack.c.b16 %v1136, %v1135
      %v1147 = vpack.c.b16 %v1138, %v1137
      %v1148 = vpack.c.b16 %v1140, %v1139
      %1157 = vmatprep.subr.bf16.mxu0 0
      %1158 = vmatpush1.bf16.msra.mxu0 %v1148
      %1159 = vmatprep.subr.bf16.mxu0 0
      %1160 = vmatpush1.bf16.msra.mxu0 %v1147
      %1161 = vmatprep.subr.bf16.mxu0 0
      %1162 = vmatpush1.bf16.msra.mxu0 %v1146
      %1163 = vmatprep.subr.bf16.mxu0 0
      %1164 = vmatpush1.bf16.msra.mxu0 %v1145
      %1165 = vmatprep.subr.bf16.mxu0 0
      %1166 = vmatpush1.bf16.msra.mxu0 %v1144
      %1167 = vmatprep.subr.bf16.mxu0 0
      %1168 = vmatpush1.bf16.msra.mxu0 %v1143
      %1169 = vmatprep.subr.bf16.mxu0 0
      %1170 = vmatpush1.bf16.msra.mxu0 %v1142
      %1171 = vmatprep.subr.bf16.mxu0 0
      %1172 = vmatpush1.bf16.msra.mxu0 %v1141
      %1173 = vmatprep.subr.bf16.mxu0 0
      %1174 = vmatpush2.bf16.msra.mxu0 0
      %1175 = vmatprep.subr.bf16.mxu0 0
      %1176 = vmatpush2.bf16.msra.mxu0 0
      %1177 = vmatprep.subr.bf16.mxu0 0
      %1178 = vmatpush2.bf16.msra.mxu0 0
      %1179 = vmatprep.subr.bf16.mxu0 0
      %1180 = vmatpush2.bf16.msra.mxu0 0
      %1181 = vmatprep.subr.bf16.mxu0 0
      %1182 = vmatpush2.bf16.msra.mxu0 0
      %1183 = vmatprep.subr.bf16.mxu0 0
      %1184 = vmatpush2.bf16.msra.mxu0 0
      %1185 = vmatprep.subr.bf16.mxu0 0
      %1186 = vmatpush2.bf16.msra.mxu0 0
      %1187 = vmatprep.subr.bf16.mxu0 0
      %1188 = vmatpush2.bf16.msra.mxu0 0
      %1189 = vmatprep.mubr.bf16.mxu0 0
      %1190 = vmatmul.mubr.bf16.gmra.mxu0 %v1088
      %v1191 = vpop.f32.mrf.mxu0
      %v1192 = vadd.f32 0.0, %v1191
      %v1193 = vpop.f32.mrf.mxu0
      %v1194 = vpop.f32.mrf.mxu0
      %v1195 = vadd.f32 0.0, %v1194
      %v1196 = vpop.f32.mrf.mxu0
      %1197 = vmatprep.mubr.bf16.mxu0 0
      %1198 = vmatmul.mubr.bf16.gmra.mxu0 %v1089
      %v1199 = vpop.f32.mrf.mxu0
      %v1200 = vadd.f32 0.0, %v1199
      %v1201 = vpop.f32.mrf.mxu0
      %v1202 = vpop.f32.mrf.mxu0
      %v1203 = vadd.f32 0.0, %v1202
      %v1204 = vpop.f32.mrf.mxu0
      %1205 = vmatprep.mubr.bf16.mxu0 0
      %1206 = vmatmul.mubr.bf16.gmra.mxu0 %v1090
      %v1207 = vpop.f32.mrf.mxu0
      %v1208 = vadd.f32 0.0, %v1207
      %v1209 = vpop.f32.mrf.mxu0
      %v1210 = vpop.f32.mrf.mxu0
      %v1211 = vadd.f32 0.0, %v1210
      %v1212 = vpop.f32.mrf.mxu0
      %1213 = vmatprep.mubr.bf16.mxu0 0
      %1214 = vmatmul.mubr.bf16.gmra.mxu0 %v1091
      %v1215 = vpop.f32.mrf.mxu0
      %v1216 = vadd.f32 0.0, %v1215
      %v1217 = vpop.f32.mrf.mxu0
      %v1218 = vpop.f32.mrf.mxu0
      %v1219 = vadd.f32 0.0, %v1218
      %v1220 = vpop.f32.mrf.mxu0
      %1221 = vdwg.mxu0
      %v1222 = vadd.f32 %v1072, %v1192
      %v1223 = vadd.f32 %v1073, %v1195
      %v1224 = vadd.f32 %v1074, %v1200
      %v1225 = vadd.f32 %v1075, %v1203
      %v1226 = vadd.f32 %v1076, %v1208
      %v1227 = vadd.f32 %v1077, %v1211
      %v1228 = vadd.f32 %v1078, %v1216
      %v1229 = vadd.f32 %v1079, %v1219
      %v1230 = vld [vmem:[%s488 + $0x2] sm:$0xff]
      %v1231 = vld [vmem:[%s488 + $0x12] sm:$0xff]
      %v1232 = vld [vmem:[%s488 + $0x22] sm:$0xff]
      %v1233 = vld [vmem:[%s488 + $0x32] sm:$0xff]
      %v1234 = vld [vmem:[%s488 + $0x42] sm:$0xff]
      %v1235 = vld [vmem:[%s488 + $0x52] sm:$0xff]
      %v1236 = vld [vmem:[%s488 + $0x62] sm:$0xff]
      %v1237 = vld [vmem:[%s488 + $0x72] sm:$0xff]
      %v1238 = vpack.c.bf16 %v1231, %v1230
      %v1239 = vpack.c.bf16 %v1233, %v1232
      %v1240 = vpack.c.bf16 %v1235, %v1234
      %v1241 = vpack.c.bf16 %v1237, %v1236
      %s1242 = scalar_lea.vmem %s3, 320
      %v1243 = vld [vmem:[%s1242] sm:$0xf]
      %v1244 = vld [vmem:[%s1242 + $0x4] sm:$0xf]
      %v1245 = vld [vmem:[%s1242 + $0x8] sm:$0xf]
      %v1246 = vld [vmem:[%s1242 + $0xc] sm:$0xf]
      %v1247 = vld [vmem:[%s1242 + $0x10] sm:$0xf]
      %v1248 = vld [vmem:[%s1242 + $0x14] sm:$0xf]
      %v1249 = vld [vmem:[%s1242 + $0x18] sm:$0xf]
      %v1250 = vld [vmem:[%s1242 + $0x1c] sm:$0xf]
      %v1251 = vld [vmem:[%s1242 + $0x20] sm:$0xf]
      %v1252 = vld [vmem:[%s1242 + $0x24] sm:$0xf]
      %v1253 = vld [vmem:[%s1242 + $0x28] sm:$0xf]
      %v1254 = vld [vmem:[%s1242 + $0x2c] sm:$0xf]
      %v1255 = vld [vmem:[%s1242 + $0x30] sm:$0xf]
      %v1256 = vld [vmem:[%s1242 + $0x34] sm:$0xf]
      %v1257 = vld [vmem:[%s1242 + $0x38] sm:$0xf]
      %v1258 = vld [vmem:[%s1242 + $0x3c] sm:$0xf]
      %v1275 = vunpack.c.l.b16 %v1243
      %v1276 = vunpack.c.l.b16 %v1244
      %v1277 = vunpack.c.l.b16 %v1245
      %v1278 = vunpack.c.l.b16 %v1246
      %v1279 = vunpack.c.l.b16 %v1247
      %v1280 = vunpack.c.l.b16 %v1248
      %v1281 = vunpack.c.l.b16 %v1249
      %v1282 = vunpack.c.l.b16 %v1250
      %v1283 = vunpack.c.l.b16 %v1251
      %v1284 = vunpack.c.l.b16 %v1252
      %v1285 = vunpack.c.l.b16 %v1253
      %v1286 = vunpack.c.l.b16 %v1254
      %v1287 = vunpack.c.l.b16 %v1255
      %v1288 = vunpack.c.l.b16 %v1256
      %v1289 = vunpack.c.l.b16 %v1257
      %v1290 = vunpack.c.l.b16 %v1258
      %v1291 = vpack.c.b16 %v1276, %v1275
      %v1292 = vpack.c.b16 %v1278, %v1277
      %v1293 = vpack.c.b16 %v1280, %v1279
      %v1294 = vpack.c.b16 %v1282, %v1281
      %v1295 = vpack.c.b16 %v1284, %v1283
      %v1296 = vpack.c.b16 %v1286, %v1285
      %v1297 = vpack.c.b16 %v1288, %v1287
      %v1298 = vpack.c.b16 %v1290, %v1289
      %1307 = vmatprep.subr.bf16.mxu0 0
      %1308 = vmatpush1.bf16.msra.mxu0 %v1298
      %1309 = vmatprep.subr.bf16.mxu0 0
      %1310 = vmatpush1.bf16.msra.mxu0 %v1297
      %1311 = vmatprep.subr.bf16.mxu0 0
      %1312 = vmatpush1.bf16.msra.mxu0 %v1296
      %1313 = vmatprep.subr.bf16.mxu0 0
      %1314 = vmatpush1.bf16.msra.mxu0 %v1295
      %1315 = vmatprep.subr.bf16.mxu0 0
      %1316 = vmatpush1.bf16.msra.mxu0 %v1294
      %1317 = vmatprep.subr.bf16.mxu0 0
      %1318 = vmatpush1.bf16.msra.mxu0 %v1293
      %1319 = vmatprep.subr.bf16.mxu0 0
      %1320 = vmatpush1.bf16.msra.mxu0 %v1292
      %1321 = vmatprep.subr.bf16.mxu0 0
      %1322 = vmatpush1.bf16.msra.mxu0 %v1291
      %1323 = vmatprep.subr.bf16.mxu0 0
      %1324 = vmatpush2.bf16.msra.mxu0 0
      %1325 = vmatprep.subr.bf16.mxu0 0
      %1326 = vmatpush2.bf16.msra.mxu0 0
      %1327 = vmatprep.subr.bf16.mxu0 0
      %1328 = vmatpush2.bf16.msra.mxu0 0
      %1329 = vmatprep.subr.bf16.mxu0 0
      %1330 = vmatpush2.bf16.msra.mxu0 0
      %1331 = vmatprep.subr.bf16.mxu0 0
      %1332 = vmatpush2.bf16.msra.mxu0 0
      %1333 = vmatprep.subr.bf16.mxu0 0
      %1334 = vmatpush2.bf16.msra.mxu0 0
      %1335 = vmatprep.subr.bf16.mxu0 0
      %1336 = vmatpush2.bf16.msra.mxu0 0
      %1337 = vmatprep.subr.bf16.mxu0 0
      %1338 = vmatpush2.bf16.msra.mxu0 0
      %1339 = vmatprep.mubr.bf16.mxu0 0
      %1340 = vmatmul.mubr.bf16.gmra.mxu0 %v1238
      %v1341 = vpop.f32.mrf.mxu0
      %v1342 = vadd.f32 0.0, %v1341
      %v1343 = vpop.f32.mrf.mxu0
      %v1344 = vpop.f32.mrf.mxu0
      %v1345 = vadd.f32 0.0, %v1344
      %v1346 = vpop.f32.mrf.mxu0
      %1347 = vmatprep.mubr.bf16.mxu0 0
      %1348 = vmatmul.mubr.bf16.gmra.mxu0 %v1239
      %v1349 = vpop.f32.mrf.mxu0
      %v1350 = vadd.f32 0.0, %v1349
      %v1351 = vpop.f32.mrf.mxu0
      %v1352 = vpop.f32.mrf.mxu0
      %v1353 = vadd.f32 0.0, %v1352
      %v1354 = vpop.f32.mrf.mxu0
      %1355 = vmatprep.mubr.bf16.mxu0 0
      %1356 = vmatmul.mubr.bf16.gmra.mxu0 %v1240
      %v1357 = vpop.f32.mrf.mxu0
      %v1358 = vadd.f32 0.0, %v1357
      %v1359 = vpop.f32.mrf.mxu0
      %v1360 = vpop.f32.mrf.mxu0
      %v1361 = vadd.f32 0.0, %v1360
      %v1362 = vpop.f32.mrf.mxu0
      %1363 = vmatprep.mubr.bf16.mxu0 0
      %1364 = vmatmul.mubr.bf16.gmra.mxu0 %v1241
      %v1365 = vpop.f32.mrf.mxu0
      %v1366 = vadd.f32 0.0, %v1365
      %v1367 = vpop.f32.mrf.mxu0
      %v1368 = vpop.f32.mrf.mxu0
      %v1369 = vadd.f32 0.0, %v1368
      %v1370 = vpop.f32.mrf.mxu0
      %1371 = vdwg.mxu0
      %v1372 = vadd.f32 %v1222, %v1342
      %v1373 = vadd.f32 %v1223, %v1345
      %v1374 = vadd.f32 %v1224, %v1350
      %v1375 = vadd.f32 %v1225, %v1353
      %v1376 = vadd.f32 %v1226, %v1358
      %v1377 = vadd.f32 %v1227, %v1361
      %v1378 = vadd.f32 %v1228, %v1366
      %v1379 = vadd.f32 %v1229, %v1369
      %s1380 = scalar_lea.vmem [#allocation2], 32
      %v1381 = vld [vmem:[%s1380] sm:$0xff]
      %v1382 = vld [vmem:[%s1380 + $0x10] sm:$0xff]
      %v1383 = vld [vmem:[%s1380 + $0x20] sm:$0xff]
      %v1384 = vld [vmem:[%s1380 + $0x30] sm:$0xff]
      %v1385 = vld [vmem:[%s1380 + $0x40] sm:$0xff]
      %v1386 = vld [vmem:[%s1380 + $0x50] sm:$0xff]
      %v1387 = vld [vmem:[%s1380 + $0x60] sm:$0xff]
      %v1388 = vld [vmem:[%s1380 + $0x70] sm:$0xff]
      %v1389 = vpack.c.bf16 %v1382, %v1381
      %v1390 = vpack.c.bf16 %v1384, %v1383
      %v1391 = vpack.c.bf16 %v1386, %v1385
      %v1392 = vpack.c.bf16 %v1388, %v1387
      %s1393 = scalar_lea.vmem %s3, 384
      %v1394 = vld [vmem:[%s1393] sm:$0xf]
      %v1395 = vld [vmem:[%s1393 + $0x4] sm:$0xf]
      %v1396 = vld [vmem:[%s1393 + $0x8] sm:$0xf]
      %v1397 = vld [vmem:[%s1393 + $0xc] sm:$0xf]
      %v1398 = vld [vmem:[%s1393 + $0x10] sm:$0xf]
      %v1399 = vld [vmem:[%s1393 + $0x14] sm:$0xf]
      %v1400 = vld [vmem:[%s1393 + $0x18] sm:$0xf]
      %v1401 = vld [vmem:[%s1393 + $0x1c] sm:$0xf]
      %v1402 = vld [vmem:[%s1393 + $0x20] sm:$0xf]
      %v1403 = vld [vmem:[%s1393 + $0x24] sm:$0xf]
      %v1404 = vld [vmem:[%s1393 + $0x28] sm:$0xf]
      %v1405 = vld [vmem:[%s1393 + $0x2c] sm:$0xf]
      %v1406 = vld [vmem:[%s1393 + $0x30] sm:$0xf]
      %v1407 = vld [vmem:[%s1393 + $0x34] sm:$0xf]
      %v1408 = vld [vmem:[%s1393 + $0x38] sm:$0xf]
      %v1409 = vld [vmem:[%s1393 + $0x3c] sm:$0xf]
      %v1426 = vunpack.c.l.b16 %v1394
      %v1427 = vunpack.c.l.b16 %v1395
      %v1428 = vunpack.c.l.b16 %v1396
      %v1429 = vunpack.c.l.b16 %v1397
      %v1430 = vunpack.c.l.b16 %v1398
      %v1431 = vunpack.c.l.b16 %v1399
      %v1432 = vunpack.c.l.b16 %v1400
      %v1433 = vunpack.c.l.b16 %v1401
      %v1434 = vunpack.c.l.b16 %v1402
      %v1435 = vunpack.c.l.b16 %v1403
      %v1436 = vunpack.c.l.b16 %v1404
      %v1437 = vunpack.c.l.b16 %v1405
      %v1438 = vunpack.c.l.b16 %v1406
      %v1439 = vunpack.c.l.b16 %v1407
      %v1440 = vunpack.c.l.b16 %v1408
      %v1441 = vunpack.c.l.b16 %v1409
      %v1442 = vpack.c.b16 %v1427, %v1426
      %v1443 = vpack.c.b16 %v1429, %v1428
      %v1444 = vpack.c.b16 %v1431, %v1430
      %v1445 = vpack.c.b16 %v1433, %v1432
      %v1446 = vpack.c.b16 %v1435, %v1434
      %v1447 = vpack.c.b16 %v1437, %v1436
      %v1448 = vpack.c.b16 %v1439, %v1438
      %v1449 = vpack.c.b16 %v1441, %v1440
      %1458 = vmatprep.subr.bf16.mxu0 0
      %1459 = vmatpush1.bf16.msra.mxu0 %v1449
      %1460 = vmatprep.subr.bf16.mxu0 0
      %1461 = vmatpush1.bf16.msra.mxu0 %v1448
      %1462 = vmatprep.subr.bf16.mxu0 0
      %1463 = vmatpush1.bf16.msra.mxu0 %v1447
      %1464 = vmatprep.subr.bf16.mxu0 0
      %1465 = vmatpush1.bf16.msra.mxu0 %v1446
      %1466 = vmatprep.subr.bf16.mxu0 0
      %1467 = vmatpush1.bf16.msra.mxu0 %v1445
      %1468 = vmatprep.subr.bf16.mxu0 0
      %1469 = vmatpush1.bf16.msra.mxu0 %v1444
      %1470 = vmatprep.subr.bf16.mxu0 0
      %1471 = vmatpush1.bf16.msra.mxu0 %v1443
      %1472 = vmatprep.subr.bf16.mxu0 0
      %1473 = vmatpush1.bf16.msra.mxu0 %v1442
      %1474 = vmatprep.subr.bf16.mxu0 0
      %1475 = vmatpush2.bf16.msra.mxu0 0
      %1476 = vmatprep.subr.bf16.mxu0 0
      %1477 = vmatpush2.bf16.msra.mxu0 0
      %1478 = vmatprep.subr.bf16.mxu0 0
      %1479 = vmatpush2.bf16.msra.mxu0 0
      %1480 = vmatprep.subr.bf16.mxu0 0
      %1481 = vmatpush2.bf16.msra.mxu0 0
      %1482 = vmatprep.subr.bf16.mxu0 0
      %1483 = vmatpush2.bf16.msra.mxu0 0
      %1484 = vmatprep.subr.bf16.mxu0 0
      %1485 = vmatpush2.bf16.msra.mxu0 0
      %1486 = vmatprep.subr.bf16.mxu0 0
      %1487 = vmatpush2.bf16.msra.mxu0 0
      %1488 = vmatprep.subr.bf16.mxu0 0
      %1489 = vmatpush2.bf16.msra.mxu0 0
      %1490 = vmatprep.mubr.bf16.mxu0 0
      %1491 = vmatmul.mubr.bf16.gmra.mxu0 %v1389
      %v1492 = vpop.f32.mrf.mxu0
      %v1493 = vadd.f32 0.0, %v1492
      %v1494 = vpop.f32.mrf.mxu0
      %v1495 = vpop.f32.mrf.mxu0
      %v1496 = vadd.f32 0.0, %v1495
      %v1497 = vpop.f32.mrf.mxu0
      %1498 = vmatprep.mubr.bf16.mxu0 0
      %1499 = vmatmul.mubr.bf16.gmra.mxu0 %v1390
      %v1500 = vpop.f32.mrf.mxu0
      %v1501 = vadd.f32 0.0, %v1500
      %v1502 = vpop.f32.mrf.mxu0
      %v1503 = vpop.f32.mrf.mxu0
      %v1504 = vadd.f32 0.0, %v1503
      %v1505 = vpop.f32.mrf.mxu0
      %1506 = vmatprep.mubr.bf16.mxu0 0
      %1507 = vmatmul.mubr.bf16.gmra.mxu0 %v1391
      %v1508 = vpop.f32.mrf.mxu0
      %v1509 = vadd.f32 0.0, %v1508
      %v1510 = vpop.f32.mrf.mxu0
      %v1511 = vpop.f32.mrf.mxu0
      %v1512 = vadd.f32 0.0, %v1511
      %v1513 = vpop.f32.mrf.mxu0
      %1514 = vmatprep.mubr.bf16.mxu0 0
      %1515 = vmatmul.mubr.bf16.gmra.mxu0 %v1392
      %v1516 = vpop.f32.mrf.mxu0
      %v1517 = vadd.f32 0.0, %v1516
      %v1518 = vpop.f32.mrf.mxu0
      %v1519 = vpop.f32.mrf.mxu0
      %v1520 = vadd.f32 0.0, %v1519
      %v1521 = vpop.f32.mrf.mxu0
      %1522 = vdwg.mxu0
      %v1523 = vadd.f32 %v1372, %v1493
      %v1524 = vadd.f32 %v1373, %v1496
      %v1525 = vadd.f32 %v1374, %v1501
      %v1526 = vadd.f32 %v1375, %v1504
      %v1527 = vadd.f32 %v1376, %v1509
      %v1528 = vadd.f32 %v1377, %v1512
      %v1529 = vadd.f32 %v1378, %v1517
      %v1530 = vadd.f32 %v1379, %v1520
      %v1531 = vld [vmem:[%s1380 + $0x1] sm:$0xff]
      %v1532 = vld [vmem:[%s1380 + $0x11] sm:$0xff]
      %v1533 = vld [vmem:[%s1380 + $0x21] sm:$0xff]
      %v1534 = vld [vmem:[%s1380 + $0x31] sm:$0xff]
      %v1535 = vld [vmem:[%s1380 + $0x41] sm:$0xff]
      %v1536 = vld [vmem:[%s1380 + $0x51] sm:$0xff]
      %v1537 = vld [vmem:[%s1380 + $0x61] sm:$0xff]
      %v1538 = vld [vmem:[%s1380 + $0x71] sm:$0xff]
      %v1539 = vpack.c.bf16 %v1532, %v1531
      %v1540 = vpack.c.bf16 %v1534, %v1533
      %v1541 = vpack.c.bf16 %v1536, %v1535
      %v1542 = vpack.c.bf16 %v1538, %v1537
      %s1543 = scalar_lea.vmem %s3, 448
      %v1544 = vld [vmem:[%s1543] sm:$0xf]
      %v1545 = vld [vmem:[%s1543 + $0x4] sm:$0xf]
      %v1546 = vld [vmem:[%s1543 + $0x8] sm:$0xf]
      %v1547 = vld [vmem:[%s1543 + $0xc] sm:$0xf]
      %v1548 = vld [vmem:[%s1543 + $0x10] sm:$0xf]
      %v1549 = vld [vmem:[%s1543 + $0x14] sm:$0xf]
      %v1550 = vld [vmem:[%s1543 + $0x18] sm:$0xf]
      %v1551 = vld [vmem:[%s1543 + $0x1c] sm:$0xf]
      %v1552 = vld [vmem:[%s1543 + $0x20] sm:$0xf]
      %v1553 = vld [vmem:[%s1543 + $0x24] sm:$0xf]
      %v1554 = vld [vmem:[%s1543 + $0x28] sm:$0xf]
      %v1555 = vld [vmem:[%s1543 + $0x2c] sm:$0xf]
      %v1556 = vld [vmem:[%s1543 + $0x30] sm:$0xf]
      %v1557 = vld [vmem:[%s1543 + $0x34] sm:$0xf]
      %v1558 = vld [vmem:[%s1543 + $0x38] sm:$0xf]
      %v1559 = vld [vmem:[%s1543 + $0x3c] sm:$0xf]
      %v1576 = vunpack.c.l.b16 %v1544
      %v1577 = vunpack.c.l.b16 %v1545
      %v1578 = vunpack.c.l.b16 %v1546
      %v1579 = vunpack.c.l.b16 %v1547
      %v1580 = vunpack.c.l.b16 %v1548
      %v1581 = vunpack.c.l.b16 %v1549
      %v1582 = vunpack.c.l.b16 %v1550
      %v1583 = vunpack.c.l.b16 %v1551
      %v1584 = vunpack.c.l.b16 %v1552
      %v1585 = vunpack.c.l.b16 %v1553
      %v1586 = vunpack.c.l.b16 %v1554
      %v1587 = vunpack.c.l.b16 %v1555
      %v1588 = vunpack.c.l.b16 %v1556
      %v1589 = vunpack.c.l.b16 %v1557
      %v1590 = vunpack.c.l.b16 %v1558
      %v1591 = vunpack.c.l.b16 %v1559
      %v1592 = vpack.c.b16 %v1577, %v1576
      %v1593 = vpack.c.b16 %v1579, %v1578
      %v1594 = vpack.c.b16 %v1581, %v1580
      %v1595 = vpack.c.b16 %v1583, %v1582
      %v1596 = vpack.c.b16 %v1585, %v1584
      %v1597 = vpack.c.b16 %v1587, %v1586
      %v1598 = vpack.c.b16 %v1589, %v1588
      %v1599 = vpack.c.b16 %v1591, %v1590
      %1608 = vmatprep.subr.bf16.mxu0 0
      %1609 = vmatpush1.bf16.msra.mxu0 %v1599
      %1610 = vmatprep.subr.bf16.mxu0 0
      %1611 = vmatpush1.bf16.msra.mxu0 %v1598
      %1612 = vmatprep.subr.bf16.mxu0 0
      %1613 = vmatpush1.bf16.msra.mxu0 %v1597
      %1614 = vmatprep.subr.bf16.mxu0 0
      %1615 = vmatpush1.bf16.msra.mxu0 %v1596
      %1616 = vmatprep.subr.bf16.mxu0 0
      %1617 = vmatpush1.bf16.msra.mxu0 %v1595
      %1618 = vmatprep.subr.bf16.mxu0 0
      %1619 = vmatpush1.bf16.msra.mxu0 %v1594
      %1620 = vmatprep.subr.bf16.mxu0 0
      %1621 = vmatpush1.bf16.msra.mxu0 %v1593
      %1622 = vmatprep.subr.bf16.mxu0 0
      %1623 = vmatpush1.bf16.msra.mxu0 %v1592
      %1624 = vmatprep.subr.bf16.mxu0 0
      %1625 = vmatpush2.bf16.msra.mxu0 0
      %1626 = vmatprep.subr.bf16.mxu0 0
      %1627 = vmatpush2.bf16.msra.mxu0 0
      %1628 = vmatprep.subr.bf16.mxu0 0
      %1629 = vmatpush2.bf16.msra.mxu0 0
      %1630 = vmatprep.subr.bf16.mxu0 0
      %1631 = vmatpush2.bf16.msra.mxu0 0
      %1632 = vmatprep.subr.bf16.mxu0 0
      %1633 = vmatpush2.bf16.msra.mxu0 0
      %1634 = vmatprep.subr.bf16.mxu0 0
      %1635 = vmatpush2.bf16.msra.mxu0 0
      %1636 = vmatprep.subr.bf16.mxu0 0
      %1637 = vmatpush2.bf16.msra.mxu0 0
      %1638 = vmatprep.subr.bf16.mxu0 0
      %1639 = vmatpush2.bf16.msra.mxu0 0
      %1640 = vmatprep.mubr.bf16.mxu0 0
      %1641 = vmatmul.mubr.bf16.gmra.mxu0 %v1539
      %v1642 = vpop.f32.mrf.mxu0
      %v1643 = vadd.f32 0.0, %v1642
      %v1644 = vpop.f32.mrf.mxu0
      %v1645 = vpop.f32.mrf.mxu0
      %v1646 = vadd.f32 0.0, %v1645
      %v1647 = vpop.f32.mrf.mxu0
      %1648 = vmatprep.mubr.bf16.mxu0 0
      %1649 = vmatmul.mubr.bf16.gmra.mxu0 %v1540
      %v1650 = vpop.f32.mrf.mxu0
      %v1651 = vadd.f32 0.0, %v1650
      %v1652 = vpop.f32.mrf.mxu0
      %v1653 = vpop.f32.mrf.mxu0
      %v1654 = vadd.f32 0.0, %v1653
      %v1655 = vpop.f32.mrf.mxu0
      %1656 = vmatprep.mubr.bf16.mxu0 0
      %1657 = vmatmul.mubr.bf16.gmra.mxu0 %v1541
      %v1658 = vpop.f32.mrf.mxu0
      %v1659 = vadd.f32 0.0, %v1658
      %v1660 = vpop.f32.mrf.mxu0
      %v1661 = vpop.f32.mrf.mxu0
      %v1662 = vadd.f32 0.0, %v1661
      %v1663 = vpop.f32.mrf.mxu0
      %1664 = vmatprep.mubr.bf16.mxu0 0
      %1665 = vmatmul.mubr.bf16.gmra.mxu0 %v1542
      %v1666 = vpop.f32.mrf.mxu0
      %v1667 = vadd.f32 0.0, %v1666
      %v1668 = vpop.f32.mrf.mxu0
      %v1669 = vpop.f32.mrf.mxu0
      %v1670 = vadd.f32 0.0, %v1669
      %v1671 = vpop.f32.mrf.mxu0
      %1672 = vdwg.mxu0
      %v1673 = vadd.f32 %v1523, %v1643
      %v1674 = vadd.f32 %v1524, %v1646
      %v1675 = vadd.f32 %v1525, %v1651
      %v1676 = vadd.f32 %v1526, %v1654
      %v1677 = vadd.f32 %v1527, %v1659
      %v1678 = vadd.f32 %v1528, %v1662
      %v1679 = vadd.f32 %v1529, %v1667
      %v1680 = vadd.f32 %v1530, %v1670
      %v1681 = vld [vmem:[%s1380 + $0x2] sm:$0xff]
      %v1682 = vld [vmem:[%s1380 + $0x12] sm:$0xff]
      %v1683 = vld [vmem:[%s1380 + $0x22] sm:$0xff]
      %v1684 = vld [vmem:[%s1380 + $0x32] sm:$0xff]
      %v1685 = vld [vmem:[%s1380 + $0x42] sm:$0xff]
      %v1686 = vld [vmem:[%s1380 + $0x52] sm:$0xff]
      %v1687 = vld [vmem:[%s1380 + $0x62] sm:$0xff]
      %v1688 = vld [vmem:[%s1380 + $0x72] sm:$0xff]
      %v1689 = vpack.c.bf16 %v1682, %v1681
      %v1690 = vpack.c.bf16 %v1684, %v1683
      %v1691 = vpack.c.bf16 %v1686, %v1685
      %v1692 = vpack.c.bf16 %v1688, %v1687
      %s1693 = scalar_lea.vmem %s3, 512
      %v1694 = vld [vmem:[%s1693] sm:$0xf]
      %v1695 = vld [vmem:[%s1693 + $0x4] sm:$0xf]
      %v1696 = vld [vmem:[%s1693 + $0x8] sm:$0xf]
      %v1697 = vld [vmem:[%s1693 + $0xc] sm:$0xf]
      %v1698 = vld [vmem:[%s1693 + $0x10] sm:$0xf]
      %v1699 = vld [vmem:[%s1693 + $0x14] sm:$0xf]
      %v1700 = vld [vmem:[%s1693 + $0x18] sm:$0xf]
      %v1701 = vld [vmem:[%s1693 + $0x1c] sm:$0xf]
      %v1702 = vld [vmem:[%s1693 + $0x20] sm:$0xf]
      %v1703 = vld [vmem:[%s1693 + $0x24] sm:$0xf]
      %v1704 = vld [vmem:[%s1693 + $0x28] sm:$0xf]
      %v1705 = vld [vmem:[%s1693 + $0x2c] sm:$0xf]
      %v1706 = vld [vmem:[%s1693 + $0x30] sm:$0xf]
      %v1707 = vld [vmem:[%s1693 + $0x34] sm:$0xf]
      %v1708 = vld [vmem:[%s1693 + $0x38] sm:$0xf]
      %v1709 = vld [vmem:[%s1693 + $0x3c] sm:$0xf]
      %v1726 = vunpack.c.l.b16 %v1694
      %v1727 = vunpack.c.l.b16 %v1695
      %v1728 = vunpack.c.l.b16 %v1696
      %v1729 = vunpack.c.l.b16 %v1697
      %v1730 = vunpack.c.l.b16 %v1698
      %v1731 = vunpack.c.l.b16 %v1699
      %v1732 = vunpack.c.l.b16 %v1700
      %v1733 = vunpack.c.l.b16 %v1701
      %v1734 = vunpack.c.l.b16 %v1702
      %v1735 = vunpack.c.l.b16 %v1703
      %v1736 = vunpack.c.l.b16 %v1704
      %v1737 = vunpack.c.l.b16 %v1705
      %v1738 = vunpack.c.l.b16 %v1706
      %v1739 = vunpack.c.l.b16 %v1707
      %v1740 = vunpack.c.l.b16 %v1708
      %v1741 = vunpack.c.l.b16 %v1709
      %v1742 = vpack.c.b16 %v1727, %v1726
      %v1743 = vpack.c.b16 %v1729, %v1728
      %v1744 = vpack.c.b16 %v1731, %v1730
      %v1745 = vpack.c.b16 %v1733, %v1732
      %v1746 = vpack.c.b16 %v1735, %v1734
      %v1747 = vpack.c.b16 %v1737, %v1736
      %v1748 = vpack.c.b16 %v1739, %v1738
      %v1749 = vpack.c.b16 %v1741, %v1740
      %1758 = vmatprep.subr.bf16.mxu0 0
      %1759 = vmatpush1.bf16.msra.mxu0 %v1749
      %1760 = vmatprep.subr.bf16.mxu0 0
      %1761 = vmatpush1.bf16.msra.mxu0 %v1748
      %1762 = vmatprep.subr.bf16.mxu0 0
      %1763 = vmatpush1.bf16.msra.mxu0 %v1747
      %1764 = vmatprep.subr.bf16.mxu0 0
      %1765 = vmatpush1.bf16.msra.mxu0 %v1746
      %1766 = vmatprep.subr.bf16.mxu0 0
      %1767 = vmatpush1.bf16.msra.mxu0 %v1745
      %1768 = vmatprep.subr.bf16.mxu0 0
      %1769 = vmatpush1.bf16.msra.mxu0 %v1744
      %1770 = vmatprep.subr.bf16.mxu0 0
      %1771 = vmatpush1.bf16.msra.mxu0 %v1743
      %1772 = vmatprep.subr.bf16.mxu0 0
      %1773 = vmatpush1.bf16.msra.mxu0 %v1742
      %1774 = vmatprep.subr.bf16.mxu0 0
      %1775 = vmatpush2.bf16.msra.mxu0 0
      %1776 = vmatprep.subr.bf16.mxu0 0
      %1777 = vmatpush2.bf16.msra.mxu0 0
      %1778 = vmatprep.subr.bf16.mxu0 0
      %1779 = vmatpush2.bf16.msra.mxu0 0
      %1780 = vmatprep.subr.bf16.mxu0 0
      %1781 = vmatpush2.bf16.msra.mxu0 0
      %1782 = vmatprep.subr.bf16.mxu0 0
      %1783 = vmatpush2.bf16.msra.mxu0 0
      %1784 = vmatprep.subr.bf16.mxu0 0
      %1785 = vmatpush2.bf16.msra.mxu0 0
      %1786 = vmatprep.subr.bf16.mxu0 0
      %1787 = vmatpush2.bf16.msra.mxu0 0
      %1788 = vmatprep.subr.bf16.mxu0 0
      %1789 = vmatpush2.bf16.msra.mxu0 0
      %1790 = vmatprep.mubr.bf16.mxu0 0
      %1791 = vmatmul.mubr.bf16.gmra.mxu0 %v1689
      %v1792 = vpop.f32.mrf.mxu0
      %v1793 = vadd.f32 0.0, %v1792
      %v1794 = vpop.f32.mrf.mxu0
      %v1795 = vpop.f32.mrf.mxu0
      %v1796 = vadd.f32 0.0, %v1795
      %v1797 = vpop.f32.mrf.mxu0
      %1798 = vmatprep.mubr.bf16.mxu0 0
      %1799 = vmatmul.mubr.bf16.gmra.mxu0 %v1690
      %v1800 = vpop.f32.mrf.mxu0
      %v1801 = vadd.f32 0.0, %v1800
      %v1802 = vpop.f32.mrf.mxu0
      %v1803 = vpop.f32.mrf.mxu0
      %v1804 = vadd.f32 0.0, %v1803
      %v1805 = vpop.f32.mrf.mxu0
      %1806 = vmatprep.mubr.bf16.mxu0 0
      %1807 = vmatmul.mubr.bf16.gmra.mxu0 %v1691
      %v1808 = vpop.f32.mrf.mxu0
      %v1809 = vadd.f32 0.0, %v1808
      %v1810 = vpop.f32.mrf.mxu0
      %v1811 = vpop.f32.mrf.mxu0
      %v1812 = vadd.f32 0.0, %v1811
      %v1813 = vpop.f32.mrf.mxu0
      %1814 = vmatprep.mubr.bf16.mxu0 0
      %1815 = vmatmul.mubr.bf16.gmra.mxu0 %v1692
      %v1816 = vpop.f32.mrf.mxu0
      %v1817 = vadd.f32 0.0, %v1816
      %v1818 = vpop.f32.mrf.mxu0
      %v1819 = vpop.f32.mrf.mxu0
      %v1820 = vadd.f32 0.0, %v1819
      %v1821 = vpop.f32.mrf.mxu0
      %1822 = vdwg.mxu0
      %v1823 = vadd.f32 %v1673, %v1793
      %v1824 = vadd.f32 %v1674, %v1796
      %v1825 = vadd.f32 %v1675, %v1801
      %v1826 = vadd.f32 %v1676, %v1804
      %v1827 = vadd.f32 %v1677, %v1809
      %v1828 = vadd.f32 %v1678, %v1812
      %v1829 = vadd.f32 %v1679, %v1817
      %v1830 = vadd.f32 %v1680, %v1820
      %v1831 = vpack.c.bf16 %v1824, %v1823
      %v1832 = vpack.c.bf16 %v1826, %v1825
      %v1833 = vpack.c.bf16 %v1828, %v1827
      %v1834 = vpack.c.bf16 %v1830, %v1829
      %v1839 = vunpack.c.l.b16 %v1831
      %v1840 = vunpack.c.h.b16 %v1831
      %v1841 = vunpack.c.l.b16 %v1832
      %v1842 = vunpack.c.h.b16 %v1832
      %v1843 = vunpack.c.l.b16 %v1833
      %v1844 = vunpack.c.h.b16 %v1833
      %v1845 = vunpack.c.l.b16 %v1834
      %v1846 = vunpack.c.h.b16 %v1834
      %v1847 = vpack.c.b16 %v1839, %v1839
      %v1848 = vpack.c.b16 %v1840, %v1840
      %v1849 = vpack.c.b16 %v1841, %v1841
      %v1850 = vpack.c.b16 %v1842, %v1842
      %v1851 = vpack.c.b16 %v1843, %v1843
      %v1852 = vpack.c.b16 %v1844, %v1844
      %v1853 = vpack.c.b16 %v1845, %v1845
      %v1854 = vpack.c.b16 %v1846, %v1846
      %1863 = vst [vmem:[%s400] sm:$0xf] %v1847
      %1864 = vst [vmem:[%s400 + $0x4] sm:$0xf] %v1848
      %1865 = vst [vmem:[%s400 + $0x8] sm:$0xf] %v1849
      %1866 = vst [vmem:[%s400 + $0xc] sm:$0xf] %v1850
      %1867 = vst [vmem:[%s400 + $0x10] sm:$0xf] %v1851
      %1868 = vst [vmem:[%s400 + $0x14] sm:$0xf] %v1852
      %1869 = vst [vmem:[%s400 + $0x18] sm:$0xf] %v1853
      %1870 = vst [vmem:[%s400 + $0x1c] sm:$0xf] %v1854
      %v1871 = vadd.f32 %v1823, %v1824
      %v1872 = vadd.f32 %v1871, %v1825
      %v1873 = vadd.f32 %v1872, %v1826
      %v1874 = vadd.f32 %v1873, %v1827
      %v1875 = vadd.f32 %v1874, %v1828
      %v1876 = vadd.f32 %v1875, %v1829
      %v1877 = vadd.f32 %v1876, %v1830
      %v1878 = vrot.slane %v1877, 4
      %v1879 = vadd.f32 %v1877, %v1878
      %v1880 = vrot.slane %v1879, 2
      %v1881 = vadd.f32 %v1879, %v1880
      %v1882 = vrot.slane %v1881, 1
      %v1883 = vadd.f32 %v1881, %v1882
      %1884 = vst [vmem:[%s403] sm:$0x1] %v1883
      %v1885 = vmul.f32 %v1823, %v1823
      %v1886 = vmul.f32 %v1824, %v1824
      %v1887 = vmul.f32 %v1825, %v1825
      %v1888 = vmul.f32 %v1826, %v1826
      %v1889 = vmul.f32 %v1827, %v1827
      %v1890 = vmul.f32 %v1828, %v1828
      %v1891 = vmul.f32 %v1829, %v1829
      %v1892 = vmul.f32 %v1830, %v1830
      %v1893 = vadd.f32 %v1885, %v1886
      %v1894 = vadd.f32 %v1893, %v1887
      %v1895 = vadd.f32 %v1894, %v1888
      %v1896 = vadd.f32 %v1895, %v1889
      %v1897 = vadd.f32 %v1896, %v1890
      %v1898 = vadd.f32 %v1897, %v1891
      %v1899 = vadd.f32 %v1898, %v1892
      %v1900 = vrot.slane %v1899, 4
      %v1901 = vadd.f32 %v1899, %v1900
      %v1902 = vrot.slane %v1901, 2
      %v1903 = vadd.f32 %v1901, %v1902
      %v1904 = vrot.slane %v1903, 1
      %v1905 = vadd.f32 %v1903, %v1904
      %1906 = vst [vmem:[%s406] sm:$0x1] %v1905
      %v1907 = vld [vmem:[%s395] sm:$0xf]
      %v1908 = vld [vmem:[%s395 + $0x4] sm:$0xf]
      %v1909 = vld [vmem:[%s395 + $0x8] sm:$0xf]
      %v1910 = vld [vmem:[%s395 + $0xc] sm:$0xf]
      %v1911 = vld [vmem:[%s395 + $0x10] sm:$0xf]
      %v1912 = vld [vmem:[%s395 + $0x14] sm:$0xf]
      %v1913 = vld [vmem:[%s395 + $0x18] sm:$0xf]
      %v1914 = vld [vmem:[%s395 + $0x1c] sm:$0xf]
      %v1915 = vld [vmem:[%s5] sm:$0xf]
      %v1916 = vld [vmem:[%s5 + $0x4] sm:$0xf]
      %v1917 = vld [vmem:[%s5 + $0x8] sm:$0xf]
      %v1918 = vld [vmem:[%s5 + $0xc] sm:$0xf]
      %v1919 = vld [vmem:[%s5 + $0x10] sm:$0xf]
      %v1920 = vld [vmem:[%s5 + $0x14] sm:$0xf]
      %v1921 = vld [vmem:[%s5 + $0x18] sm:$0xf]
      %v1922 = vld [vmem:[%s5 + $0x1c] sm:$0xf]
      %v1923 = vld [vmem:[%s5 + $0x20] sm:$0xf]
      %v1924 = vld [vmem:[%s5 + $0x24] sm:$0xf]
      %v1925 = vld [vmem:[%s5 + $0x28] sm:$0xf]
      %v1926 = vld [vmem:[%s5 + $0x2c] sm:$0xf]
      %v1927 = vld [vmem:[%s5 + $0x30] sm:$0xf]
      %v1928 = vld [vmem:[%s5 + $0x34] sm:$0xf]
      %v1929 = vld [vmem:[%s5 + $0x38] sm:$0xf]
      %v1930 = vld [vmem:[%s5 + $0x3c] sm:$0xf]
      %v1939 = vunpack.c.l.b16 %v1907
      %v1940 = vunpack.c.l.b16 %v1908
      %v1941 = vunpack.c.l.b16 %v1909
      %v1942 = vunpack.c.l.b16 %v1910
      %v1943 = vunpack.c.l.b16 %v1911
      %v1944 = vunpack.c.l.b16 %v1912
      %v1945 = vunpack.c.l.b16 %v1913
      %v1946 = vunpack.c.l.b16 %v1914
      %v1947 = vpack.c.b16 %v1940, %v1939
      %v1948 = vpack.c.b16 %v1942, %v1941
      %v1949 = vpack.c.b16 %v1944, %v1943
      %v1950 = vpack.c.b16 %v1946, %v1945
      %v1971 = vunpack.c.l.b16 %v1915
      %v1972 = vunpack.c.l.b16 %v1916
      %v1973 = vunpack.c.l.b16 %v1917
      %v1974 = vunpack.c.l.b16 %v1918
      %v1975 = vunpack.c.l.b16 %v1919
      %v1976 = vunpack.c.l.b16 %v1920
      %v1977 = vunpack.c.l.b16 %v1921
      %v1978 = vunpack.c.l.b16 %v1922
      %v1979 = vunpack.c.l.b16 %v1923
      %v1980 = vunpack.c.l.b16 %v1924
      %v1981 = vunpack.c.l.b16 %v1925
      %v1982 = vunpack.c.l.b16 %v1926
      %v1983 = vunpack.c.l.b16 %v1927
      %v1984 = vunpack.c.l.b16 %v1928
      %v1985 = vunpack.c.l.b16 %v1929
      %v1986 = vunpack.c.l.b16 %v1930
      %v1987 = vpack.c.b16 %v1972, %v1971
      %v1988 = vpack.c.b16 %v1974, %v1973
      %v1989 = vpack.c.b16 %v1976, %v1975
      %v1990 = vpack.c.b16 %v1978, %v1977
      %v1991 = vpack.c.b16 %v1980, %v1979
      %v1992 = vpack.c.b16 %v1982, %v1981
      %v1993 = vpack.c.b16 %v1984, %v1983
      %v1994 = vpack.c.b16 %v1986, %v1985
      %2003 = vmatprep.subr.bf16.mxu0 0
      %2004 = vmatpush1.bf16.msra.mxu0 %v1994
      %2005 = vmatprep.subr.bf16.mxu0 0
      %2006 = vmatpush1.bf16.msra.mxu0 %v1993
      %2007 = vmatprep.subr.bf16.mxu0 0
      %2008 = vmatpush1.bf16.msra.mxu0 %v1992
      %2009 = vmatprep.subr.bf16.mxu0 0
      %2010 = vmatpush1.bf16.msra.mxu0 %v1991
      %2011 = vmatprep.subr.bf16.mxu0 0
      %2012 = vmatpush1.bf16.msra.mxu0 %v1990
      %2013 = vmatprep.subr.bf16.mxu0 0
      %2014 = vmatpush1.bf16.msra.mxu0 %v1989
      %2015 = vmatprep.subr.bf16.mxu0 0
      %2016 = vmatpush1.bf16.msra.mxu0 %v1988
      %2017 = vmatprep.subr.bf16.mxu0 0
      %2018 = vmatpush1.bf16.msra.mxu0 %v1987
      %2019 = vmatprep.subr.bf16.mxu0 0
      %2020 = vmatpush2.bf16.msra.mxu0 0
      %2021 = vmatprep.subr.bf16.mxu0 0
      %2022 = vmatpush2.bf16.msra.mxu0 0
      %2023 = vmatprep.subr.bf16.mxu0 0
      %2024 = vmatpush2.bf16.msra.mxu0 0
      %2025 = vmatprep.subr.bf16.mxu0 0
      %2026 = vmatpush2.bf16.msra.mxu0 0
      %2027 = vmatprep.subr.bf16.mxu0 0
      %2028 = vmatpush2.bf16.msra.mxu0 0
      %2029 = vmatprep.subr.bf16.mxu0 0
      %2030 = vmatpush2.bf16.msra.mxu0 0
      %2031 = vmatprep.subr.bf16.mxu0 0
      %2032 = vmatpush2.bf16.msra.mxu0 0
      %2033 = vmatprep.subr.bf16.mxu0 0
      %2034 = vmatpush2.bf16.msra.mxu0 0
      %2035 = vmatprep.mubr.bf16.mxu0 0
      %2036 = vmatmul.mubr.bf16.gmra.mxu0 %v1947
      %v2037 = vpop.f32.mrf.mxu0
      %v2038 = vadd.f32 0.0, %v2037
      %v2039 = vpop.f32.mrf.mxu0
      %v2040 = vpop.f32.mrf.mxu0
      %v2041 = vadd.f32 0.0, %v2040
      %v2042 = vpop.f32.mrf.mxu0
      %2043 = vmatprep.mubr.bf16.mxu0 0
      %2044 = vmatmul.mubr.bf16.gmra.mxu0 %v1948
      %v2045 = vpop.f32.mrf.mxu0
      %v2046 = vadd.f32 0.0, %v2045
      %v2047 = vpop.f32.mrf.mxu0
      %v2048 = vpop.f32.mrf.mxu0
      %v2049 = vadd.f32 0.0, %v2048
      %v2050 = vpop.f32.mrf.mxu0
      %2051 = vmatprep.mubr.bf16.mxu0 0
      %2052 = vmatmul.mubr.bf16.gmra.mxu0 %v1949
      %v2053 = vpop.f32.mrf.mxu0
      %v2054 = vadd.f32 0.0, %v2053
      %v2055 = vpop.f32.mrf.mxu0
      %v2056 = vpop.f32.mrf.mxu0
      %v2057 = vadd.f32 0.0, %v2056
      %v2058 = vpop.f32.mrf.mxu0
      %2059 = vmatprep.mubr.bf16.mxu0 0
      %2060 = vmatmul.mubr.bf16.gmra.mxu0 %v1950
      %v2061 = vpop.f32.mrf.mxu0
      %v2062 = vadd.f32 0.0, %v2061
      %v2063 = vpop.f32.mrf.mxu0
      %v2064 = vpop.f32.mrf.mxu0
      %v2065 = vadd.f32 0.0, %v2064
      %v2066 = vpop.f32.mrf.mxu0
      %2067 = vdwg.mxu0
      %v2068 = vadd.f32 %v2038, %v2041
      %v2069 = vadd.f32 %v2068, %v2046
      %v2070 = vadd.f32 %v2069, %v2049
      %v2071 = vadd.f32 %v2070, %v2054
      %v2072 = vadd.f32 %v2071, %v2057
      %v2073 = vadd.f32 %v2072, %v2062
      %v2074 = vadd.f32 %v2073, %v2065
      %v2075 = vrot.slane %v2074, 4
      %v2076 = vadd.f32 %v2074, %v2075
      %v2077 = vrot.slane %v2076, 2
      %v2078 = vadd.f32 %v2076, %v2077
      %v2079 = vrot.slane %v2078, 1
      %v2080 = vadd.f32 %v2078, %v2079
      %2081 = vst [vmem:[%s409] sm:$0x1] %v2080
      %v2082 = vmul.f32 %v2038, %v2038
      %v2083 = vmul.f32 %v2041, %v2041
      %v2084 = vmul.f32 %v2046, %v2046
      %v2085 = vmul.f32 %v2049, %v2049
      %v2086 = vmul.f32 %v2054, %v2054
      %v2087 = vmul.f32 %v2057, %v2057
      %v2088 = vmul.f32 %v2062, %v2062
      %v2089 = vmul.f32 %v2065, %v2065
      %v2090 = vadd.f32 %v2082, %v2083
      %v2091 = vadd.f32 %v2090, %v2084
      %v2092 = vadd.f32 %v2091, %v2085
      %v2093 = vadd.f32 %v2092, %v2086
      %v2094 = vadd.f32 %v2093, %v2087
      %v2095 = vadd.f32 %v2094, %v2088
      %v2096 = vadd.f32 %v2095, %v2089
      %v2097 = vrot.slane %v2096, 4
      %v2098 = vadd.f32 %v2096, %v2097
      %v2099 = vrot.slane %v2098, 2
      %v2100 = vadd.f32 %v2098, %v2099
      %v2101 = vrot.slane %v2100, 1
      %v2102 = vadd.f32 %v2100, %v2101
      %2103 = vst [vmem:[%s412] sm:$0x1] %v2102
      %p2104 = scmp.lt.s32.totalorder %s22, 1
      %s2105 = scalar_select %p2104, %s22, 1
      %s2106 = smul.addr %s2105, 8
      %s2107 = smul.addr %s2106, 4
      %s2108 = scalar_lea.vmem %s6, %s2107
      %p2109 = scmp.lt.s32.totalorder %s22, 1
      %s2110 = scalar_select %p2109, %s22, 1
      %s2111 = scalar_lea.vmem %s7, %s2110
      %p2112 = scmp.lt.s32.totalorder %s22, 1
      %s2113 = scalar_select %p2112, %s22, 1
      %s2114 = scalar_lea.vmem %s8, %s2113
      %p2115 = scmp.lt.s32.totalorder %s22, 1
      %s2116 = scalar_select %p2115, %s22, 1
      %s2117 = scalar_lea.vmem %s9, %s2116
      %p2118 = scmp.lt.s32.totalorder %s22, 1
      %s2119 = scalar_select %p2118, %s22, 1
      %s2120 = scalar_lea.vmem %s10, %s2119
      // Predicated region
      $region45: #{residual_block_forward.4} parent=43 // pred_check
        %p2121 = pneg %p176
      $region46: #{residual_block_forward.4} parent=43 // pred_check_branch
        %2123 = sbr.rel (%p2121) target = $region48
      $region47: #{residual_block_forward.4} parent=43 // pred_region
        _
      $region48: #{residual_block_forward.4} parent=43 // pred_fallthru
        _
      // Predicated region
      $region49: #{residual_block_forward.4} parent=43 // pred_check
        %p2124 = pneg %p202
      $region50: #{residual_block_forward.4} parent=43 // pred_check_branch
        %2126 = sbr.rel (%p2124) target = $region52
      $region51: #{residual_block_forward.4} parent=43 // pred_region
        _
      $region52: #{residual_block_forward.4} parent=43 // pred_fallthru
        _
      // Predicated region
      $region53: #{residual_block_forward.4} parent=43 // pred_check
        %p2127 = pneg %p228
      $region54: #{residual_block_forward.4} parent=43 // pred_check_branch
        %2129 = sbr.rel (%p2127) target = $region56
      $region55: #{residual_block_forward.4} parent=43 // pred_region
        _
      $region56: #{residual_block_forward.4} parent=43 // pred_fallthru
        _
      // Predicated region
      $region57: #{residual_block_forward.4} parent=43 // pred_check
        %p2130 = pneg %p254
      $region58: #{residual_block_forward.4} parent=43 // pred_check_branch
        %2132 = sbr.rel (%p2130) target = $region60
      $region59: #{residual_block_forward.4} parent=43 // pred_region
        _
      $region60: #{residual_block_forward.4} parent=43 // pred_fallthru
        _
      // Predicated region
      $region61: #{residual_block_forward.4} parent=43 // pred_check
        %p2133 = pneg %p280
      $region62: #{residual_block_forward.4} parent=43 // pred_check_branch
        %2135 = sbr.rel (%p2133) target = $region64
      $region63: #{residual_block_forward.4} parent=43 // pred_region
        _
      $region64: #{residual_block_forward.4} parent=43 // pred_fallthru
        _
    $region44: #{residual_block_forward.4} parent=5 // pred_fallthru
      _
    %p2136 = scmp.le.s32.totalorder 2, %s17
    // Predicated region
    $region65: #{residual_block_forward.4} parent=5 // pred_check
      %p2137 = pneg %p2136
    $region66: #{residual_block_forward.4} parent=5 // pred_check_branch
      %2139 = sbr.rel (%p2137) target = $region68
    $region67: #{residual_block_forward.4} parent=5 // pred_region
      %s2140 = ssub.s32 %s17, 2
      // Predicated region
      $region69: #{residual_block_forward.4} parent=67 // pred_check
        %p2141 = pneg %p182
      $region70: #{residual_block_forward.4} parent=67 // pred_check_branch
        %2143 = sbr.rel (%p2141) target = $region72
      $region71: #{residual_block_forward.4} parent=67 // pred_region
        %p2144 = scmp.lt.s32.totalorder %s23, 1
        %s2145 = scalar_select %p2144, %s23, 1
        %s2146 = smul.addr %s2145, 8
        %s2147 = smul.addr %s2146, 4
        %s2148 = scalar_lea.vmem %s6, %s2147
      $region72: #{residual_block_forward.4} parent=67 // pred_fallthru
        _
      // Predicated region
      $region73: #{residual_block_forward.4} parent=67 // pred_check
        %p2149 = pneg %p208
      $region74: #{residual_block_forward.4} parent=67 // pred_check_branch
        %2151 = sbr.rel (%p2149) target = $region76
      $region75: #{residual_block_forward.4} parent=67 // pred_region
        %p2152 = scmp.lt.s32.totalorder %s23, 1
        %s2153 = scalar_select %p2152, %s23, 1
        %s2154 = scalar_lea.vmem %s7, %s2153
      $region76: #{residual_block_forward.4} parent=67 // pred_fallthru
        _
      // Predicated region
      $region77: #{residual_block_forward.4} parent=67 // pred_check
        %p2155 = pneg %p234
      $region78: #{residual_block_forward.4} parent=67 // pred_check_branch
        %2157 = sbr.rel (%p2155) target = $region80
      $region79: #{residual_block_forward.4} parent=67 // pred_region
        %p2158 = scmp.lt.s32.totalorder %s23, 1
        %s2159 = scalar_select %p2158, %s23, 1
        %s2160 = scalar_lea.vmem %s8, %s2159
      $region80: #{residual_block_forward.4} parent=67 // pred_fallthru
        _
      // Predicated region
      $region81: #{residual_block_forward.4} parent=67 // pred_check
        %p2161 = pneg %p260
      $region82: #{residual_block_forward.4} parent=67 // pred_check_branch
        %2163 = sbr.rel (%p2161) target = $region84
      $region83: #{residual_block_forward.4} parent=67 // pred_region
        %p2164 = scmp.lt.s32.totalorder %s23, 1
        %s2165 = scalar_select %p2164, %s23, 1
        %s2166 = scalar_lea.vmem %s9, %s2165
      $region84: #{residual_block_forward.4} parent=67 // pred_fallthru
        _
      // Predicated region
      $region85: #{residual_block_forward.4} parent=67 // pred_check
        %p2167 = pneg %p286
      $region86: #{residual_block_forward.4} parent=67 // pred_check_branch
        %2169 = sbr.rel (%p2167) target = $region88
      $region87: #{residual_block_forward.4} parent=67 // pred_region
        %p2170 = scmp.lt.s32.totalorder %s23, 1
        %s2171 = scalar_select %p2170, %s23, 1
        %s2172 = scalar_lea.vmem %s10, %s2171
      $region88: #{residual_block_forward.4} parent=67 // pred_fallthru
        _
    $region68: #{residual_block_forward.4} parent=5 // pred_fallthru
      _
  $region6: #{residual_block_forward.4} parent=0 // loop_footer
    %s21 = sadd.s32 1, %s17
  $region7: #{residual_block_forward.4} parent=0 // loop_footer_branch
    %16 = sbr.rel target = $region3
  $region8: #{residual_block_forward.4} parent=0 // loop_exit
    _

</llo_original>
